<compile_context>
chip_gen: v6e
topology: v6e:2x2x1
jax: 0.10.0
libtpu: 0.0.40
codegen_flags: <defaults>
</compile_context>

<pallas_src>
import functools

import jax
import jax.numpy as jnp
from jax.experimental import pallas as pl
from jax.experimental.pallas import tpu as pltpu

BN_EPS = 1e-5
LRELU_SLOPE = 0.1

CONV_SPECS = [  # (C_in, C_out, K, stride)
    (2, 16, 7, 1),
    (16, 32, 7, 2),
    (32, 64, 3, 2),
    (64, 64, 3, 2),
]


# ---------------------------------------------------------------------------
# In-kernel building blocks
# ---------------------------------------------------------------------------
def _bn_lrelu(y, gamma, beta):
    """Training-mode BatchNorm1d (biased var, eps=1e-5) + LeakyReLU(0.1).

    One-pass stats: sum(y) and sum(y*y) are independent XLU reductions;
    normalization is folded into a single per-element scale/shift.
    y: (N, C) f32, gamma/beta: (1, C) f32.
    """
    inv_n = 1.0 / float(y.shape[0])
    s1 = jnp.sum(y, axis=0, keepdims=True)
    s2 = jnp.sum(y * y, axis=0, keepdims=True)
    mean = s1 * inv_n
    var = s2 * inv_n - mean * mean
    scale = gamma * jax.lax.rsqrt(var + BN_EPS)     # (1, C) cheap row math
    shift = beta - mean * scale
    z = y * scale + shift
    return jnp.maximum(z, LRELU_SLOPE * z)          # LeakyReLU(0.1)


def _conv_stride2_tap_acc(a, w, *, K, t_out):
    """Valid Conv1d, stride 2, as an accumulated sum of K per-tap MXU matmuls.

    a: (B, L, C_in) f32 value; w: (K*C_in, C_out) bf16, rows ordered (k, c_in).
    Returns (B*t_out, C_out) f32 (conv bias omitted: cancelled by BN mean).
    NOTE: tap indexing (parity = k % 2, offset = k // 2) assumes stride == 2,
    valid (no-padding) convolution.
    """
    B, L, C_in = a.shape
    # Split the two time parities once per layer (proven-lowering path).
    Lp = L + (L % 2)
    if Lp != L:  # pad one never-read row so the pair reshape is valid
        a = jnp.concatenate([a, jnp.zeros((B, 1, C_in), a.dtype)], axis=1)
    pairs = a.reshape(B, Lp // 2, 2, C_in)
    even = pairs[:, :, 0, :]        # original rows 0, 2, 4, ...
    odd = pairs[:, :, 1, :]         # original rows 1, 3, 5, ...

    acc = None
    for k in range(K):
        src = even if (k % 2 == 0) else odd
        tap = jax.lax.slice_in_dim(src, k // 2, k // 2 + t_out, axis=1)  # (B,t_out,C_in)
        tap2 = tap.reshape(B * t_out, C_in).astype(jnp.bfloat16)
        w_k = jax.lax.slice_in_dim(w, k * C_in, (k + 1) * C_in, axis=0)  # (C_in,C_out)
        term = jnp.dot(tap2, w_k, preferred_element_type=jnp.float32)
        acc = term if acc is None else acc + term
    return acc


# ---------------------------------------------------------------------------
# Fused whole-network kernel
# ---------------------------------------------------------------------------
def _cnn_kernel(*refs, layer_cfg):
    # refs = (x, [w, gamma, beta] x 4 conv layers, lin_w, lin_b, out)
    x_ref = refs[0]
    o_ref = refs[-1]
    p = refs[1:-1]

    B = x_ref.shape[0]
    a = x_ref[...].astype(jnp.float32)                      # (B, L0, C0) channels-last

    # ---- layer 1: Conv1d(2->16, K=7, s=1) on the VPU (broadcast MADs) ----
    K1, s1, t1 = layer_cfg[0]
    assert s1 == 1
    w1 = p[0][...]                                          # (K1*C_in0, C1) f32
    C_in0 = w1.shape[0] // K1
    C1 = w1.shape[1]
    y = None
    for k in range(K1):
        tap = jax.lax.slice_in_dim(a, k, k + t1, axis=1)    # (B, t1, C_in0)
        for c in range(C_in0):
            r = k * C_in0 + c
            w_row = jax.lax.slice_in_dim(w1, r, r + 1, axis=0).reshape(1, 1, C1)
            term = tap[:, :, c:c + 1] * w_row               # (B, t1, C1)
            y = term if y is None else y + term
    z = _bn_lrelu(y.reshape(B * t1, C1), p[1][...], p[2][...])
    a = z.reshape(B, t1, C1)

    # ---- layers 2-4: stride-2 convs as per-tap bf16 MXU matmul accumulation ----
    idx = 3
    for (K, s, t_out) in layer_cfg[1:]:
        assert s == 2, "kernel tap indexing assumes stride-2 valid conv"
        w_r, g_r, be_r = p[idx], p[idx + 1], p[idx + 2]
        idx += 3
        C_out = w_r.shape[1]
        y2 = _conv_stride2_tap_acc(a, w_r[...], K=K, t_out=t_out)   # (B*t_out, C_out)
        z = _bn_lrelu(y2, g_r[...], be_r[...])
        a = z.reshape(B, t_out, C_out)

    # ---- adaptive_avg_pool1d(1) + Linear(64 -> 16) ----
    lw_r, lb_r = p[idx], p[idx + 1]
    T = a.shape[1]
    pooled = jnp.sum(a, axis=1) * (1.0 / float(T))                  # (B, 64) f32
    o_ref[...] = (jnp.dot(pooled.astype(jnp.bfloat16), lw_r[...],
                          preferred_element_type=jnp.float32) + lb_r[...])


# ---------------------------------------------------------------------------
# Wrapper
# ---------------------------------------------------------------------------
def cnn_forward(x_ncw, conv_params, linear_params):
    # PyTorch NCW (B, C, L) -> channels-last (B, L, C)
    x = jnp.transpose(x_ncw, (0, 2, 1)).astype(jnp.float32)
    B, L, _ = x.shape

    layer_cfg = []
    flat = [x]
    flops = 0
    bytes_accessed = x.size * 4
    transcendentals = 0
    for i, (w2d, gamma, beta, k, s) in enumerate(conv_params):
        c_in = w2d.shape[0] // k
        c_out = w2d.shape[1]
        t_out = (L - k) // s + 1
        assert t_out > 0
        # Structural assumptions baked into the kernel's tap indexing:
        assert (s == 1) if i == 0 else (s == 2), "expected stride pattern (1,2,2,2)"
        layer_cfg.append((k, s, t_out))
        # Layer 1 runs on the VPU in f32; layers 2-4 feed the MXU as bf16.
        w_pass = w2d if i == 0 else w2d.astype(jnp.bfloat16)
        flat.extend([w_pass, gamma, beta])
        flops += 2 * (B * t_out) * k * c_in * c_out          # conv contraction
        flops += 10 * (B * t_out) * c_out                    # BN + LeakyReLU elementwise
        bytes_accessed += (w_pass.size * w_pass.dtype.itemsize
                           + (gamma.size + beta.size) * 4)
        transcendentals += c_out                             # rsqrt per channel
        L = t_out

    lw, lb = linear_params
    flat.extend([lw.astype(jnp.bfloat16), lb])
    flops += 2 * B * lw.shape[0] * lw.shape[1] + B * lw.shape[0] * L   # linear + pool
    bytes_accessed += lw.size * 2 + lb.size * 4 + B * lw.shape[1] * 4

    vmem = pl.BlockSpec(memory_space=pltpu.MemorySpace.VMEM)
    kernel = functools.partial(_cnn_kernel, layer_cfg=tuple(layer_cfg))
    return pl.pallas_call(
        kernel,
        out_shape=jax.ShapeDtypeStruct((B, lw.shape[1]), jnp.float32),
        in_specs=[vmem] * len(flat),
        out_specs=vmem,
        cost_estimate=pl.CostEstimate(
            flops=int(flops),
            transcendentals=int(transcendentals),
            bytes_accessed=int(bytes_accessed)),
    )(*flat)


# ---------------------------------------------------------------------------
# Parameter init (deterministic, PyTorch-default-like uniform bounds)
# ---------------------------------------------------------------------------
def init_params(key):
    conv_params = []
    for (cin, cout, k, s) in CONV_SPECS:
        key, k1 = jax.random.split(key)
        bound = 1.0 / (cin * k) ** 0.5
        # weight rows ordered tap-major (k, c_in) to match the kernel's slicing
        w2d = jax.random.uniform(k1, (k * cin, cout), jnp.float32, -bound, bound)
        # Conv1d bias intentionally omitted: with training-mode BatchNorm the bias is
        # exactly cancelled by the per-channel mean subtraction (no output effect).
        gamma = jnp.ones((1, cout), jnp.float32)
        beta = jnp.zeros((1, cout), jnp.float32)
        conv_params.append((w2d, gamma, beta, k, s))

    key, k1, k2 = jax.random.split(key, 3)
    bound = 1.0 / 64 ** 0.5
    lw = jax.random.uniform(k1, (64, 16), jnp.float32, -bound, bound)   # (in, out) = W.T
    lb = jax.random.uniform(k2, (1, 16), jnp.float32, -bound, bound)
    return conv_params, (lw, lb)


if __name__ == "__main__":
    key = jax.random.PRNGKey(0)
    key, pkey, xkey = jax.random.split(key, 3)
    conv_params, linear_params = init_params(pkey)

    # PyTorch-style input: (batch=2, channels=2, length=64)
    x = jax.random.normal(xkey, (2, 2, 64), jnp.float32)

    out = cnn_forward(x, conv_params, linear_params)
    jax.block_until_ready(out)
    assert out.shape == (2, 16), out.shape
    print("KERNEL_OK")
</pallas_src>

<mosaic_0001>
module attributes {stable_mosaic.version = 11 : i64} {
  func.func @_cnn_kernel(%arg0: memref<2x64x2xf32, #tpu.memory_space<vmem>>, %arg1: memref<14x16xf32, #tpu.memory_space<vmem>>, %arg2: memref<1x16xf32, #tpu.memory_space<vmem>>, %arg3: memref<1x16xf32, #tpu.memory_space<vmem>>, %arg4: memref<112x32xbf16, #tpu.memory_space<vmem>>, %arg5: memref<1x32xf32, #tpu.memory_space<vmem>>, %arg6: memref<1x32xf32, #tpu.memory_space<vmem>>, %arg7: memref<96x64xbf16, #tpu.memory_space<vmem>>, %arg8: memref<1x64xf32, #tpu.memory_space<vmem>>, %arg9: memref<1x64xf32, #tpu.memory_space<vmem>>, %arg10: memref<192x64xbf16, #tpu.memory_space<vmem>>, %arg11: memref<1x64xf32, #tpu.memory_space<vmem>>, %arg12: memref<1x64xf32, #tpu.memory_space<vmem>>, %arg13: memref<64x16xbf16, #tpu.memory_space<vmem>>, %arg14: memref<1x16xf32, #tpu.memory_space<vmem>>, %arg15: memref<2x16xf32, #tpu.memory_space<vmem>>) attributes {dimension_semantics = [], scalar_prefetch = 0 : i64, scratch_operands = 0 : i64, tpu.core_type = #tpu.core_type<tc>} {
    %c0 = arith.constant 0 : index
    %c0_0 = arith.constant 0 : index
    %c0_1 = arith.constant 0 : index
    %0 = vector.load %arg0[%c0, %c0_0, %c0_1] : memref<2x64x2xf32, #tpu.memory_space<vmem>>, vector<2x64x2xf32>
    %c0_2 = arith.constant 0 : index
    %c0_3 = arith.constant 0 : index
    %1 = vector.load %arg1[%c0_2, %c0_3] : memref<14x16xf32, #tpu.memory_space<vmem>>, vector<14x16xf32>
    %2 = vector.extract_strided_slice %0 {offsets = [0, 0, 0], sizes = [2, 58, 2], strides = [1, 1, 1]} : vector<2x64x2xf32> to vector<2x58x2xf32>
    %3 = vector.extract_strided_slice %1 {offsets = [0, 0], sizes = [1, 16], strides = [1, 1]} : vector<14x16xf32> to vector<1x16xf32>
    %4 = vector.shape_cast %3 : vector<1x16xf32> to vector<1x1x16xf32>
    %5 = vector.extract_strided_slice %2 {offsets = [0, 0, 0], sizes = [2, 58, 1], strides = [1, 1, 1]} : vector<2x58x2xf32> to vector<2x58x1xf32>
    %6 = vector.broadcast %5 : vector<2x58x1xf32> to vector<2x58x16xf32>
    %7 = vector.broadcast %4 : vector<1x1x16xf32> to vector<2x58x16xf32>
    %8 = arith.mulf %6, %7 : vector<2x58x16xf32>
    %9 = vector.extract_strided_slice %1 {offsets = [1, 0], sizes = [1, 16], strides = [1, 1]} : vector<14x16xf32> to vector<1x16xf32>
    %10 = vector.shape_cast %9 : vector<1x16xf32> to vector<1x1x16xf32>
    %11 = vector.extract_strided_slice %2 {offsets = [0, 0, 1], sizes = [2, 58, 1], strides = [1, 1, 1]} : vector<2x58x2xf32> to vector<2x58x1xf32>
    %12 = vector.broadcast %11 : vector<2x58x1xf32> to vector<2x58x16xf32>
    %13 = vector.broadcast %10 : vector<1x1x16xf32> to vector<2x58x16xf32>
    %14 = arith.mulf %12, %13 : vector<2x58x16xf32>
    %15 = arith.addf %8, %14 : vector<2x58x16xf32>
    %16 = vector.extract_strided_slice %0 {offsets = [0, 1, 0], sizes = [2, 58, 2], strides = [1, 1, 1]} : vector<2x64x2xf32> to vector<2x58x2xf32>
    %17 = vector.extract_strided_slice %1 {offsets = [2, 0], sizes = [1, 16], strides = [1, 1]} : vector<14x16xf32> to vector<1x16xf32>
    %18 = vector.shape_cast %17 : vector<1x16xf32> to vector<1x1x16xf32>
    %19 = vector.extract_strided_slice %16 {offsets = [0, 0, 0], sizes = [2, 58, 1], strides = [1, 1, 1]} : vector<2x58x2xf32> to vector<2x58x1xf32>
    %20 = vector.broadcast %19 : vector<2x58x1xf32> to vector<2x58x16xf32>
    %21 = vector.broadcast %18 : vector<1x1x16xf32> to vector<2x58x16xf32>
    %22 = arith.mulf %20, %21 : vector<2x58x16xf32>
    %23 = arith.addf %15, %22 : vector<2x58x16xf32>
    %24 = vector.extract_strided_slice %1 {offsets = [3, 0], sizes = [1, 16], strides = [1, 1]} : vector<14x16xf32> to vector<1x16xf32>
    %25 = vector.shape_cast %24 : vector<1x16xf32> to vector<1x1x16xf32>
    %26 = vector.extract_strided_slice %16 {offsets = [0, 0, 1], sizes = [2, 58, 1], strides = [1, 1, 1]} : vector<2x58x2xf32> to vector<2x58x1xf32>
    %27 = vector.broadcast %26 : vector<2x58x1xf32> to vector<2x58x16xf32>
    %28 = vector.broadcast %25 : vector<1x1x16xf32> to vector<2x58x16xf32>
    %29 = arith.mulf %27, %28 : vector<2x58x16xf32>
    %30 = arith.addf %23, %29 : vector<2x58x16xf32>
    %31 = vector.extract_strided_slice %0 {offsets = [0, 2, 0], sizes = [2, 58, 2], strides = [1, 1, 1]} : vector<2x64x2xf32> to vector<2x58x2xf32>
    %32 = vector.extract_strided_slice %1 {offsets = [4, 0], sizes = [1, 16], strides = [1, 1]} : vector<14x16xf32> to vector<1x16xf32>
    %33 = vector.shape_cast %32 : vector<1x16xf32> to vector<1x1x16xf32>
    %34 = vector.extract_strided_slice %31 {offsets = [0, 0, 0], sizes = [2, 58, 1], strides = [1, 1, 1]} : vector<2x58x2xf32> to vector<2x58x1xf32>
    %35 = vector.broadcast %34 : vector<2x58x1xf32> to vector<2x58x16xf32>
    %36 = vector.broadcast %33 : vector<1x1x16xf32> to vector<2x58x16xf32>
    %37 = arith.mulf %35, %36 : vector<2x58x16xf32>
    %38 = arith.addf %30, %37 : vector<2x58x16xf32>
    %39 = vector.extract_strided_slice %1 {offsets = [5, 0], sizes = [1, 16], strides = [1, 1]} : vector<14x16xf32> to vector<1x16xf32>
    %40 = vector.shape_cast %39 : vector<1x16xf32> to vector<1x1x16xf32>
    %41 = vector.extract_strided_slice %31 {offsets = [0, 0, 1], sizes = [2, 58, 1], strides = [1, 1, 1]} : vector<2x58x2xf32> to vector<2x58x1xf32>
    %42 = vector.broadcast %41 : vector<2x58x1xf32> to vector<2x58x16xf32>
    %43 = vector.broadcast %40 : vector<1x1x16xf32> to vector<2x58x16xf32>
    %44 = arith.mulf %42, %43 : vector<2x58x16xf32>
    %45 = arith.addf %38, %44 : vector<2x58x16xf32>
    %46 = vector.extract_strided_slice %0 {offsets = [0, 3, 0], sizes = [2, 58, 2], strides = [1, 1, 1]} : vector<2x64x2xf32> to vector<2x58x2xf32>
    %47 = vector.extract_strided_slice %1 {offsets = [6, 0], sizes = [1, 16], strides = [1, 1]} : vector<14x16xf32> to vector<1x16xf32>
    %48 = vector.shape_cast %47 : vector<1x16xf32> to vector<1x1x16xf32>
    %49 = vector.extract_strided_slice %46 {offsets = [0, 0, 0], sizes = [2, 58, 1], strides = [1, 1, 1]} : vector<2x58x2xf32> to vector<2x58x1xf32>
    %50 = vector.broadcast %49 : vector<2x58x1xf32> to vector<2x58x16xf32>
    %51 = vector.broadcast %48 : vector<1x1x16xf32> to vector<2x58x16xf32>
    %52 = arith.mulf %50, %51 : vector<2x58x16xf32>
    %53 = arith.addf %45, %52 : vector<2x58x16xf32>
    %54 = vector.extract_strided_slice %1 {offsets = [7, 0], sizes = [1, 16], strides = [1, 1]} : vector<14x16xf32> to vector<1x16xf32>
    %55 = vector.shape_cast %54 : vector<1x16xf32> to vector<1x1x16xf32>
    %56 = vector.extract_strided_slice %46 {offsets = [0, 0, 1], sizes = [2, 58, 1], strides = [1, 1, 1]} : vector<2x58x2xf32> to vector<2x58x1xf32>
    %57 = vector.broadcast %56 : vector<2x58x1xf32> to vector<2x58x16xf32>
    %58 = vector.broadcast %55 : vector<1x1x16xf32> to vector<2x58x16xf32>
    %59 = arith.mulf %57, %58 : vector<2x58x16xf32>
    %60 = arith.addf %53, %59 : vector<2x58x16xf32>
    %61 = vector.extract_strided_slice %0 {offsets = [0, 4, 0], sizes = [2, 58, 2], strides = [1, 1, 1]} : vector<2x64x2xf32> to vector<2x58x2xf32>
    %62 = vector.extract_strided_slice %1 {offsets = [8, 0], sizes = [1, 16], strides = [1, 1]} : vector<14x16xf32> to vector<1x16xf32>
    %63 = vector.shape_cast %62 : vector<1x16xf32> to vector<1x1x16xf32>
    %64 = vector.extract_strided_slice %61 {offsets = [0, 0, 0], sizes = [2, 58, 1], strides = [1, 1, 1]} : vector<2x58x2xf32> to vector<2x58x1xf32>
    %65 = vector.broadcast %64 : vector<2x58x1xf32> to vector<2x58x16xf32>
    %66 = vector.broadcast %63 : vector<1x1x16xf32> to vector<2x58x16xf32>
    %67 = arith.mulf %65, %66 : vector<2x58x16xf32>
    %68 = arith.addf %60, %67 : vector<2x58x16xf32>
    %69 = vector.extract_strided_slice %1 {offsets = [9, 0], sizes = [1, 16], strides = [1, 1]} : vector<14x16xf32> to vector<1x16xf32>
    %70 = vector.shape_cast %69 : vector<1x16xf32> to vector<1x1x16xf32>
    %71 = vector.extract_strided_slice %61 {offsets = [0, 0, 1], sizes = [2, 58, 1], strides = [1, 1, 1]} : vector<2x58x2xf32> to vector<2x58x1xf32>
    %72 = vector.broadcast %71 : vector<2x58x1xf32> to vector<2x58x16xf32>
    %73 = vector.broadcast %70 : vector<1x1x16xf32> to vector<2x58x16xf32>
    %74 = arith.mulf %72, %73 : vector<2x58x16xf32>
    %75 = arith.addf %68, %74 : vector<2x58x16xf32>
    %76 = vector.extract_strided_slice %0 {offsets = [0, 5, 0], sizes = [2, 58, 2], strides = [1, 1, 1]} : vector<2x64x2xf32> to vector<2x58x2xf32>
    %77 = vector.extract_strided_slice %1 {offsets = [10, 0], sizes = [1, 16], strides = [1, 1]} : vector<14x16xf32> to vector<1x16xf32>
    %78 = vector.shape_cast %77 : vector<1x16xf32> to vector<1x1x16xf32>
    %79 = vector.extract_strided_slice %76 {offsets = [0, 0, 0], sizes = [2, 58, 1], strides = [1, 1, 1]} : vector<2x58x2xf32> to vector<2x58x1xf32>
    %80 = vector.broadcast %79 : vector<2x58x1xf32> to vector<2x58x16xf32>
    %81 = vector.broadcast %78 : vector<1x1x16xf32> to vector<2x58x16xf32>
    %82 = arith.mulf %80, %81 : vector<2x58x16xf32>
    %83 = arith.addf %75, %82 : vector<2x58x16xf32>
    %84 = vector.extract_strided_slice %1 {offsets = [11, 0], sizes = [1, 16], strides = [1, 1]} : vector<14x16xf32> to vector<1x16xf32>
    %85 = vector.shape_cast %84 : vector<1x16xf32> to vector<1x1x16xf32>
    %86 = vector.extract_strided_slice %76 {offsets = [0, 0, 1], sizes = [2, 58, 1], strides = [1, 1, 1]} : vector<2x58x2xf32> to vector<2x58x1xf32>
    %87 = vector.broadcast %86 : vector<2x58x1xf32> to vector<2x58x16xf32>
    %88 = vector.broadcast %85 : vector<1x1x16xf32> to vector<2x58x16xf32>
    %89 = arith.mulf %87, %88 : vector<2x58x16xf32>
    %90 = arith.addf %83, %89 : vector<2x58x16xf32>
    %91 = vector.extract_strided_slice %0 {offsets = [0, 6, 0], sizes = [2, 58, 2], strides = [1, 1, 1]} : vector<2x64x2xf32> to vector<2x58x2xf32>
    %92 = vector.extract_strided_slice %1 {offsets = [12, 0], sizes = [1, 16], strides = [1, 1]} : vector<14x16xf32> to vector<1x16xf32>
    %93 = vector.shape_cast %92 : vector<1x16xf32> to vector<1x1x16xf32>
    %94 = vector.extract_strided_slice %91 {offsets = [0, 0, 0], sizes = [2, 58, 1], strides = [1, 1, 1]} : vector<2x58x2xf32> to vector<2x58x1xf32>
    %95 = vector.broadcast %94 : vector<2x58x1xf32> to vector<2x58x16xf32>
    %96 = vector.broadcast %93 : vector<1x1x16xf32> to vector<2x58x16xf32>
    %97 = arith.mulf %95, %96 : vector<2x58x16xf32>
    %98 = arith.addf %90, %97 : vector<2x58x16xf32>
    %99 = vector.extract_strided_slice %1 {offsets = [13, 0], sizes = [1, 16], strides = [1, 1]} : vector<14x16xf32> to vector<1x16xf32>
    %100 = vector.shape_cast %99 : vector<1x16xf32> to vector<1x1x16xf32>
    %101 = vector.extract_strided_slice %91 {offsets = [0, 0, 1], sizes = [2, 58, 1], strides = [1, 1, 1]} : vector<2x58x2xf32> to vector<2x58x1xf32>
    %102 = vector.broadcast %101 : vector<2x58x1xf32> to vector<2x58x16xf32>
    %103 = vector.broadcast %100 : vector<1x1x16xf32> to vector<2x58x16xf32>
    %104 = arith.mulf %102, %103 : vector<2x58x16xf32>
    %105 = arith.addf %98, %104 : vector<2x58x16xf32>
    %106 = vector.shape_cast %105 : vector<2x58x16xf32> to vector<116x16xf32>
    %c0_4 = arith.constant 0 : index
    %c0_5 = arith.constant 0 : index
    %107 = vector.load %arg2[%c0_4, %c0_5] : memref<1x16xf32, #tpu.memory_space<vmem>>, vector<1x16xf32>
    %c0_6 = arith.constant 0 : index
    %c0_7 = arith.constant 0 : index
    %108 = vector.load %arg3[%c0_6, %c0_7] : memref<1x16xf32, #tpu.memory_space<vmem>>, vector<1x16xf32>
    %cst = arith.constant dense<0.000000e+00> : vector<16xf32>
    %109 = vector.multi_reduction <add>, %106, %cst [0] : vector<116x16xf32> to vector<16xf32>
    %110 = vector.shape_cast %109 : vector<16xf32> to vector<1x16xf32>
    %111 = arith.mulf %106, %106 : vector<116x16xf32>
    %cst_8 = arith.constant dense<0.000000e+00> : vector<16xf32>
    %112 = vector.multi_reduction <add>, %111, %cst_8 [0] : vector<116x16xf32> to vector<16xf32>
    %113 = vector.shape_cast %112 : vector<16xf32> to vector<1x16xf32>
    %cst_9 = arith.constant 8.620690e-03 : f32
    %114 = vector.broadcast %cst_9 : f32 to vector<1x16xf32>
    %115 = arith.mulf %110, %114 : vector<1x16xf32>
    %cst_10 = arith.constant 8.620690e-03 : f32
    %116 = vector.broadcast %cst_10 : f32 to vector<1x16xf32>
    %117 = arith.mulf %113, %116 : vector<1x16xf32>
    %118 = arith.mulf %115, %115 : vector<1x16xf32>
    %119 = arith.subf %117, %118 : vector<1x16xf32>
    %cst_11 = arith.constant 9.99999974E-6 : f32
    %120 = vector.broadcast %cst_11 : f32 to vector<1x16xf32>
    %121 = arith.addf %119, %120 : vector<1x16xf32>
    %122 = math.rsqrt %121 : vector<1x16xf32>
    %123 = arith.mulf %107, %122 : vector<1x16xf32>
    %124 = arith.mulf %115, %123 : vector<1x16xf32>
    %125 = arith.subf %108, %124 : vector<1x16xf32>
    %126 = vector.broadcast %123 : vector<1x16xf32> to vector<116x16xf32>
    %127 = arith.mulf %106, %126 : vector<116x16xf32>
    %128 = vector.broadcast %125 : vector<1x16xf32> to vector<116x16xf32>
    %129 = arith.addf %127, %128 : vector<116x16xf32>
    %cst_12 = arith.constant 1.000000e-01 : f32
    %130 = vector.broadcast %cst_12 : f32 to vector<116x16xf32>
    %131 = arith.mulf %130, %129 : vector<116x16xf32>
    %132 = arith.maximumf %129, %131 : vector<116x16xf32>
    %133 = vector.shape_cast %132 : vector<116x16xf32> to vector<2x58x16xf32>
    %c0_13 = arith.constant 0 : index
    %c0_14 = arith.constant 0 : index
    %134 = vector.load %arg4[%c0_13, %c0_14] : memref<112x32xbf16, #tpu.memory_space<vmem>>, vector<112x32xbf16>
    %135 = vector.shape_cast %133 : vector<2x58x16xf32> to vector<2x29x2x16xf32>
    %136 = vector.extract_strided_slice %135 {offsets = [0, 0, 0, 0], sizes = [2, 29, 1, 16], strides = [1, 1, 1, 1]} : vector<2x29x2x16xf32> to vector<2x29x1x16xf32>
    %137 = vector.shape_cast %136 : vector<2x29x1x16xf32> to vector<2x29x16xf32>
    %138 = vector.extract_strided_slice %135 {offsets = [0, 0, 1, 0], sizes = [2, 29, 1, 16], strides = [1, 1, 1, 1]} : vector<2x29x2x16xf32> to vector<2x29x1x16xf32>
    %139 = vector.shape_cast %138 : vector<2x29x1x16xf32> to vector<2x29x16xf32>
    %140 = vector.extract_strided_slice %137 {offsets = [0, 0, 0], sizes = [2, 26, 16], strides = [1, 1, 1]} : vector<2x29x16xf32> to vector<2x26x16xf32>
    %141 = vector.shape_cast %140 : vector<2x26x16xf32> to vector<52x16xf32>
    %142 = arith.truncf %141 : vector<52x16xf32> to vector<52x16xbf16>
    %143 = vector.extract_strided_slice %134 {offsets = [0, 0], sizes = [16, 32], strides = [1, 1]} : vector<112x32xbf16> to vector<16x32xbf16>
    %cst_15 = arith.constant dense<0.000000e+00> : vector<52x32xf32>
    %144 = tpu.matmul %142, %143, %cst_15 {dimension_numbers = #tpu.dot_dimension_numbers<[1], [0], [0], [1], [0, 0, 1, 1], [], []>} : vector<52x16xbf16>, vector<16x32xbf16>, vector<52x32xf32> -> vector<52x32xf32>
    %145 = vector.extract_strided_slice %139 {offsets = [0, 0, 0], sizes = [2, 26, 16], strides = [1, 1, 1]} : vector<2x29x16xf32> to vector<2x26x16xf32>
    %146 = vector.shape_cast %145 : vector<2x26x16xf32> to vector<52x16xf32>
    %147 = arith.truncf %146 : vector<52x16xf32> to vector<52x16xbf16>
    %148 = vector.extract_strided_slice %134 {offsets = [16, 0], sizes = [16, 32], strides = [1, 1]} : vector<112x32xbf16> to vector<16x32xbf16>
    %cst_16 = arith.constant dense<0.000000e+00> : vector<52x32xf32>
    %149 = tpu.matmul %147, %148, %cst_16 {dimension_numbers = #tpu.dot_dimension_numbers<[1], [0], [0], [1], [0, 0, 1, 1], [], []>} : vector<52x16xbf16>, vector<16x32xbf16>, vector<52x32xf32> -> vector<52x32xf32>
    %150 = arith.addf %144, %149 : vector<52x32xf32>
    %151 = vector.extract_strided_slice %137 {offsets = [0, 1, 0], sizes = [2, 26, 16], strides = [1, 1, 1]} : vector<2x29x16xf32> to vector<2x26x16xf32>
    %152 = vector.shape_cast %151 : vector<2x26x16xf32> to vector<52x16xf32>
    %153 = arith.truncf %152 : vector<52x16xf32> to vector<52x16xbf16>
    %154 = vector.extract_strided_slice %134 {offsets = [32, 0], sizes = [16, 32], strides = [1, 1]} : vector<112x32xbf16> to vector<16x32xbf16>
    %cst_17 = arith.constant dense<0.000000e+00> : vector<52x32xf32>
    %155 = tpu.matmul %153, %154, %cst_17 {dimension_numbers = #tpu.dot_dimension_numbers<[1], [0], [0], [1], [0, 0, 1, 1], [], []>} : vector<52x16xbf16>, vector<16x32xbf16>, vector<52x32xf32> -> vector<52x32xf32>
    %156 = arith.addf %150, %155 : vector<52x32xf32>
    %157 = vector.extract_strided_slice %139 {offsets = [0, 1, 0], sizes = [2, 26, 16], strides = [1, 1, 1]} : vector<2x29x16xf32> to vector<2x26x16xf32>
    %158 = vector.shape_cast %157 : vector<2x26x16xf32> to vector<52x16xf32>
    %159 = arith.truncf %158 : vector<52x16xf32> to vector<52x16xbf16>
    %160 = vector.extract_strided_slice %134 {offsets = [48, 0], sizes = [16, 32], strides = [1, 1]} : vector<112x32xbf16> to vector<16x32xbf16>
    %cst_18 = arith.constant dense<0.000000e+00> : vector<52x32xf32>
    %161 = tpu.matmul %159, %160, %cst_18 {dimension_numbers = #tpu.dot_dimension_numbers<[1], [0], [0], [1], [0, 0, 1, 1], [], []>} : vector<52x16xbf16>, vector<16x32xbf16>, vector<52x32xf32> -> vector<52x32xf32>
    %162 = arith.addf %156, %161 : vector<52x32xf32>
    %163 = vector.extract_strided_slice %137 {offsets = [0, 2, 0], sizes = [2, 26, 16], strides = [1, 1, 1]} : vector<2x29x16xf32> to vector<2x26x16xf32>
    %164 = vector.shape_cast %163 : vector<2x26x16xf32> to vector<52x16xf32>
    %165 = arith.truncf %164 : vector<52x16xf32> to vector<52x16xbf16>
    %166 = vector.extract_strided_slice %134 {offsets = [64, 0], sizes = [16, 32], strides = [1, 1]} : vector<112x32xbf16> to vector<16x32xbf16>
    %cst_19 = arith.constant dense<0.000000e+00> : vector<52x32xf32>
    %167 = tpu.matmul %165, %166, %cst_19 {dimension_numbers = #tpu.dot_dimension_numbers<[1], [0], [0], [1], [0, 0, 1, 1], [], []>} : vector<52x16xbf16>, vector<16x32xbf16>, vector<52x32xf32> -> vector<52x32xf32>
    %168 = arith.addf %162, %167 : vector<52x32xf32>
    %169 = vector.extract_strided_slice %139 {offsets = [0, 2, 0], sizes = [2, 26, 16], strides = [1, 1, 1]} : vector<2x29x16xf32> to vector<2x26x16xf32>
    %170 = vector.shape_cast %169 : vector<2x26x16xf32> to vector<52x16xf32>
    %171 = arith.truncf %170 : vector<52x16xf32> to vector<52x16xbf16>
    %172 = vector.extract_strided_slice %134 {offsets = [80, 0], sizes = [16, 32], strides = [1, 1]} : vector<112x32xbf16> to vector<16x32xbf16>
    %cst_20 = arith.constant dense<0.000000e+00> : vector<52x32xf32>
    %173 = tpu.matmul %171, %172, %cst_20 {dimension_numbers = #tpu.dot_dimension_numbers<[1], [0], [0], [1], [0, 0, 1, 1], [], []>} : vector<52x16xbf16>, vector<16x32xbf16>, vector<52x32xf32> -> vector<52x32xf32>
    %174 = arith.addf %168, %173 : vector<52x32xf32>
    %175 = vector.extract_strided_slice %137 {offsets = [0, 3, 0], sizes = [2, 26, 16], strides = [1, 1, 1]} : vector<2x29x16xf32> to vector<2x26x16xf32>
    %176 = vector.shape_cast %175 : vector<2x26x16xf32> to vector<52x16xf32>
    %177 = arith.truncf %176 : vector<52x16xf32> to vector<52x16xbf16>
    %178 = vector.extract_strided_slice %134 {offsets = [96, 0], sizes = [16, 32], strides = [1, 1]} : vector<112x32xbf16> to vector<16x32xbf16>
    %cst_21 = arith.constant dense<0.000000e+00> : vector<52x32xf32>
    %179 = tpu.matmul %177, %178, %cst_21 {dimension_numbers = #tpu.dot_dimension_numbers<[1], [0], [0], [1], [0, 0, 1, 1], [], []>} : vector<52x16xbf16>, vector<16x32xbf16>, vector<52x32xf32> -> vector<52x32xf32>
    %180 = arith.addf %174, %179 : vector<52x32xf32>
    %c0_22 = arith.constant 0 : index
    %c0_23 = arith.constant 0 : index
    %181 = vector.load %arg5[%c0_22, %c0_23] : memref<1x32xf32, #tpu.memory_space<vmem>>, vector<1x32xf32>
    %c0_24 = arith.constant 0 : index
    %c0_25 = arith.constant 0 : index
    %182 = vector.load %arg6[%c0_24, %c0_25] : memref<1x32xf32, #tpu.memory_space<vmem>>, vector<1x32xf32>
    %cst_26 = arith.constant dense<0.000000e+00> : vector<32xf32>
    %183 = vector.multi_reduction <add>, %180, %cst_26 [0] : vector<52x32xf32> to vector<32xf32>
    %184 = vector.shape_cast %183 : vector<32xf32> to vector<1x32xf32>
    %185 = arith.mulf %180, %180 : vector<52x32xf32>
    %cst_27 = arith.constant dense<0.000000e+00> : vector<32xf32>
    %186 = vector.multi_reduction <add>, %185, %cst_27 [0] : vector<52x32xf32> to vector<32xf32>
    %187 = vector.shape_cast %186 : vector<32xf32> to vector<1x32xf32>
    %cst_28 = arith.constant 0.0192307699 : f32
    %188 = vector.broadcast %cst_28 : f32 to vector<1x32xf32>
    %189 = arith.mulf %184, %188 : vector<1x32xf32>
    %cst_29 = arith.constant 0.0192307699 : f32
    %190 = vector.broadcast %cst_29 : f32 to vector<1x32xf32>
    %191 = arith.mulf %187, %190 : vector<1x32xf32>
    %192 = arith.mulf %189, %189 : vector<1x32xf32>
    %193 = arith.subf %191, %192 : vector<1x32xf32>
    %cst_30 = arith.constant 9.99999974E-6 : f32
    %194 = vector.broadcast %cst_30 : f32 to vector<1x32xf32>
    %195 = arith.addf %193, %194 : vector<1x32xf32>
    %196 = math.rsqrt %195 : vector<1x32xf32>
    %197 = arith.mulf %181, %196 : vector<1x32xf32>
    %198 = arith.mulf %189, %197 : vector<1x32xf32>
    %199 = arith.subf %182, %198 : vector<1x32xf32>
    %200 = vector.broadcast %197 : vector<1x32xf32> to vector<52x32xf32>
    %201 = arith.mulf %180, %200 : vector<52x32xf32>
    %202 = vector.broadcast %199 : vector<1x32xf32> to vector<52x32xf32>
    %203 = arith.addf %201, %202 : vector<52x32xf32>
    %cst_31 = arith.constant 1.000000e-01 : f32
    %204 = vector.broadcast %cst_31 : f32 to vector<52x32xf32>
    %205 = arith.mulf %204, %203 : vector<52x32xf32>
    %206 = arith.maximumf %203, %205 : vector<52x32xf32>
    %207 = vector.shape_cast %206 : vector<52x32xf32> to vector<2x26x32xf32>
    %c0_32 = arith.constant 0 : index
    %c0_33 = arith.constant 0 : index
    %208 = vector.load %arg7[%c0_32, %c0_33] : memref<96x64xbf16, #tpu.memory_space<vmem>>, vector<96x64xbf16>
    %209 = vector.shape_cast %207 : vector<2x26x32xf32> to vector<2x13x2x32xf32>
    %210 = vector.extract_strided_slice %209 {offsets = [0, 0, 0, 0], sizes = [2, 13, 1, 32], strides = [1, 1, 1, 1]} : vector<2x13x2x32xf32> to vector<2x13x1x32xf32>
    %211 = vector.shape_cast %210 : vector<2x13x1x32xf32> to vector<2x13x32xf32>
    %212 = vector.extract_strided_slice %209 {offsets = [0, 0, 1, 0], sizes = [2, 13, 1, 32], strides = [1, 1, 1, 1]} : vector<2x13x2x32xf32> to vector<2x13x1x32xf32>
    %213 = vector.shape_cast %212 : vector<2x13x1x32xf32> to vector<2x13x32xf32>
    %214 = vector.extract_strided_slice %211 {offsets = [0, 0, 0], sizes = [2, 12, 32], strides = [1, 1, 1]} : vector<2x13x32xf32> to vector<2x12x32xf32>
    %215 = vector.shape_cast %214 : vector<2x12x32xf32> to vector<24x32xf32>
    %216 = arith.truncf %215 : vector<24x32xf32> to vector<24x32xbf16>
    %217 = vector.extract_strided_slice %208 {offsets = [0, 0], sizes = [32, 64], strides = [1, 1]} : vector<96x64xbf16> to vector<32x64xbf16>
    %cst_34 = arith.constant dense<0.000000e+00> : vector<24x64xf32>
    %218 = tpu.matmul %216, %217, %cst_34 {dimension_numbers = #tpu.dot_dimension_numbers<[1], [0], [0], [1], [0, 0, 1, 1], [], []>} : vector<24x32xbf16>, vector<32x64xbf16>, vector<24x64xf32> -> vector<24x64xf32>
    %219 = vector.extract_strided_slice %213 {offsets = [0, 0, 0], sizes = [2, 12, 32], strides = [1, 1, 1]} : vector<2x13x32xf32> to vector<2x12x32xf32>
    %220 = vector.shape_cast %219 : vector<2x12x32xf32> to vector<24x32xf32>
    %221 = arith.truncf %220 : vector<24x32xf32> to vector<24x32xbf16>
    %222 = vector.extract_strided_slice %208 {offsets = [32, 0], sizes = [32, 64], strides = [1, 1]} : vector<96x64xbf16> to vector<32x64xbf16>
    %cst_35 = arith.constant dense<0.000000e+00> : vector<24x64xf32>
    %223 = tpu.matmul %221, %222, %cst_35 {dimension_numbers = #tpu.dot_dimension_numbers<[1], [0], [0], [1], [0, 0, 1, 1], [], []>} : vector<24x32xbf16>, vector<32x64xbf16>, vector<24x64xf32> -> vector<24x64xf32>
    %224 = arith.addf %218, %223 : vector<24x64xf32>
    %225 = vector.extract_strided_slice %211 {offsets = [0, 1, 0], sizes = [2, 12, 32], strides = [1, 1, 1]} : vector<2x13x32xf32> to vector<2x12x32xf32>
    %226 = vector.shape_cast %225 : vector<2x12x32xf32> to vector<24x32xf32>
    %227 = arith.truncf %226 : vector<24x32xf32> to vector<24x32xbf16>
    %228 = vector.extract_strided_slice %208 {offsets = [64, 0], sizes = [32, 64], strides = [1, 1]} : vector<96x64xbf16> to vector<32x64xbf16>
    %cst_36 = arith.constant dense<0.000000e+00> : vector<24x64xf32>
    %229 = tpu.matmul %227, %228, %cst_36 {dimension_numbers = #tpu.dot_dimension_numbers<[1], [0], [0], [1], [0, 0, 1, 1], [], []>} : vector<24x32xbf16>, vector<32x64xbf16>, vector<24x64xf32> -> vector<24x64xf32>
    %230 = arith.addf %224, %229 : vector<24x64xf32>
    %c0_37 = arith.constant 0 : index
    %c0_38 = arith.constant 0 : index
    %231 = vector.load %arg8[%c0_37, %c0_38] : memref<1x64xf32, #tpu.memory_space<vmem>>, vector<1x64xf32>
    %c0_39 = arith.constant 0 : index
    %c0_40 = arith.constant 0 : index
    %232 = vector.load %arg9[%c0_39, %c0_40] : memref<1x64xf32, #tpu.memory_space<vmem>>, vector<1x64xf32>
    %cst_41 = arith.constant dense<0.000000e+00> : vector<64xf32>
    %233 = vector.multi_reduction <add>, %230, %cst_41 [0] : vector<24x64xf32> to vector<64xf32>
    %234 = vector.shape_cast %233 : vector<64xf32> to vector<1x64xf32>
    %235 = arith.mulf %230, %230 : vector<24x64xf32>
    %cst_42 = arith.constant dense<0.000000e+00> : vector<64xf32>
    %236 = vector.multi_reduction <add>, %235, %cst_42 [0] : vector<24x64xf32> to vector<64xf32>
    %237 = vector.shape_cast %236 : vector<64xf32> to vector<1x64xf32>
    %cst_43 = arith.constant 0.0416666679 : f32
    %238 = vector.broadcast %cst_43 : f32 to vector<1x64xf32>
    %239 = arith.mulf %234, %238 : vector<1x64xf32>
    %cst_44 = arith.constant 0.0416666679 : f32
    %240 = vector.broadcast %cst_44 : f32 to vector<1x64xf32>
    %241 = arith.mulf %237, %240 : vector<1x64xf32>
    %242 = arith.mulf %239, %239 : vector<1x64xf32>
    %243 = arith.subf %241, %242 : vector<1x64xf32>
    %cst_45 = arith.constant 9.99999974E-6 : f32
    %244 = vector.broadcast %cst_45 : f32 to vector<1x64xf32>
    %245 = arith.addf %243, %244 : vector<1x64xf32>
    %246 = math.rsqrt %245 : vector<1x64xf32>
    %247 = arith.mulf %231, %246 : vector<1x64xf32>
    %248 = arith.mulf %239, %247 : vector<1x64xf32>
    %249 = arith.subf %232, %248 : vector<1x64xf32>
    %250 = vector.broadcast %247 : vector<1x64xf32> to vector<24x64xf32>
    %251 = arith.mulf %230, %250 : vector<24x64xf32>
    %252 = vector.broadcast %249 : vector<1x64xf32> to vector<24x64xf32>
    %253 = arith.addf %251, %252 : vector<24x64xf32>
    %cst_46 = arith.constant 1.000000e-01 : f32
    %254 = vector.broadcast %cst_46 : f32 to vector<24x64xf32>
    %255 = arith.mulf %254, %253 : vector<24x64xf32>
    %256 = arith.maximumf %253, %255 : vector<24x64xf32>
    %257 = vector.shape_cast %256 : vector<24x64xf32> to vector<2x12x64xf32>
    %c0_47 = arith.constant 0 : index
    %c0_48 = arith.constant 0 : index
    %258 = vector.load %arg10[%c0_47, %c0_48] : memref<192x64xbf16, #tpu.memory_space<vmem>>, vector<192x64xbf16>
    %259 = vector.shape_cast %257 : vector<2x12x64xf32> to vector<2x6x2x64xf32>
    %260 = vector.extract_strided_slice %259 {offsets = [0, 0, 0, 0], sizes = [2, 6, 1, 64], strides = [1, 1, 1, 1]} : vector<2x6x2x64xf32> to vector<2x6x1x64xf32>
    %261 = vector.shape_cast %260 : vector<2x6x1x64xf32> to vector<2x6x64xf32>
    %262 = vector.extract_strided_slice %259 {offsets = [0, 0, 1, 0], sizes = [2, 6, 1, 64], strides = [1, 1, 1, 1]} : vector<2x6x2x64xf32> to vector<2x6x1x64xf32>
    %263 = vector.shape_cast %262 : vector<2x6x1x64xf32> to vector<2x6x64xf32>
    %264 = vector.extract_strided_slice %261 {offsets = [0, 0, 0], sizes = [2, 5, 64], strides = [1, 1, 1]} : vector<2x6x64xf32> to vector<2x5x64xf32>
    %265 = vector.shape_cast %264 : vector<2x5x64xf32> to vector<10x64xf32>
    %266 = arith.truncf %265 : vector<10x64xf32> to vector<10x64xbf16>
    %267 = vector.extract_strided_slice %258 {offsets = [0, 0], sizes = [64, 64], strides = [1, 1]} : vector<192x64xbf16> to vector<64x64xbf16>
    %cst_49 = arith.constant dense<0.000000e+00> : vector<10x64xf32>
    %268 = tpu.matmul %266, %267, %cst_49 {dimension_numbers = #tpu.dot_dimension_numbers<[1], [0], [0], [1], [0, 0, 1, 1], [], []>} : vector<10x64xbf16>, vector<64x64xbf16>, vector<10x64xf32> -> vector<10x64xf32>
    %269 = vector.extract_strided_slice %263 {offsets = [0, 0, 0], sizes = [2, 5, 64], strides = [1, 1, 1]} : vector<2x6x64xf32> to vector<2x5x64xf32>
    %270 = vector.shape_cast %269 : vector<2x5x64xf32> to vector<10x64xf32>
    %271 = arith.truncf %270 : vector<10x64xf32> to vector<10x64xbf16>
    %272 = vector.extract_strided_slice %258 {offsets = [64, 0], sizes = [64, 64], strides = [1, 1]} : vector<192x64xbf16> to vector<64x64xbf16>
    %cst_50 = arith.constant dense<0.000000e+00> : vector<10x64xf32>
    %273 = tpu.matmul %271, %272, %cst_50 {dimension_numbers = #tpu.dot_dimension_numbers<[1], [0], [0], [1], [0, 0, 1, 1], [], []>} : vector<10x64xbf16>, vector<64x64xbf16>, vector<10x64xf32> -> vector<10x64xf32>
    %274 = arith.addf %268, %273 : vector<10x64xf32>
    %275 = vector.extract_strided_slice %261 {offsets = [0, 1, 0], sizes = [2, 5, 64], strides = [1, 1, 1]} : vector<2x6x64xf32> to vector<2x5x64xf32>
    %276 = vector.shape_cast %275 : vector<2x5x64xf32> to vector<10x64xf32>
    %277 = arith.truncf %276 : vector<10x64xf32> to vector<10x64xbf16>
    %278 = vector.extract_strided_slice %258 {offsets = [128, 0], sizes = [64, 64], strides = [1, 1]} : vector<192x64xbf16> to vector<64x64xbf16>
    %cst_51 = arith.constant dense<0.000000e+00> : vector<10x64xf32>
    %279 = tpu.matmul %277, %278, %cst_51 {dimension_numbers = #tpu.dot_dimension_numbers<[1], [0], [0], [1], [0, 0, 1, 1], [], []>} : vector<10x64xbf16>, vector<64x64xbf16>, vector<10x64xf32> -> vector<10x64xf32>
    %280 = arith.addf %274, %279 : vector<10x64xf32>
    %c0_52 = arith.constant 0 : index
    %c0_53 = arith.constant 0 : index
    %281 = vector.load %arg11[%c0_52, %c0_53] : memref<1x64xf32, #tpu.memory_space<vmem>>, vector<1x64xf32>
    %c0_54 = arith.constant 0 : index
    %c0_55 = arith.constant 0 : index
    %282 = vector.load %arg12[%c0_54, %c0_55] : memref<1x64xf32, #tpu.memory_space<vmem>>, vector<1x64xf32>
    %cst_56 = arith.constant dense<0.000000e+00> : vector<64xf32>
    %283 = vector.multi_reduction <add>, %280, %cst_56 [0] : vector<10x64xf32> to vector<64xf32>
    %284 = vector.shape_cast %283 : vector<64xf32> to vector<1x64xf32>
    %285 = arith.mulf %280, %280 : vector<10x64xf32>
    %cst_57 = arith.constant dense<0.000000e+00> : vector<64xf32>
    %286 = vector.multi_reduction <add>, %285, %cst_57 [0] : vector<10x64xf32> to vector<64xf32>
    %287 = vector.shape_cast %286 : vector<64xf32> to vector<1x64xf32>
    %cst_58 = arith.constant 1.000000e-01 : f32
    %288 = vector.broadcast %cst_58 : f32 to vector<1x64xf32>
    %289 = arith.mulf %284, %288 : vector<1x64xf32>
    %cst_59 = arith.constant 1.000000e-01 : f32
    %290 = vector.broadcast %cst_59 : f32 to vector<1x64xf32>
    %291 = arith.mulf %287, %290 : vector<1x64xf32>
    %292 = arith.mulf %289, %289 : vector<1x64xf32>
    %293 = arith.subf %291, %292 : vector<1x64xf32>
    %cst_60 = arith.constant 9.99999974E-6 : f32
    %294 = vector.broadcast %cst_60 : f32 to vector<1x64xf32>
    %295 = arith.addf %293, %294 : vector<1x64xf32>
    %296 = math.rsqrt %295 : vector<1x64xf32>
    %297 = arith.mulf %281, %296 : vector<1x64xf32>
    %298 = arith.mulf %289, %297 : vector<1x64xf32>
    %299 = arith.subf %282, %298 : vector<1x64xf32>
    %300 = vector.broadcast %297 : vector<1x64xf32> to vector<10x64xf32>
    %301 = arith.mulf %280, %300 : vector<10x64xf32>
    %302 = vector.broadcast %299 : vector<1x64xf32> to vector<10x64xf32>
    %303 = arith.addf %301, %302 : vector<10x64xf32>
    %cst_61 = arith.constant 1.000000e-01 : f32
    %304 = vector.broadcast %cst_61 : f32 to vector<10x64xf32>
    %305 = arith.mulf %304, %303 : vector<10x64xf32>
    %306 = arith.maximumf %303, %305 : vector<10x64xf32>
    %307 = vector.shape_cast %306 : vector<10x64xf32> to vector<2x5x64xf32>
    %cst_62 = arith.constant dense<0.000000e+00> : vector<2x64xf32>
    %308 = vector.multi_reduction <add>, %307, %cst_62 [1] : vector<2x5x64xf32> to vector<2x64xf32>
    %cst_63 = arith.constant 2.000000e-01 : f32
    %309 = vector.broadcast %cst_63 : f32 to vector<2x64xf32>
    %310 = arith.mulf %308, %309 : vector<2x64xf32>
    %311 = arith.truncf %310 : vector<2x64xf32> to vector<2x64xbf16>
    %c0_64 = arith.constant 0 : index
    %c0_65 = arith.constant 0 : index
    %312 = vector.load %arg13[%c0_64, %c0_65] : memref<64x16xbf16, #tpu.memory_space<vmem>>, vector<64x16xbf16>
    %cst_66 = arith.constant dense<0.000000e+00> : vector<2x16xf32>
    %313 = tpu.matmul %311, %312, %cst_66 {dimension_numbers = #tpu.dot_dimension_numbers<[1], [0], [0], [1], [0, 0, 1, 1], [], []>} : vector<2x64xbf16>, vector<64x16xbf16>, vector<2x16xf32> -> vector<2x16xf32>
    %c0_67 = arith.constant 0 : index
    %c0_68 = arith.constant 0 : index
    %314 = vector.load %arg14[%c0_67, %c0_68] : memref<1x16xf32, #tpu.memory_space<vmem>>, vector<1x16xf32>
    %315 = vector.broadcast %314 : vector<1x16xf32> to vector<2x16xf32>
    %316 = arith.addf %313, %315 : vector<2x16xf32>
    %c0_69 = arith.constant 0 : index
    %c0_70 = arith.constant 0 : index
    %317 = vector.load %arg15[%c0_69, %c0_70] : memref<2x16xf32, #tpu.memory_space<vmem>>, vector<2x16xf32>
    tpu.vector_store %arg15[%c0_69, %c0_70], %316 {strides = array<i32>} : memref<2x16xf32, #tpu.memory_space<vmem>>, vector<2x16xf32>,
    return
  }
}

</mosaic_0001>

<llo_original>
// kernel: tpu_custom_call.1
$region0: #{tpu_custom_call.1}
  #allocation0 [shape = 'u32[]', space=smem, size = 0x4, offset = 0x4, fixed_abs, tag = 'smem constant byte address 0x4 - core index']
  #allocation1 [shape = 'u32[144,128]{1,0:T(1,128)}', space=vmem, size = 0x12000, scoped, tag = 'internal scratch']
  %s0 = inlined_call_operand.vmem [shape: f32[2,64,2], index: 0, kind: input, shape index: {}]
  %s1 = inlined_call_operand.vmem [shape: f32[14,16], index: 1, kind: input, shape index: {}]
  %s2 = inlined_call_operand.vmem [shape: f32[1,16], index: 2, kind: input, shape index: {}]
  %s3 = inlined_call_operand.vmem [shape: f32[1,16], index: 3, kind: input, shape index: {}]
  %s4 = inlined_call_operand.vmem [shape: bf16[112,32], index: 4, kind: input, shape index: {}]
  %s5 = inlined_call_operand.vmem [shape: f32[1,32], index: 5, kind: input, shape index: {}]
  %s6 = inlined_call_operand.vmem [shape: f32[1,32], index: 6, kind: input, shape index: {}]
  %s7 = inlined_call_operand.vmem [shape: bf16[96,64], index: 7, kind: input, shape index: {}]
  %s8 = inlined_call_operand.vmem [shape: f32[1,64], index: 8, kind: input, shape index: {}]
  %s9 = inlined_call_operand.vmem [shape: f32[1,64], index: 9, kind: input, shape index: {}]
  %s10 = inlined_call_operand.vmem [shape: bf16[192,64], index: 10, kind: input, shape index: {}]
  %s11 = inlined_call_operand.vmem [shape: f32[1,64], index: 11, kind: input, shape index: {}]
  %s12 = inlined_call_operand.vmem [shape: f32[1,64], index: 12, kind: input, shape index: {}]
  %s13 = inlined_call_operand.vmem [shape: bf16[64,16], index: 13, kind: input, shape index: {}]
  %s14 = inlined_call_operand.vmem [shape: f32[1,16], index: 14, kind: input, shape index: {}]
  %s15 = inlined_call_operand.hbm [shape: f32[2,16], index: 15, kind: output, shape index: {}]
  %s16 = sld [smem:[#allocation0]]
  $region70: #{tpu_custom_call.1} parent=0
    _
  %s18 = ssub.s32 1, %s16
  %s19 = scalar_select 0, %s18, %s16
  $region1: #{tpu_custom_call.1} parent=0
    #allocation2 [shape = 'u8[1024]{0}', space=vmem, size = 0x400, scoped, tag = 'output window, operand 0, single buffered']
    #allocation3 [shape = 's32[1]{0}', space=sflag, size = 0x4, scoped, tag = 'scoped memory for tpu_custom_call.1']
    %20 = vsyncpa [#allocation3], 0
    // Predicated region
    $region2: #{tpu_custom_call.1} parent=1 // pred_check
      _
    $region3: #{tpu_custom_call.1} parent=1 // pred_check_branch
      %22 = sbr.rel (0) target = $region5
    $region4: #{tpu_custom_call.1} parent=1 // pred_region
      _
    $region5: #{tpu_custom_call.1} parent=1 // pred_fallthru
      _
    // Predicated region
    $region6: #{tpu_custom_call.1} parent=1 // pred_check
      _
    $region7: #{tpu_custom_call.1} parent=1 // pred_check_branch
      %24 = sbr.rel (0) target = $region9
    $region8: #{tpu_custom_call.1} parent=1 // pred_region
      _
    $region9: #{tpu_custom_call.1} parent=1 // pred_fallthru
      _
    // Predicated region
    $region10: #{tpu_custom_call.1} parent=1 // pred_check
      _
    $region11: #{tpu_custom_call.1} parent=1 // pred_check_branch
      %26 = sbr.rel (0) target = $region13
    $region12: #{tpu_custom_call.1} parent=1 // pred_region
      _
    $region13: #{tpu_custom_call.1} parent=1 // pred_fallthru
      _
    // Predicated region
    $region14: #{tpu_custom_call.1} parent=1 // pred_check
      _
    $region15: #{tpu_custom_call.1} parent=1 // pred_check_branch
      %28 = sbr.rel (0) target = $region17
    $region16: #{tpu_custom_call.1} parent=1 // pred_region
      _
    $region17: #{tpu_custom_call.1} parent=1 // pred_fallthru
      _
    // Predicated region
    $region18: #{tpu_custom_call.1} parent=1 // pred_check
      _
    $region19: #{tpu_custom_call.1} parent=1 // pred_check_branch
      %30 = sbr.rel (0) target = $region21
    $region20: #{tpu_custom_call.1} parent=1 // pred_region
      _
    $region21: #{tpu_custom_call.1} parent=1 // pred_fallthru
      _
    // Predicated region
    $region22: #{tpu_custom_call.1} parent=1 // pred_check
      _
    $region23: #{tpu_custom_call.1} parent=1 // pred_check_branch
      %32 = sbr.rel (0) target = $region25
    $region24: #{tpu_custom_call.1} parent=1 // pred_region
      _
    $region25: #{tpu_custom_call.1} parent=1 // pred_fallthru
      _
    // Predicated region
    $region26: #{tpu_custom_call.1} parent=1 // pred_check
      _
    $region27: #{tpu_custom_call.1} parent=1 // pred_check_branch
      %34 = sbr.rel (0) target = $region29
    $region28: #{tpu_custom_call.1} parent=1 // pred_region
      _
    $region29: #{tpu_custom_call.1} parent=1 // pred_fallthru
      _
    // Predicated region
    $region30: #{tpu_custom_call.1} parent=1 // pred_check
      _
    $region31: #{tpu_custom_call.1} parent=1 // pred_check_branch
      %36 = sbr.rel (0) target = $region33
    $region32: #{tpu_custom_call.1} parent=1 // pred_region
      _
    $region33: #{tpu_custom_call.1} parent=1 // pred_fallthru
      _
    // Predicated region
    $region34: #{tpu_custom_call.1} parent=1 // pred_check
      _
    $region35: #{tpu_custom_call.1} parent=1 // pred_check_branch
      %38 = sbr.rel (0) target = $region37
    $region36: #{tpu_custom_call.1} parent=1 // pred_region
      _
    $region37: #{tpu_custom_call.1} parent=1 // pred_fallthru
      _
    // Predicated region
    $region38: #{tpu_custom_call.1} parent=1 // pred_check
      _
    $region39: #{tpu_custom_call.1} parent=1 // pred_check_branch
      %40 = sbr.rel (0) target = $region41
    $region40: #{tpu_custom_call.1} parent=1 // pred_region
      _
    $region41: #{tpu_custom_call.1} parent=1 // pred_fallthru
      _
    // Predicated region
    $region42: #{tpu_custom_call.1} parent=1 // pred_check
      _
    $region43: #{tpu_custom_call.1} parent=1 // pred_check_branch
      %42 = sbr.rel (0) target = $region45
    $region44: #{tpu_custom_call.1} parent=1 // pred_region
      _
    $region45: #{tpu_custom_call.1} parent=1 // pred_fallthru
      _
    // Predicated region
    $region46: #{tpu_custom_call.1} parent=1 // pred_check
      _
    $region47: #{tpu_custom_call.1} parent=1 // pred_check_branch
      %44 = sbr.rel (0) target = $region49
    $region48: #{tpu_custom_call.1} parent=1 // pred_region
      _
    $region49: #{tpu_custom_call.1} parent=1 // pred_fallthru
      _
    // Predicated region
    $region50: #{tpu_custom_call.1} parent=1 // pred_check
      _
    $region51: #{tpu_custom_call.1} parent=1 // pred_check_branch
      %46 = sbr.rel (0) target = $region53
    $region52: #{tpu_custom_call.1} parent=1 // pred_region
      _
    $region53: #{tpu_custom_call.1} parent=1 // pred_fallthru
      _
    // Predicated region
    $region54: #{tpu_custom_call.1} parent=1 // pred_check
      _
    $region55: #{tpu_custom_call.1} parent=1 // pred_check_branch
      %48 = sbr.rel (0) target = $region57
    $region56: #{tpu_custom_call.1} parent=1 // pred_region
      _
    $region57: #{tpu_custom_call.1} parent=1 // pred_fallthru
      _
    // Predicated region
    $region58: #{tpu_custom_call.1} parent=1 // pred_check
      _
    $region59: #{tpu_custom_call.1} parent=1 // pred_check_branch
      %50 = sbr.rel (0) target = $region61
    $region60: #{tpu_custom_call.1} parent=1 // pred_region
      _
    $region61: #{tpu_custom_call.1} parent=1 // pred_fallthru
      _
    %v52 = vld [vmem:[%s0] sm:$0xff]
    %v53 = vld [vmem:[%s0 + $0x8] sm:$0xff]
    %v54 = vld [vmem:[%s0 + $0x10] sm:$0xff]
    %v55 = vld [vmem:[%s0 + $0x18] sm:$0xff]
    %v56 = vld [vmem:[%s0 + $0x20] sm:$0xff]
    %v57 = vld [vmem:[%s0 + $0x28] sm:$0xff]
    %v58 = vld [vmem:[%s0 + $0x30] sm:$0xff]
    %v59 = vld [vmem:[%s0 + $0x38] sm:$0xff]
    %v60 = vld [vmem:[%s0 + $0x40] sm:$0xff]
    %v61 = vld [vmem:[%s0 + $0x48] sm:$0xff]
    %v62 = vld [vmem:[%s0 + $0x50] sm:$0xff]
    %v63 = vld [vmem:[%s0 + $0x58] sm:$0xff]
    %v64 = vld [vmem:[%s0 + $0x60] sm:$0xff]
    %v65 = vld [vmem:[%s0 + $0x68] sm:$0xff]
    %v66 = vld [vmem:[%s0 + $0x70] sm:$0xff]
    %v67 = vld [vmem:[%s0 + $0x78] sm:$0xff]
    %v68 = vld [vmem:[%s1] sm:$0xff]
    %v69 = vld [vmem:[%s1 + $0x8] sm:$0x3f]
    %71 = vset.pattern.permute.xlu0 0
    %72 = vperm.xlu0 %71, %v52
    %v73 = vpop.permute.xlu0 %72
    %76 = vset.pattern.permute.xlu0 0
    %77 = vperm.xlu0 %76, %v53
    %v78 = vpop.permute.xlu0 %77
    %81 = vset.pattern.permute.xlu0 0
    %82 = vperm.xlu0 %81, %v54
    %v83 = vpop.permute.xlu0 %82
    %86 = vset.pattern.permute.xlu0 0
    %87 = vperm.xlu0 %86, %v55
    %v88 = vpop.permute.xlu0 %87
    %91 = vset.pattern.permute.xlu0 0
    %92 = vperm.xlu0 %91, %v56
    %v93 = vpop.permute.xlu0 %92
    %96 = vset.pattern.permute.xlu0 0
    %97 = vperm.xlu0 %96, %v57
    %v98 = vpop.permute.xlu0 %97
    %101 = vset.pattern.permute.xlu0 0
    %102 = vperm.xlu0 %101, %v58
    %v103 = vpop.permute.xlu0 %102
    %106 = vset.pattern.permute.xlu0 0
    %107 = vperm.xlu0 %106, %v59
    %v108 = vpop.permute.xlu0 %107
    %111 = vset.pattern.permute.xlu0 0
    %112 = vperm.xlu0 %111, %v60
    %v113 = vpop.permute.xlu0 %112
    %116 = vset.pattern.permute.xlu0 0
    %117 = vperm.xlu0 %116, %v61
    %v118 = vpop.permute.xlu0 %117
    %121 = vset.pattern.permute.xlu0 0
    %122 = vperm.xlu0 %121, %v62
    %v123 = vpop.permute.xlu0 %122
    %126 = vset.pattern.permute.xlu0 0
    %127 = vperm.xlu0 %126, %v63
    %v128 = vpop.permute.xlu0 %127
    %131 = vset.pattern.permute.xlu0 0
    %132 = vperm.xlu0 %131, %v64
    %v133 = vpop.permute.xlu0 %132
    %136 = vset.pattern.permute.xlu0 0
    %137 = vperm.xlu0 %136, %v65
    %v138 = vpop.permute.xlu0 %137
    %141 = vset.pattern.permute.xlu0 0
    %142 = vperm.xlu0 %141, %v66
    %v143 = vpop.permute.xlu0 %142
    %146 = vset.pattern.permute.xlu0 0
    %147 = vperm.xlu0 %146, %v67
    %v148 = vpop.permute.xlu0 %147
    %v150 = vlaneseq
    %v151 = vshrl.u32 %v150, 7
    %v152 = vsub.s32 0, %v151
    %v153 = vrot.slane %v68, %v152
    %v154 = vmul.f32 %v73, %v153
    %v155 = vmul.f32 %v78, %v153
    %v156 = vmul.f32 %v83, %v153
    %v157 = vmul.f32 %v88, %v153
    %v158 = vmul.f32 %v93, %v153
    %v159 = vmul.f32 %v98, %v153
    %v160 = vmul.f32 %v103, %v153
    %v161 = vmul.f32 %v108, %v153
    %v162 = vmul.f32 %v113, %v153
    %v163 = vmul.f32 %v118, %v153
    %v164 = vmul.f32 %v123, %v153
    %v165 = vmul.f32 %v128, %v153
    %v166 = vmul.f32 %v133, %v153
    %v167 = vmul.f32 %v138, %v153
    %v168 = vmul.f32 %v143, %v153
    %v169 = vmul.f32 %v148, %v153
    %170 = vset.pattern.permute.xlu0 1
    %171 = vperm.xlu0 %170, %v52
    %v172 = vpop.permute.xlu0 %171
    %174 = vset.pattern.permute.xlu0 1
    %175 = vperm.xlu0 %174, %v53
    %v176 = vpop.permute.xlu0 %175
    %178 = vset.pattern.permute.xlu0 1
    %179 = vperm.xlu0 %178, %v54
    %v180 = vpop.permute.xlu0 %179
    %182 = vset.pattern.permute.xlu0 1
    %183 = vperm.xlu0 %182, %v55
    %v184 = vpop.permute.xlu0 %183
    %186 = vset.pattern.permute.xlu0 1
    %187 = vperm.xlu0 %186, %v56
    %v188 = vpop.permute.xlu0 %187
    %190 = vset.pattern.permute.xlu0 1
    %191 = vperm.xlu0 %190, %v57
    %v192 = vpop.permute.xlu0 %191
    %194 = vset.pattern.permute.xlu0 1
    %195 = vperm.xlu0 %194, %v58
    %v196 = vpop.permute.xlu0 %195
    %198 = vset.pattern.permute.xlu0 1
    %199 = vperm.xlu0 %198, %v59
    %v200 = vpop.permute.xlu0 %199
    %202 = vset.pattern.permute.xlu0 1
    %203 = vperm.xlu0 %202, %v60
    %v204 = vpop.permute.xlu0 %203
    %206 = vset.pattern.permute.xlu0 1
    %207 = vperm.xlu0 %206, %v61
    %v208 = vpop.permute.xlu0 %207
    %210 = vset.pattern.permute.xlu0 1
    %211 = vperm.xlu0 %210, %v62
    %v212 = vpop.permute.xlu0 %211
    %214 = vset.pattern.permute.xlu0 1
    %215 = vperm.xlu0 %214, %v63
    %v216 = vpop.permute.xlu0 %215
    %218 = vset.pattern.permute.xlu0 1
    %219 = vperm.xlu0 %218, %v64
    %v220 = vpop.permute.xlu0 %219
    %222 = vset.pattern.permute.xlu0 1
    %223 = vperm.xlu0 %222, %v65
    %v224 = vpop.permute.xlu0 %223
    %226 = vset.pattern.permute.xlu0 1
    %227 = vperm.xlu0 %226, %v66
    %v228 = vpop.permute.xlu0 %227
    %230 = vset.pattern.permute.xlu0 1
    %231 = vperm.xlu0 %230, %v67
    %v232 = vpop.permute.xlu0 %231
    %v234 = vlaneseq
    %v235 = vshrl.u32 %v234, 7
    %v236 = vsub.s32 1, %v235
    %v237 = vrot.slane %v68, %v236
    %v238 = vmul.f32 %v172, %v237
    %v239 = vmul.f32 %v176, %v237
    %v240 = vmul.f32 %v180, %v237
    %v241 = vmul.f32 %v184, %v237
    %v242 = vmul.f32 %v188, %v237
    %v243 = vmul.f32 %v192, %v237
    %v244 = vmul.f32 %v196, %v237
    %v245 = vmul.f32 %v200, %v237
    %v246 = vmul.f32 %v204, %v237
    %v247 = vmul.f32 %v208, %v237
    %v248 = vmul.f32 %v212, %v237
    %v249 = vmul.f32 %v216, %v237
    %v250 = vmul.f32 %v220, %v237
    %v251 = vmul.f32 %v224, %v237
    %v252 = vmul.f32 %v228, %v237
    %v253 = vmul.f32 %v232, %v237
    %v254 = vadd.f32 %v154, %v238
    %v255 = vadd.f32 %v155, %v239
    %v256 = vadd.f32 %v156, %v240
    %v257 = vadd.f32 %v157, %v241
    %v258 = vadd.f32 %v158, %v242
    %v259 = vadd.f32 %v159, %v243
    %v260 = vadd.f32 %v160, %v244
    %v261 = vadd.f32 %v161, %v245
    %v262 = vadd.f32 %v162, %v246
    %v263 = vadd.f32 %v163, %v247
    %v264 = vadd.f32 %v164, %v248
    %v265 = vadd.f32 %v165, %v249
    %v266 = vadd.f32 %v166, %v250
    %v267 = vadd.f32 %v167, %v251
    %v268 = vadd.f32 %v168, %v252
    %v269 = vadd.f32 %v169, %v253
    %v270 = vlaneseq
    %v271 = vshrl.u32 %v270, 7
    %v272 = vsub.s32 2, %v271
    %v273 = vrot.slane %v68, %v272
    %v274 = vmul.f32 %v73, %v273
    %v275 = vmul.f32 %v78, %v273
    %v276 = vmul.f32 %v83, %v273
    %v277 = vmul.f32 %v88, %v273
    %v278 = vmul.f32 %v93, %v273
    %v279 = vmul.f32 %v98, %v273
    %v280 = vmul.f32 %v103, %v273
    %v281 = vmul.f32 %v108, %v273
    %v282 = vmul.f32 %v113, %v273
    %v283 = vmul.f32 %v118, %v273
    %v284 = vmul.f32 %v123, %v273
    %v285 = vmul.f32 %v128, %v273
    %v286 = vmul.f32 %v133, %v273
    %v287 = vmul.f32 %v138, %v273
    %v288 = vmul.f32 %v143, %v273
    %v289 = vmul.f32 %v148, %v273
    %vm306 = vcmask 1046528
    %v307 = vrot.slane %v274, 1
    %v308 = vrot.slane %v275, 1
    %v309 = vsel %vm306, %v307, %v308
    %v310 = vrot.slane %v276, 1
    %v311 = vsel %vm306, %v308, %v310
    %v312 = vrot.slane %v277, 1
    %v313 = vsel %vm306, %v310, %v312
    %v314 = vrot.slane %v278, 1
    %v315 = vsel %vm306, %v312, %v314
    %v316 = vrot.slane %v279, 1
    %v317 = vsel %vm306, %v314, %v316
    %v318 = vrot.slane %v280, 1
    %v319 = vsel %vm306, %v316, %v318
    %v320 = vrot.slane %v281, 1
    %v321 = vsel %vm306, %v318, %v320
    %v322 = vrot.slane %v282, 1
    %v323 = vrot.slane %v283, 1
    %v324 = vsel %vm306, %v322, %v323
    %v325 = vrot.slane %v284, 1
    %v326 = vsel %vm306, %v323, %v325
    %v327 = vrot.slane %v285, 1
    %v328 = vsel %vm306, %v325, %v327
    %v329 = vrot.slane %v286, 1
    %v330 = vsel %vm306, %v327, %v329
    %v331 = vrot.slane %v287, 1
    %v332 = vsel %vm306, %v329, %v331
    %v333 = vrot.slane %v288, 1
    %v334 = vsel %vm306, %v331, %v333
    %v335 = vrot.slane %v289, 1
    %v336 = vsel %vm306, %v333, %v335
    %v353 = vadd.f32 %v254, %v309
    %v354 = vadd.f32 %v255, %v311
    %v355 = vadd.f32 %v256, %v313
    %v356 = vadd.f32 %v257, %v315
    %v357 = vadd.f32 %v258, %v317
    %v358 = vadd.f32 %v259, %v319
    %v359 = vadd.f32 %v260, %v321
    %v360 = vadd.f32 %v261, %v320
    %v361 = vadd.f32 %v262, %v324
    %v362 = vadd.f32 %v263, %v326
    %v363 = vadd.f32 %v264, %v328
    %v364 = vadd.f32 %v265, %v330
    %v365 = vadd.f32 %v266, %v332
    %v366 = vadd.f32 %v267, %v334
    %v367 = vadd.f32 %v268, %v336
    %v368 = vadd.f32 %v269, %v335
    %v369 = vlaneseq
    %v370 = vshrl.u32 %v369, 7
    %v371 = vsub.s32 3, %v370
    %v372 = vrot.slane %v68, %v371
    %v373 = vmul.f32 %v172, %v372
    %v374 = vmul.f32 %v176, %v372
    %v375 = vmul.f32 %v180, %v372
    %v376 = vmul.f32 %v184, %v372
    %v377 = vmul.f32 %v188, %v372
    %v378 = vmul.f32 %v192, %v372
    %v379 = vmul.f32 %v196, %v372
    %v380 = vmul.f32 %v200, %v372
    %v381 = vmul.f32 %v204, %v372
    %v382 = vmul.f32 %v208, %v372
    %v383 = vmul.f32 %v212, %v372
    %v384 = vmul.f32 %v216, %v372
    %v385 = vmul.f32 %v220, %v372
    %v386 = vmul.f32 %v224, %v372
    %v387 = vmul.f32 %v228, %v372
    %v388 = vmul.f32 %v232, %v372
    %v405 = vrot.slane %v373, 1
    %v406 = vrot.slane %v374, 1
    %v407 = vsel %vm306, %v405, %v406
    %v408 = vrot.slane %v375, 1
    %v409 = vsel %vm306, %v406, %v408
    %v410 = vrot.slane %v376, 1
    %v411 = vsel %vm306, %v408, %v410
    %v412 = vrot.slane %v377, 1
    %v413 = vsel %vm306, %v410, %v412
    %v414 = vrot.slane %v378, 1
    %v415 = vsel %vm306, %v412, %v414
    %v416 = vrot.slane %v379, 1
    %v417 = vsel %vm306, %v414, %v416
    %v418 = vrot.slane %v380, 1
    %v419 = vsel %vm306, %v416, %v418
    %v420 = vrot.slane %v381, 1
    %v421 = vrot.slane %v382, 1
    %v422 = vsel %vm306, %v420, %v421
    %v423 = vrot.slane %v383, 1
    %v424 = vsel %vm306, %v421, %v423
    %v425 = vrot.slane %v384, 1
    %v426 = vsel %vm306, %v423, %v425
    %v427 = vrot.slane %v385, 1
    %v428 = vsel %vm306, %v425, %v427
    %v429 = vrot.slane %v386, 1
    %v430 = vsel %vm306, %v427, %v429
    %v431 = vrot.slane %v387, 1
    %v432 = vsel %vm306, %v429, %v431
    %v433 = vrot.slane %v388, 1
    %v434 = vsel %vm306, %v431, %v433
    %v451 = vadd.f32 %v353, %v407
    %v452 = vadd.f32 %v354, %v409
    %v453 = vadd.f32 %v355, %v411
    %v454 = vadd.f32 %v356, %v413
    %v455 = vadd.f32 %v357, %v415
    %v456 = vadd.f32 %v358, %v417
    %v457 = vadd.f32 %v359, %v419
    %v458 = vadd.f32 %v360, %v418
    %v459 = vadd.f32 %v361, %v422
    %v460 = vadd.f32 %v362, %v424
    %v461 = vadd.f32 %v363, %v426
    %v462 = vadd.f32 %v364, %v428
    %v463 = vadd.f32 %v365, %v430
    %v464 = vadd.f32 %v366, %v432
    %v465 = vadd.f32 %v367, %v434
    %v466 = vadd.f32 %v368, %v433
    %v467 = vlaneseq
    %v468 = vshrl.u32 %v467, 7
    %v469 = vsub.s32 4, %v468
    %v470 = vrot.slane %v68, %v469
    %v471 = vmul.f32 %v73, %v470
    %v472 = vmul.f32 %v78, %v470
    %v473 = vmul.f32 %v83, %v470
    %v474 = vmul.f32 %v88, %v470
    %v475 = vmul.f32 %v93, %v470
    %v476 = vmul.f32 %v98, %v470
    %v477 = vmul.f32 %v103, %v470
    %v478 = vmul.f32 %v108, %v470
    %v479 = vmul.f32 %v113, %v470
    %v480 = vmul.f32 %v118, %v470
    %v481 = vmul.f32 %v123, %v470
    %v482 = vmul.f32 %v128, %v470
    %v483 = vmul.f32 %v133, %v470
    %v484 = vmul.f32 %v138, %v470
    %v485 = vmul.f32 %v143, %v470
    %v486 = vmul.f32 %v148, %v470
    %vm503 = vcmask 1045504
    %v504 = vrot.slane %v471, 2
    %v505 = vrot.slane %v472, 2
    %v506 = vsel %vm503, %v504, %v505
    %v507 = vrot.slane %v473, 2
    %v508 = vsel %vm503, %v505, %v507
    %v509 = vrot.slane %v474, 2
    %v510 = vsel %vm503, %v507, %v509
    %v511 = vrot.slane %v475, 2
    %v512 = vsel %vm503, %v509, %v511
    %v513 = vrot.slane %v476, 2
    %v514 = vsel %vm503, %v511, %v513
    %v515 = vrot.slane %v477, 2
    %v516 = vsel %vm503, %v513, %v515
    %v517 = vrot.slane %v478, 2
    %v518 = vsel %vm503, %v515, %v517
    %v519 = vrot.slane %v479, 2
    %v520 = vrot.slane %v480, 2
    %v521 = vsel %vm503, %v519, %v520
    %v522 = vrot.slane %v481, 2
    %v523 = vsel %vm503, %v520, %v522
    %v524 = vrot.slane %v482, 2
    %v525 = vsel %vm503, %v522, %v524
    %v526 = vrot.slane %v483, 2
    %v527 = vsel %vm503, %v524, %v526
    %v528 = vrot.slane %v484, 2
    %v529 = vsel %vm503, %v526, %v528
    %v530 = vrot.slane %v485, 2
    %v531 = vsel %vm503, %v528, %v530
    %v532 = vrot.slane %v486, 2
    %v533 = vsel %vm503, %v530, %v532
    %v550 = vadd.f32 %v451, %v506
    %v551 = vadd.f32 %v452, %v508
    %v552 = vadd.f32 %v453, %v510
    %v553 = vadd.f32 %v454, %v512
    %v554 = vadd.f32 %v455, %v514
    %v555 = vadd.f32 %v456, %v516
    %v556 = vadd.f32 %v457, %v518
    %v557 = vadd.f32 %v458, %v517
    %v558 = vadd.f32 %v459, %v521
    %v559 = vadd.f32 %v460, %v523
    %v560 = vadd.f32 %v461, %v525
    %v561 = vadd.f32 %v462, %v527
    %v562 = vadd.f32 %v463, %v529
    %v563 = vadd.f32 %v464, %v531
    %v564 = vadd.f32 %v465, %v533
    %v565 = vadd.f32 %v466, %v532
    %v566 = vlaneseq
    %v567 = vshrl.u32 %v566, 7
    %v568 = vsub.s32 5, %v567
    %v569 = vrot.slane %v68, %v568
    %v570 = vmul.f32 %v172, %v569
    %v571 = vmul.f32 %v176, %v569
    %v572 = vmul.f32 %v180, %v569
    %v573 = vmul.f32 %v184, %v569
    %v574 = vmul.f32 %v188, %v569
    %v575 = vmul.f32 %v192, %v569
    %v576 = vmul.f32 %v196, %v569
    %v577 = vmul.f32 %v200, %v569
    %v578 = vmul.f32 %v204, %v569
    %v579 = vmul.f32 %v208, %v569
    %v580 = vmul.f32 %v212, %v569
    %v581 = vmul.f32 %v216, %v569
    %v582 = vmul.f32 %v220, %v569
    %v583 = vmul.f32 %v224, %v569
    %v584 = vmul.f32 %v228, %v569
    %v585 = vmul.f32 %v232, %v569
    %v602 = vrot.slane %v570, 2
    %v603 = vrot.slane %v571, 2
    %v604 = vsel %vm503, %v602, %v603
    %v605 = vrot.slane %v572, 2
    %v606 = vsel %vm503, %v603, %v605
    %v607 = vrot.slane %v573, 2
    %v608 = vsel %vm503, %v605, %v607
    %v609 = vrot.slane %v574, 2
    %v610 = vsel %vm503, %v607, %v609
    %v611 = vrot.slane %v575, 2
    %v612 = vsel %vm503, %v609, %v611
    %v613 = vrot.slane %v576, 2
    %v614 = vsel %vm503, %v611, %v613
    %v615 = vrot.slane %v577, 2
    %v616 = vsel %vm503, %v613, %v615
    %v617 = vrot.slane %v578, 2
    %v618 = vrot.slane %v579, 2
    %v619 = vsel %vm503, %v617, %v618
    %v620 = vrot.slane %v580, 2
    %v621 = vsel %vm503, %v618, %v620
    %v622 = vrot.slane %v581, 2
    %v623 = vsel %vm503, %v620, %v622
    %v624 = vrot.slane %v582, 2
    %v625 = vsel %vm503, %v622, %v624
    %v626 = vrot.slane %v583, 2
    %v627 = vsel %vm503, %v624, %v626
    %v628 = vrot.slane %v584, 2
    %v629 = vsel %vm503, %v626, %v628
    %v630 = vrot.slane %v585, 2
    %v631 = vsel %vm503, %v628, %v630
    %v648 = vadd.f32 %v550, %v604
    %v649 = vadd.f32 %v551, %v606
    %v650 = vadd.f32 %v552, %v608
    %v651 = vadd.f32 %v553, %v610
    %v652 = vadd.f32 %v554, %v612
    %v653 = vadd.f32 %v555, %v614
    %v654 = vadd.f32 %v556, %v616
    %v655 = vadd.f32 %v557, %v615
    %v656 = vadd.f32 %v558, %v619
    %v657 = vadd.f32 %v559, %v621
    %v658 = vadd.f32 %v560, %v623
    %v659 = vadd.f32 %v561, %v625
    %v660 = vadd.f32 %v562, %v627
    %v661 = vadd.f32 %v563, %v629
    %v662 = vadd.f32 %v564, %v631
    %v663 = vadd.f32 %v565, %v630
    %v664 = vlaneseq
    %v665 = vshrl.u32 %v664, 7
    %v666 = vsub.s32 6, %v665
    %v667 = vrot.slane %v68, %v666
    %v668 = vmul.f32 %v73, %v667
    %v669 = vmul.f32 %v78, %v667
    %v670 = vmul.f32 %v83, %v667
    %v671 = vmul.f32 %v88, %v667
    %v672 = vmul.f32 %v93, %v667
    %v673 = vmul.f32 %v98, %v667
    %v674 = vmul.f32 %v103, %v667
    %v675 = vmul.f32 %v108, %v667
    %v676 = vmul.f32 %v113, %v667
    %v677 = vmul.f32 %v118, %v667
    %v678 = vmul.f32 %v123, %v667
    %v679 = vmul.f32 %v128, %v667
    %v680 = vmul.f32 %v133, %v667
    %v681 = vmul.f32 %v138, %v667
    %v682 = vmul.f32 %v143, %v667
    %v683 = vmul.f32 %v148, %v667
    %vm700 = vcmask 1044480
    %v701 = vrot.slane %v668, 3
    %v702 = vrot.slane %v669, 3
    %v703 = vsel %vm700, %v701, %v702
    %v704 = vrot.slane %v670, 3
    %v705 = vsel %vm700, %v702, %v704
    %v706 = vrot.slane %v671, 3
    %v707 = vsel %vm700, %v704, %v706
    %v708 = vrot.slane %v672, 3
    %v709 = vsel %vm700, %v706, %v708
    %v710 = vrot.slane %v673, 3
    %v711 = vsel %vm700, %v708, %v710
    %v712 = vrot.slane %v674, 3
    %v713 = vsel %vm700, %v710, %v712
    %v714 = vrot.slane %v675, 3
    %v715 = vsel %vm700, %v712, %v714
    %v716 = vrot.slane %v676, 3
    %v717 = vrot.slane %v677, 3
    %v718 = vsel %vm700, %v716, %v717
    %v719 = vrot.slane %v678, 3
    %v720 = vsel %vm700, %v717, %v719
    %v721 = vrot.slane %v679, 3
    %v722 = vsel %vm700, %v719, %v721
    %v723 = vrot.slane %v680, 3
    %v724 = vsel %vm700, %v721, %v723
    %v725 = vrot.slane %v681, 3
    %v726 = vsel %vm700, %v723, %v725
    %v727 = vrot.slane %v682, 3
    %v728 = vsel %vm700, %v725, %v727
    %v729 = vrot.slane %v683, 3
    %v730 = vsel %vm700, %v727, %v729
    %v747 = vadd.f32 %v648, %v703
    %v748 = vadd.f32 %v649, %v705
    %v749 = vadd.f32 %v650, %v707
    %v750 = vadd.f32 %v651, %v709
    %v751 = vadd.f32 %v652, %v711
    %v752 = vadd.f32 %v653, %v713
    %v753 = vadd.f32 %v654, %v715
    %v754 = vadd.f32 %v655, %v714
    %v755 = vadd.f32 %v656, %v718
    %v756 = vadd.f32 %v657, %v720
    %v757 = vadd.f32 %v658, %v722
    %v758 = vadd.f32 %v659, %v724
    %v759 = vadd.f32 %v660, %v726
    %v760 = vadd.f32 %v661, %v728
    %v761 = vadd.f32 %v662, %v730
    %v762 = vadd.f32 %v663, %v729
    %v763 = vlaneseq
    %v764 = vshrl.u32 %v763, 7
    %v765 = vsub.s32 7, %v764
    %v766 = vrot.slane %v68, %v765
    %v767 = vmul.f32 %v172, %v766
    %v768 = vmul.f32 %v176, %v766
    %v769 = vmul.f32 %v180, %v766
    %v770 = vmul.f32 %v184, %v766
    %v771 = vmul.f32 %v188, %v766
    %v772 = vmul.f32 %v192, %v766
    %v773 = vmul.f32 %v196, %v766
    %v774 = vmul.f32 %v200, %v766
    %v775 = vmul.f32 %v204, %v766
    %v776 = vmul.f32 %v208, %v766
    %v777 = vmul.f32 %v212, %v766
    %v778 = vmul.f32 %v216, %v766
    %v779 = vmul.f32 %v220, %v766
    %v780 = vmul.f32 %v224, %v766
    %v781 = vmul.f32 %v228, %v766
    %v782 = vmul.f32 %v232, %v766
    %v799 = vrot.slane %v767, 3
    %v800 = vrot.slane %v768, 3
    %v801 = vsel %vm700, %v799, %v800
    %v802 = vrot.slane %v769, 3
    %v803 = vsel %vm700, %v800, %v802
    %v804 = vrot.slane %v770, 3
    %v805 = vsel %vm700, %v802, %v804
    %v806 = vrot.slane %v771, 3
    %v807 = vsel %vm700, %v804, %v806
    %v808 = vrot.slane %v772, 3
    %v809 = vsel %vm700, %v806, %v808
    %v810 = vrot.slane %v773, 3
    %v811 = vsel %vm700, %v808, %v810
    %v812 = vrot.slane %v774, 3
    %v813 = vsel %vm700, %v810, %v812
    %v814 = vrot.slane %v775, 3
    %v815 = vrot.slane %v776, 3
    %v816 = vsel %vm700, %v814, %v815
    %v817 = vrot.slane %v777, 3
    %v818 = vsel %vm700, %v815, %v817
    %v819 = vrot.slane %v778, 3
    %v820 = vsel %vm700, %v817, %v819
    %v821 = vrot.slane %v779, 3
    %v822 = vsel %vm700, %v819, %v821
    %v823 = vrot.slane %v780, 3
    %v824 = vsel %vm700, %v821, %v823
    %v825 = vrot.slane %v781, 3
    %v826 = vsel %vm700, %v823, %v825
    %v827 = vrot.slane %v782, 3
    %v828 = vsel %vm700, %v825, %v827
    %v845 = vadd.f32 %v747, %v801
    %v846 = vadd.f32 %v748, %v803
    %v847 = vadd.f32 %v749, %v805
    %v848 = vadd.f32 %v750, %v807
    %v849 = vadd.f32 %v751, %v809
    %v850 = vadd.f32 %v752, %v811
    %v851 = vadd.f32 %v753, %v813
    %v852 = vadd.f32 %v754, %v812
    %v853 = vadd.f32 %v755, %v816
    %v854 = vadd.f32 %v756, %v818
    %v855 = vadd.f32 %v757, %v820
    %v856 = vadd.f32 %v758, %v822
    %v857 = vadd.f32 %v759, %v824
    %v858 = vadd.f32 %v760, %v826
    %v859 = vadd.f32 %v761, %v828
    %v860 = vadd.f32 %v762, %v827
    %v861 = vlaneseq
    %v862 = vshrl.u32 %v861, 7
    %v863 = vsub.s32 0, %v862
    %v864 = vrot.slane %v69, %v863
    %v865 = vmul.f32 %v73, %v864
    %v866 = vmul.f32 %v78, %v864
    %v867 = vmul.f32 %v83, %v864
    %v868 = vmul.f32 %v88, %v864
    %v869 = vmul.f32 %v93, %v864
    %v870 = vmul.f32 %v98, %v864
    %v871 = vmul.f32 %v103, %v864
    %v872 = vmul.f32 %v108, %v864
    %v873 = vmul.f32 %v113, %v864
    %v874 = vmul.f32 %v118, %v864
    %v875 = vmul.f32 %v123, %v864
    %v876 = vmul.f32 %v128, %v864
    %v877 = vmul.f32 %v133, %v864
    %v878 = vmul.f32 %v138, %v864
    %v879 = vmul.f32 %v143, %v864
    %v880 = vmul.f32 %v148, %v864
    %vm897 = vcmask 1043456
    %v898 = vrot.slane %v865, 4
    %v899 = vrot.slane %v866, 4
    %v900 = vsel %vm897, %v898, %v899
    %v901 = vrot.slane %v867, 4
    %v902 = vsel %vm897, %v899, %v901
    %v903 = vrot.slane %v868, 4
    %v904 = vsel %vm897, %v901, %v903
    %v905 = vrot.slane %v869, 4
    %v906 = vsel %vm897, %v903, %v905
    %v907 = vrot.slane %v870, 4
    %v908 = vsel %vm897, %v905, %v907
    %v909 = vrot.slane %v871, 4
    %v910 = vsel %vm897, %v907, %v909
    %v911 = vrot.slane %v872, 4
    %v912 = vsel %vm897, %v909, %v911
    %v913 = vrot.slane %v873, 4
    %v914 = vrot.slane %v874, 4
    %v915 = vsel %vm897, %v913, %v914
    %v916 = vrot.slane %v875, 4
    %v917 = vsel %vm897, %v914, %v916
    %v918 = vrot.slane %v876, 4
    %v919 = vsel %vm897, %v916, %v918
    %v920 = vrot.slane %v877, 4
    %v921 = vsel %vm897, %v918, %v920
    %v922 = vrot.slane %v878, 4
    %v923 = vsel %vm897, %v920, %v922
    %v924 = vrot.slane %v879, 4
    %v925 = vsel %vm897, %v922, %v924
    %v926 = vrot.slane %v880, 4
    %v927 = vsel %vm897, %v924, %v926
    %v944 = vadd.f32 %v845, %v900
    %v945 = vadd.f32 %v846, %v902
    %v946 = vadd.f32 %v847, %v904
    %v947 = vadd.f32 %v848, %v906
    %v948 = vadd.f32 %v849, %v908
    %v949 = vadd.f32 %v850, %v910
    %v950 = vadd.f32 %v851, %v912
    %v951 = vadd.f32 %v852, %v911
    %v952 = vadd.f32 %v853, %v915
    %v953 = vadd.f32 %v854, %v917
    %v954 = vadd.f32 %v855, %v919
    %v955 = vadd.f32 %v856, %v921
    %v956 = vadd.f32 %v857, %v923
    %v957 = vadd.f32 %v858, %v925
    %v958 = vadd.f32 %v859, %v927
    %v959 = vadd.f32 %v860, %v926
    %v960 = vlaneseq
    %v961 = vshrl.u32 %v960, 7
    %v962 = vsub.s32 1, %v961
    %v963 = vrot.slane %v69, %v962
    %v964 = vmul.f32 %v172, %v963
    %v965 = vmul.f32 %v176, %v963
    %v966 = vmul.f32 %v180, %v963
    %v967 = vmul.f32 %v184, %v963
    %v968 = vmul.f32 %v188, %v963
    %v969 = vmul.f32 %v192, %v963
    %v970 = vmul.f32 %v196, %v963
    %v971 = vmul.f32 %v200, %v963
    %v972 = vmul.f32 %v204, %v963
    %v973 = vmul.f32 %v208, %v963
    %v974 = vmul.f32 %v212, %v963
    %v975 = vmul.f32 %v216, %v963
    %v976 = vmul.f32 %v220, %v963
    %v977 = vmul.f32 %v224, %v963
    %v978 = vmul.f32 %v228, %v963
    %v979 = vmul.f32 %v232, %v963
    %v996 = vrot.slane %v964, 4
    %v997 = vrot.slane %v965, 4
    %v998 = vsel %vm897, %v996, %v997
    %v999 = vrot.slane %v966, 4
    %v1000 = vsel %vm897, %v997, %v999
    %v1001 = vrot.slane %v967, 4
    %v1002 = vsel %vm897, %v999, %v1001
    %v1003 = vrot.slane %v968, 4
    %v1004 = vsel %vm897, %v1001, %v1003
    %v1005 = vrot.slane %v969, 4
    %v1006 = vsel %vm897, %v1003, %v1005
    %v1007 = vrot.slane %v970, 4
    %v1008 = vsel %vm897, %v1005, %v1007
    %v1009 = vrot.slane %v971, 4
    %v1010 = vsel %vm897, %v1007, %v1009
    %v1011 = vrot.slane %v972, 4
    %v1012 = vrot.slane %v973, 4
    %v1013 = vsel %vm897, %v1011, %v1012
    %v1014 = vrot.slane %v974, 4
    %v1015 = vsel %vm897, %v1012, %v1014
    %v1016 = vrot.slane %v975, 4
    %v1017 = vsel %vm897, %v1014, %v1016
    %v1018 = vrot.slane %v976, 4
    %v1019 = vsel %vm897, %v1016, %v1018
    %v1020 = vrot.slane %v977, 4
    %v1021 = vsel %vm897, %v1018, %v1020
    %v1022 = vrot.slane %v978, 4
    %v1023 = vsel %vm897, %v1020, %v1022
    %v1024 = vrot.slane %v979, 4
    %v1025 = vsel %vm897, %v1022, %v1024
    %v1042 = vadd.f32 %v944, %v998
    %v1043 = vadd.f32 %v945, %v1000
    %v1044 = vadd.f32 %v946, %v1002
    %v1045 = vadd.f32 %v947, %v1004
    %v1046 = vadd.f32 %v948, %v1006
    %v1047 = vadd.f32 %v949, %v1008
    %v1048 = vadd.f32 %v950, %v1010
    %v1049 = vadd.f32 %v951, %v1009
    %v1050 = vadd.f32 %v952, %v1013
    %v1051 = vadd.f32 %v953, %v1015
    %v1052 = vadd.f32 %v954, %v1017
    %v1053 = vadd.f32 %v955, %v1019
    %v1054 = vadd.f32 %v956, %v1021
    %v1055 = vadd.f32 %v957, %v1023
    %v1056 = vadd.f32 %v958, %v1025
    %v1057 = vadd.f32 %v959, %v1024
    %v1058 = vlaneseq
    %v1059 = vshrl.u32 %v1058, 7
    %v1060 = vsub.s32 2, %v1059
    %v1061 = vrot.slane %v69, %v1060
    %v1062 = vmul.f32 %v73, %v1061
    %v1063 = vmul.f32 %v78, %v1061
    %v1064 = vmul.f32 %v83, %v1061
    %v1065 = vmul.f32 %v88, %v1061
    %v1066 = vmul.f32 %v93, %v1061
    %v1067 = vmul.f32 %v98, %v1061
    %v1068 = vmul.f32 %v103, %v1061
    %v1069 = vmul.f32 %v108, %v1061
    %v1070 = vmul.f32 %v113, %v1061
    %v1071 = vmul.f32 %v118, %v1061
    %v1072 = vmul.f32 %v123, %v1061
    %v1073 = vmul.f32 %v128, %v1061
    %v1074 = vmul.f32 %v133, %v1061
    %v1075 = vmul.f32 %v138, %v1061
    %v1076 = vmul.f32 %v143, %v1061
    %v1077 = vmul.f32 %v148, %v1061
    %vm1094 = vcmask 1042432
    %v1095 = vrot.slane %v1062, 5
    %v1096 = vrot.slane %v1063, 5
    %v1097 = vsel %vm1094, %v1095, %v1096
    %v1098 = vrot.slane %v1064, 5
    %v1099 = vsel %vm1094, %v1096, %v1098
    %v1100 = vrot.slane %v1065, 5
    %v1101 = vsel %vm1094, %v1098, %v1100
    %v1102 = vrot.slane %v1066, 5
    %v1103 = vsel %vm1094, %v1100, %v1102
    %v1104 = vrot.slane %v1067, 5
    %v1105 = vsel %vm1094, %v1102, %v1104
    %v1106 = vrot.slane %v1068, 5
    %v1107 = vsel %vm1094, %v1104, %v1106
    %v1108 = vrot.slane %v1069, 5
    %v1109 = vsel %vm1094, %v1106, %v1108
    %v1110 = vrot.slane %v1070, 5
    %v1111 = vrot.slane %v1071, 5
    %v1112 = vsel %vm1094, %v1110, %v1111
    %v1113 = vrot.slane %v1072, 5
    %v1114 = vsel %vm1094, %v1111, %v1113
    %v1115 = vrot.slane %v1073, 5
    %v1116 = vsel %vm1094, %v1113, %v1115
    %v1117 = vrot.slane %v1074, 5
    %v1118 = vsel %vm1094, %v1115, %v1117
    %v1119 = vrot.slane %v1075, 5
    %v1120 = vsel %vm1094, %v1117, %v1119
    %v1121 = vrot.slane %v1076, 5
    %v1122 = vsel %vm1094, %v1119, %v1121
    %v1123 = vrot.slane %v1077, 5
    %v1124 = vsel %vm1094, %v1121, %v1123
    %v1141 = vadd.f32 %v1042, %v1097
    %v1142 = vadd.f32 %v1043, %v1099
    %v1143 = vadd.f32 %v1044, %v1101
    %v1144 = vadd.f32 %v1045, %v1103
    %v1145 = vadd.f32 %v1046, %v1105
    %v1146 = vadd.f32 %v1047, %v1107
    %v1147 = vadd.f32 %v1048, %v1109
    %v1148 = vadd.f32 %v1049, %v1108
    %v1149 = vadd.f32 %v1050, %v1112
    %v1150 = vadd.f32 %v1051, %v1114
    %v1151 = vadd.f32 %v1052, %v1116
    %v1152 = vadd.f32 %v1053, %v1118
    %v1153 = vadd.f32 %v1054, %v1120
    %v1154 = vadd.f32 %v1055, %v1122
    %v1155 = vadd.f32 %v1056, %v1124
    %v1156 = vadd.f32 %v1057, %v1123
    %v1157 = vlaneseq
    %v1158 = vshrl.u32 %v1157, 7
    %v1159 = vsub.s32 3, %v1158
    %v1160 = vrot.slane %v69, %v1159
    %v1161 = vmul.f32 %v172, %v1160
    %v1162 = vmul.f32 %v176, %v1160
    %v1163 = vmul.f32 %v180, %v1160
    %v1164 = vmul.f32 %v184, %v1160
    %v1165 = vmul.f32 %v188, %v1160
    %v1166 = vmul.f32 %v192, %v1160
    %v1167 = vmul.f32 %v196, %v1160
    %v1168 = vmul.f32 %v200, %v1160
    %v1169 = vmul.f32 %v204, %v1160
    %v1170 = vmul.f32 %v208, %v1160
    %v1171 = vmul.f32 %v212, %v1160
    %v1172 = vmul.f32 %v216, %v1160
    %v1173 = vmul.f32 %v220, %v1160
    %v1174 = vmul.f32 %v224, %v1160
    %v1175 = vmul.f32 %v228, %v1160
    %v1176 = vmul.f32 %v232, %v1160
    %v1193 = vrot.slane %v1161, 5
    %v1194 = vrot.slane %v1162, 5
    %v1195 = vsel %vm1094, %v1193, %v1194
    %v1196 = vrot.slane %v1163, 5
    %v1197 = vsel %vm1094, %v1194, %v1196
    %v1198 = vrot.slane %v1164, 5
    %v1199 = vsel %vm1094, %v1196, %v1198
    %v1200 = vrot.slane %v1165, 5
    %v1201 = vsel %vm1094, %v1198, %v1200
    %v1202 = vrot.slane %v1166, 5
    %v1203 = vsel %vm1094, %v1200, %v1202
    %v1204 = vrot.slane %v1167, 5
    %v1205 = vsel %vm1094, %v1202, %v1204
    %v1206 = vrot.slane %v1168, 5
    %v1207 = vsel %vm1094, %v1204, %v1206
    %v1208 = vrot.slane %v1169, 5
    %v1209 = vrot.slane %v1170, 5
    %v1210 = vsel %vm1094, %v1208, %v1209
    %v1211 = vrot.slane %v1171, 5
    %v1212 = vsel %vm1094, %v1209, %v1211
    %v1213 = vrot.slane %v1172, 5
    %v1214 = vsel %vm1094, %v1211, %v1213
    %v1215 = vrot.slane %v1173, 5
    %v1216 = vsel %vm1094, %v1213, %v1215
    %v1217 = vrot.slane %v1174, 5
    %v1218 = vsel %vm1094, %v1215, %v1217
    %v1219 = vrot.slane %v1175, 5
    %v1220 = vsel %vm1094, %v1217, %v1219
    %v1221 = vrot.slane %v1176, 5
    %v1222 = vsel %vm1094, %v1219, %v1221
    %v1239 = vadd.f32 %v1141, %v1195
    %v1240 = vadd.f32 %v1142, %v1197
    %v1241 = vadd.f32 %v1143, %v1199
    %v1242 = vadd.f32 %v1144, %v1201
    %v1243 = vadd.f32 %v1145, %v1203
    %v1244 = vadd.f32 %v1146, %v1205
    %v1245 = vadd.f32 %v1147, %v1207
    %v1246 = vadd.f32 %v1148, %v1206
    %v1247 = vadd.f32 %v1149, %v1210
    %v1248 = vadd.f32 %v1150, %v1212
    %v1249 = vadd.f32 %v1151, %v1214
    %v1250 = vadd.f32 %v1152, %v1216
    %v1251 = vadd.f32 %v1153, %v1218
    %v1252 = vadd.f32 %v1154, %v1220
    %v1253 = vadd.f32 %v1155, %v1222
    %v1254 = vadd.f32 %v1156, %v1221
    %v1255 = vlaneseq
    %v1256 = vshrl.u32 %v1255, 7
    %v1257 = vsub.s32 4, %v1256
    %v1258 = vrot.slane %v69, %v1257
    %v1259 = vmul.f32 %v73, %v1258
    %v1260 = vmul.f32 %v78, %v1258
    %v1261 = vmul.f32 %v83, %v1258
    %v1262 = vmul.f32 %v88, %v1258
    %v1263 = vmul.f32 %v93, %v1258
    %v1264 = vmul.f32 %v98, %v1258
    %v1265 = vmul.f32 %v103, %v1258
    %v1266 = vmul.f32 %v108, %v1258
    %v1267 = vmul.f32 %v113, %v1258
    %v1268 = vmul.f32 %v118, %v1258
    %v1269 = vmul.f32 %v123, %v1258
    %v1270 = vmul.f32 %v128, %v1258
    %v1271 = vmul.f32 %v133, %v1258
    %v1272 = vmul.f32 %v138, %v1258
    %v1273 = vmul.f32 %v143, %v1258
    %v1274 = vmul.f32 %v148, %v1258
    %vm1291 = vcmask 1041408
    %v1292 = vrot.slane %v1259, 6
    %v1293 = vrot.slane %v1260, 6
    %v1294 = vsel %vm1291, %v1292, %v1293
    %v1295 = vrot.slane %v1261, 6
    %v1296 = vsel %vm1291, %v1293, %v1295
    %v1297 = vrot.slane %v1262, 6
    %v1298 = vsel %vm1291, %v1295, %v1297
    %v1299 = vrot.slane %v1263, 6
    %v1300 = vsel %vm1291, %v1297, %v1299
    %v1301 = vrot.slane %v1264, 6
    %v1302 = vsel %vm1291, %v1299, %v1301
    %v1303 = vrot.slane %v1265, 6
    %v1304 = vsel %vm1291, %v1301, %v1303
    %v1305 = vrot.slane %v1266, 6
    %v1306 = vsel %vm1291, %v1303, %v1305
    %v1307 = vrot.slane %v1267, 6
    %v1308 = vrot.slane %v1268, 6
    %v1309 = vsel %vm1291, %v1307, %v1308
    %v1310 = vrot.slane %v1269, 6
    %v1311 = vsel %vm1291, %v1308, %v1310
    %v1312 = vrot.slane %v1270, 6
    %v1313 = vsel %vm1291, %v1310, %v1312
    %v1314 = vrot.slane %v1271, 6
    %v1315 = vsel %vm1291, %v1312, %v1314
    %v1316 = vrot.slane %v1272, 6
    %v1317 = vsel %vm1291, %v1314, %v1316
    %v1318 = vrot.slane %v1273, 6
    %v1319 = vsel %vm1291, %v1316, %v1318
    %v1320 = vrot.slane %v1274, 6
    %v1321 = vsel %vm1291, %v1318, %v1320
    %v1338 = vadd.f32 %v1239, %v1294
    %v1339 = vadd.f32 %v1240, %v1296
    %v1340 = vadd.f32 %v1241, %v1298
    %v1341 = vadd.f32 %v1242, %v1300
    %v1342 = vadd.f32 %v1243, %v1302
    %v1343 = vadd.f32 %v1244, %v1304
    %v1344 = vadd.f32 %v1245, %v1306
    %v1345 = vadd.f32 %v1246, %v1305
    %v1346 = vadd.f32 %v1247, %v1309
    %v1347 = vadd.f32 %v1248, %v1311
    %v1348 = vadd.f32 %v1249, %v1313
    %v1349 = vadd.f32 %v1250, %v1315
    %v1350 = vadd.f32 %v1251, %v1317
    %v1351 = vadd.f32 %v1252, %v1319
    %v1352 = vadd.f32 %v1253, %v1321
    %v1353 = vadd.f32 %v1254, %v1320
    %v1354 = vlaneseq
    %v1355 = vshrl.u32 %v1354, 7
    %v1356 = vsub.s32 5, %v1355
    %v1357 = vrot.slane %v69, %v1356
    %v1358 = vmul.f32 %v172, %v1357
    %v1359 = vmul.f32 %v176, %v1357
    %v1360 = vmul.f32 %v180, %v1357
    %v1361 = vmul.f32 %v184, %v1357
    %v1362 = vmul.f32 %v188, %v1357
    %v1363 = vmul.f32 %v192, %v1357
    %v1364 = vmul.f32 %v196, %v1357
    %v1365 = vmul.f32 %v200, %v1357
    %v1366 = vmul.f32 %v204, %v1357
    %v1367 = vmul.f32 %v208, %v1357
    %v1368 = vmul.f32 %v212, %v1357
    %v1369 = vmul.f32 %v216, %v1357
    %v1370 = vmul.f32 %v220, %v1357
    %v1371 = vmul.f32 %v224, %v1357
    %v1372 = vmul.f32 %v228, %v1357
    %v1373 = vmul.f32 %v232, %v1357
    %v1390 = vrot.slane %v1358, 6
    %v1391 = vrot.slane %v1359, 6
    %v1392 = vsel %vm1291, %v1390, %v1391
    %v1393 = vrot.slane %v1360, 6
    %v1394 = vsel %vm1291, %v1391, %v1393
    %v1395 = vrot.slane %v1361, 6
    %v1396 = vsel %vm1291, %v1393, %v1395
    %v1397 = vrot.slane %v1362, 6
    %v1398 = vsel %vm1291, %v1395, %v1397
    %v1399 = vrot.slane %v1363, 6
    %v1400 = vsel %vm1291, %v1397, %v1399
    %v1401 = vrot.slane %v1364, 6
    %v1402 = vsel %vm1291, %v1399, %v1401
    %v1403 = vrot.slane %v1365, 6
    %v1404 = vsel %vm1291, %v1401, %v1403
    %v1405 = vrot.slane %v1366, 6
    %v1406 = vrot.slane %v1367, 6
    %v1407 = vsel %vm1291, %v1405, %v1406
    %v1408 = vrot.slane %v1368, 6
    %v1409 = vsel %vm1291, %v1406, %v1408
    %v1410 = vrot.slane %v1369, 6
    %v1411 = vsel %vm1291, %v1408, %v1410
    %v1412 = vrot.slane %v1370, 6
    %v1413 = vsel %vm1291, %v1410, %v1412
    %v1414 = vrot.slane %v1371, 6
    %v1415 = vsel %vm1291, %v1412, %v1414
    %v1416 = vrot.slane %v1372, 6
    %v1417 = vsel %vm1291, %v1414, %v1416
    %v1418 = vrot.slane %v1373, 6
    %v1419 = vsel %vm1291, %v1416, %v1418
    %v1436 = vadd.f32 %v1338, %v1392
    %v1437 = vadd.f32 %v1339, %v1394
    %v1438 = vadd.f32 %v1340, %v1396
    %v1439 = vadd.f32 %v1341, %v1398
    %v1440 = vadd.f32 %v1342, %v1400
    %v1441 = vadd.f32 %v1343, %v1402
    %v1442 = vadd.f32 %v1344, %v1404
    %v1443 = vadd.f32 %v1345, %v1403
    %v1444 = vadd.f32 %v1346, %v1407
    %v1445 = vadd.f32 %v1347, %v1409
    %v1446 = vadd.f32 %v1348, %v1411
    %v1447 = vadd.f32 %v1349, %v1413
    %v1448 = vadd.f32 %v1350, %v1415
    %v1449 = vadd.f32 %v1351, %v1417
    %v1450 = vadd.f32 %v1352, %v1419
    %v1451 = vadd.f32 %v1353, %v1418
    %v1468 = vcombine.high %v1436, %v1436
    %v1470 = vunpack.c.l.s4 1983009808
    %v1471 = vunpack.c.0.s8 %v1470
    %v1472 = vlaneseq
    %v1473 = vshrl.u32 %v1472, 7
    %v1474 = vsub.s32 %v1471, %v1473
    %v1475 = vrot.slane %v1436, %v1474
    %v1477 = vunpack.c.l.s4 1983009808
    %v1478 = vunpack.c.0.s8 %v1477
    %v1479 = vlaneseq
    %v1480 = vshrl.u32 %v1479, 7
    %v1481 = vsub.s32 %v1478, %v1480
    %v1482 = vrot.slane %v1468, %v1481
    %v1483 = vcombine.high %v1475, %v1475
    %v1484 = vcombine.high %v1482, %v1482
    %v1485 = vcombine.high %v1437, %v1437
    %v1487 = vunpack.c.l.s4 1983009808
    %v1488 = vunpack.c.0.s8 %v1487
    %v1489 = vlaneseq
    %v1490 = vshrl.u32 %v1489, 7
    %v1491 = vsub.s32 %v1488, %v1490
    %v1492 = vrot.slane %v1437, %v1491
    %v1494 = vunpack.c.l.s4 1983009808
    %v1495 = vunpack.c.0.s8 %v1494
    %v1496 = vlaneseq
    %v1497 = vshrl.u32 %v1496, 7
    %v1498 = vsub.s32 %v1495, %v1497
    %v1499 = vrot.slane %v1485, %v1498
    %v1500 = vcombine.high %v1492, %v1492
    %v1501 = vcombine.high %v1499, %v1499
    %v1502 = vcombine.high %v1438, %v1438
    %v1504 = vunpack.c.l.s4 1983009808
    %v1505 = vunpack.c.0.s8 %v1504
    %v1506 = vlaneseq
    %v1507 = vshrl.u32 %v1506, 7
    %v1508 = vsub.s32 %v1505, %v1507
    %v1509 = vrot.slane %v1438, %v1508
    %v1511 = vunpack.c.l.s4 1983009808
    %v1512 = vunpack.c.0.s8 %v1511
    %v1513 = vlaneseq
    %v1514 = vshrl.u32 %v1513, 7
    %v1515 = vsub.s32 %v1512, %v1514
    %v1516 = vrot.slane %v1502, %v1515
    %v1517 = vcombine.high %v1509, %v1509
    %v1518 = vcombine.high %v1516, %v1516
    %v1519 = vcombine.high %v1439, %v1439
    %v1521 = vunpack.c.l.s4 1983009808
    %v1522 = vunpack.c.0.s8 %v1521
    %v1523 = vlaneseq
    %v1524 = vshrl.u32 %v1523, 7
    %v1525 = vsub.s32 %v1522, %v1524
    %v1526 = vrot.slane %v1439, %v1525
    %v1528 = vunpack.c.l.s4 1983009808
    %v1529 = vunpack.c.0.s8 %v1528
    %v1530 = vlaneseq
    %v1531 = vshrl.u32 %v1530, 7
    %v1532 = vsub.s32 %v1529, %v1531
    %v1533 = vrot.slane %v1519, %v1532
    %v1534 = vcombine.high %v1526, %v1526
    %v1535 = vcombine.high %v1533, %v1533
    %v1536 = vcombine.high %v1440, %v1440
    %v1538 = vunpack.c.l.s4 1983009808
    %v1539 = vunpack.c.0.s8 %v1538
    %v1540 = vlaneseq
    %v1541 = vshrl.u32 %v1540, 7
    %v1542 = vsub.s32 %v1539, %v1541
    %v1543 = vrot.slane %v1440, %v1542
    %v1545 = vunpack.c.l.s4 1983009808
    %v1546 = vunpack.c.0.s8 %v1545
    %v1547 = vlaneseq
    %v1548 = vshrl.u32 %v1547, 7
    %v1549 = vsub.s32 %v1546, %v1548
    %v1550 = vrot.slane %v1536, %v1549
    %v1551 = vcombine.high %v1543, %v1543
    %v1552 = vcombine.high %v1550, %v1550
    %v1553 = vcombine.high %v1441, %v1441
    %v1555 = vunpack.c.l.s4 1983009808
    %v1556 = vunpack.c.0.s8 %v1555
    %v1557 = vlaneseq
    %v1558 = vshrl.u32 %v1557, 7
    %v1559 = vsub.s32 %v1556, %v1558
    %v1560 = vrot.slane %v1441, %v1559
    %v1562 = vunpack.c.l.s4 1983009808
    %v1563 = vunpack.c.0.s8 %v1562
    %v1564 = vlaneseq
    %v1565 = vshrl.u32 %v1564, 7
    %v1566 = vsub.s32 %v1563, %v1565
    %v1567 = vrot.slane %v1553, %v1566
    %v1568 = vcombine.high %v1560, %v1560
    %v1569 = vcombine.high %v1567, %v1567
    %v1570 = vcombine.high %v1442, %v1442
    %v1572 = vunpack.c.l.s4 1983009808
    %v1573 = vunpack.c.0.s8 %v1572
    %v1574 = vlaneseq
    %v1575 = vshrl.u32 %v1574, 7
    %v1576 = vsub.s32 %v1573, %v1575
    %v1577 = vrot.slane %v1442, %v1576
    %v1579 = vunpack.c.l.s4 1983009808
    %v1580 = vunpack.c.0.s8 %v1579
    %v1581 = vlaneseq
    %v1582 = vshrl.u32 %v1581, 7
    %v1583 = vsub.s32 %v1580, %v1582
    %v1584 = vrot.slane %v1570, %v1583
    %v1585 = vcombine.high %v1577, %v1577
    %v1586 = vcombine.high %v1584, %v1584
    %v1588 = vunpack.c.l.s4 1983009808
    %v1589 = vunpack.c.0.s8 %v1588
    %v1590 = vlaneseq
    %v1591 = vshrl.u32 %v1590, 7
    %v1592 = vsub.s32 %v1589, %v1591
    %v1593 = vrot.slane %v1443, %v1592
    %v1594 = vcombine.high %v1444, %v1444
    %v1596 = vunpack.c.l.s4 1983009808
    %v1597 = vunpack.c.0.s8 %v1596
    %v1598 = vlaneseq
    %v1599 = vshrl.u32 %v1598, 7
    %v1600 = vsub.s32 %v1597, %v1599
    %v1601 = vrot.slane %v1444, %v1600
    %v1603 = vunpack.c.l.s4 1983009808
    %v1604 = vunpack.c.0.s8 %v1603
    %v1605 = vlaneseq
    %v1606 = vshrl.u32 %v1605, 7
    %v1607 = vsub.s32 %v1604, %v1606
    %v1608 = vrot.slane %v1594, %v1607
    %v1609 = vcombine.high %v1601, %v1601
    %v1610 = vcombine.high %v1608, %v1608
    %v1611 = vcombine.high %v1445, %v1445
    %v1613 = vunpack.c.l.s4 1983009808
    %v1614 = vunpack.c.0.s8 %v1613
    %v1615 = vlaneseq
    %v1616 = vshrl.u32 %v1615, 7
    %v1617 = vsub.s32 %v1614, %v1616
    %v1618 = vrot.slane %v1445, %v1617
    %v1620 = vunpack.c.l.s4 1983009808
    %v1621 = vunpack.c.0.s8 %v1620
    %v1622 = vlaneseq
    %v1623 = vshrl.u32 %v1622, 7
    %v1624 = vsub.s32 %v1621, %v1623
    %v1625 = vrot.slane %v1611, %v1624
    %v1626 = vcombine.high %v1618, %v1618
    %v1627 = vcombine.high %v1625, %v1625
    %v1628 = vcombine.high %v1446, %v1446
    %v1630 = vunpack.c.l.s4 1983009808
    %v1631 = vunpack.c.0.s8 %v1630
    %v1632 = vlaneseq
    %v1633 = vshrl.u32 %v1632, 7
    %v1634 = vsub.s32 %v1631, %v1633
    %v1635 = vrot.slane %v1446, %v1634
    %v1637 = vunpack.c.l.s4 1983009808
    %v1638 = vunpack.c.0.s8 %v1637
    %v1639 = vlaneseq
    %v1640 = vshrl.u32 %v1639, 7
    %v1641 = vsub.s32 %v1638, %v1640
    %v1642 = vrot.slane %v1628, %v1641
    %v1643 = vcombine.high %v1635, %v1635
    %v1644 = vcombine.high %v1642, %v1642
    %v1645 = vcombine.high %v1447, %v1447
    %v1647 = vunpack.c.l.s4 1983009808
    %v1648 = vunpack.c.0.s8 %v1647
    %v1649 = vlaneseq
    %v1650 = vshrl.u32 %v1649, 7
    %v1651 = vsub.s32 %v1648, %v1650
    %v1652 = vrot.slane %v1447, %v1651
    %v1654 = vunpack.c.l.s4 1983009808
    %v1655 = vunpack.c.0.s8 %v1654
    %v1656 = vlaneseq
    %v1657 = vshrl.u32 %v1656, 7
    %v1658 = vsub.s32 %v1655, %v1657
    %v1659 = vrot.slane %v1645, %v1658
    %v1660 = vcombine.high %v1652, %v1652
    %v1661 = vcombine.high %v1659, %v1659
    %v1662 = vcombine.high %v1448, %v1448
    %v1664 = vunpack.c.l.s4 1983009808
    %v1665 = vunpack.c.0.s8 %v1664
    %v1666 = vlaneseq
    %v1667 = vshrl.u32 %v1666, 7
    %v1668 = vsub.s32 %v1665, %v1667
    %v1669 = vrot.slane %v1448, %v1668
    %v1671 = vunpack.c.l.s4 1983009808
    %v1672 = vunpack.c.0.s8 %v1671
    %v1673 = vlaneseq
    %v1674 = vshrl.u32 %v1673, 7
    %v1675 = vsub.s32 %v1672, %v1674
    %v1676 = vrot.slane %v1662, %v1675
    %v1677 = vcombine.high %v1669, %v1669
    %v1678 = vcombine.high %v1676, %v1676
    %v1679 = vcombine.high %v1449, %v1449
    %v1681 = vunpack.c.l.s4 1983009808
    %v1682 = vunpack.c.0.s8 %v1681
    %v1683 = vlaneseq
    %v1684 = vshrl.u32 %v1683, 7
    %v1685 = vsub.s32 %v1682, %v1684
    %v1686 = vrot.slane %v1449, %v1685
    %v1688 = vunpack.c.l.s4 1983009808
    %v1689 = vunpack.c.0.s8 %v1688
    %v1690 = vlaneseq
    %v1691 = vshrl.u32 %v1690, 7
    %v1692 = vsub.s32 %v1689, %v1691
    %v1693 = vrot.slane %v1679, %v1692
    %v1694 = vcombine.high %v1686, %v1686
    %v1695 = vcombine.high %v1693, %v1693
    %v1696 = vcombine.high %v1450, %v1450
    %v1698 = vunpack.c.l.s4 1983009808
    %v1699 = vunpack.c.0.s8 %v1698
    %v1700 = vlaneseq
    %v1701 = vshrl.u32 %v1700, 7
    %v1702 = vsub.s32 %v1699, %v1701
    %v1703 = vrot.slane %v1450, %v1702
    %v1705 = vunpack.c.l.s4 1983009808
    %v1706 = vunpack.c.0.s8 %v1705
    %v1707 = vlaneseq
    %v1708 = vshrl.u32 %v1707, 7
    %v1709 = vsub.s32 %v1706, %v1708
    %v1710 = vrot.slane %v1696, %v1709
    %v1711 = vcombine.high %v1703, %v1703
    %v1712 = vcombine.high %v1710, %v1710
    %v1714 = vunpack.c.l.s4 1983009808
    %v1715 = vunpack.c.0.s8 %v1714
    %v1716 = vlaneseq
    %v1717 = vshrl.u32 %v1716, 7
    %v1718 = vsub.s32 %v1715, %v1717
    %v1719 = vrot.slane %v1451, %v1718
    %v1778 = vld [vmem:[%s2] sm:$0x1]
    %v1779 = vld [vmem:[%s3] sm:$0x1]
    %v1780 = vcombine.low %v1475, %v1483
    %v1781 = vcombine.low %v1482, %v1484
    %v1783 = vunpack.c.l.s4 1983009808
    %v1784 = vunpack.c.0.s8 %v1783
    %v1785 = vlaneseq
    %v1786 = vshrl.u32 %v1785, 7
    %v1787 = vsub.s32 %v1784, %v1786
    %v1788 = vrot.slane %v1780, %v1787
    %v1790 = vunpack.c.l.s4 1983009808
    %v1791 = vunpack.c.0.s8 %v1790
    %v1792 = vlaneseq
    %v1793 = vshrl.u32 %v1792, 7
    %v1794 = vsub.s32 %v1791, %v1793
    %v1795 = vrot.slane %v1781, %v1794
    %v1796 = vcombine.low %v1788, %v1795
    %v1797 = vcombine.low %v1492, %v1500
    %v1798 = vcombine.low %v1499, %v1501
    %v1800 = vunpack.c.l.s4 1983009808
    %v1801 = vunpack.c.0.s8 %v1800
    %v1802 = vlaneseq
    %v1803 = vshrl.u32 %v1802, 7
    %v1804 = vsub.s32 %v1801, %v1803
    %v1805 = vrot.slane %v1797, %v1804
    %v1807 = vunpack.c.l.s4 1983009808
    %v1808 = vunpack.c.0.s8 %v1807
    %v1809 = vlaneseq
    %v1810 = vshrl.u32 %v1809, 7
    %v1811 = vsub.s32 %v1808, %v1810
    %v1812 = vrot.slane %v1798, %v1811
    %v1813 = vcombine.low %v1805, %v1812
    %v1814 = vcombine.low %v1509, %v1517
    %v1815 = vcombine.low %v1516, %v1518
    %v1817 = vunpack.c.l.s4 1983009808
    %v1818 = vunpack.c.0.s8 %v1817
    %v1819 = vlaneseq
    %v1820 = vshrl.u32 %v1819, 7
    %v1821 = vsub.s32 %v1818, %v1820
    %v1822 = vrot.slane %v1814, %v1821
    %v1824 = vunpack.c.l.s4 1983009808
    %v1825 = vunpack.c.0.s8 %v1824
    %v1826 = vlaneseq
    %v1827 = vshrl.u32 %v1826, 7
    %v1828 = vsub.s32 %v1825, %v1827
    %v1829 = vrot.slane %v1815, %v1828
    %v1830 = vcombine.low %v1822, %v1829
    %v1831 = vcombine.low %v1526, %v1534
    %v1832 = vcombine.low %v1533, %v1535
    %v1834 = vunpack.c.l.s4 1983009808
    %v1835 = vunpack.c.0.s8 %v1834
    %v1836 = vlaneseq
    %v1837 = vshrl.u32 %v1836, 7
    %v1838 = vsub.s32 %v1835, %v1837
    %v1839 = vrot.slane %v1831, %v1838
    %v1841 = vunpack.c.l.s4 1983009808
    %v1842 = vunpack.c.0.s8 %v1841
    %v1843 = vlaneseq
    %v1844 = vshrl.u32 %v1843, 7
    %v1845 = vsub.s32 %v1842, %v1844
    %v1846 = vrot.slane %v1832, %v1845
    %v1847 = vcombine.low %v1839, %v1846
    %v1848 = vcombine.low %v1543, %v1551
    %v1849 = vcombine.low %v1550, %v1552
    %v1851 = vunpack.c.l.s4 1983009808
    %v1852 = vunpack.c.0.s8 %v1851
    %v1853 = vlaneseq
    %v1854 = vshrl.u32 %v1853, 7
    %v1855 = vsub.s32 %v1852, %v1854
    %v1856 = vrot.slane %v1848, %v1855
    %v1858 = vunpack.c.l.s4 1983009808
    %v1859 = vunpack.c.0.s8 %v1858
    %v1860 = vlaneseq
    %v1861 = vshrl.u32 %v1860, 7
    %v1862 = vsub.s32 %v1859, %v1861
    %v1863 = vrot.slane %v1849, %v1862
    %v1864 = vcombine.low %v1856, %v1863
    %v1865 = vcombine.low %v1560, %v1568
    %v1866 = vcombine.low %v1567, %v1569
    %v1868 = vunpack.c.l.s4 1983009808
    %v1869 = vunpack.c.0.s8 %v1868
    %v1870 = vlaneseq
    %v1871 = vshrl.u32 %v1870, 7
    %v1872 = vsub.s32 %v1869, %v1871
    %v1873 = vrot.slane %v1865, %v1872
    %v1875 = vunpack.c.l.s4 1983009808
    %v1876 = vunpack.c.0.s8 %v1875
    %v1877 = vlaneseq
    %v1878 = vshrl.u32 %v1877, 7
    %v1879 = vsub.s32 %v1876, %v1878
    %v1880 = vrot.slane %v1866, %v1879
    %v1881 = vcombine.low %v1873, %v1880
    %v1882 = vcombine.low %v1577, %v1585
    %v1883 = vcombine.low %v1584, %v1586
    %v1885 = vunpack.c.l.s4 1983009808
    %v1886 = vunpack.c.0.s8 %v1885
    %v1887 = vlaneseq
    %v1888 = vshrl.u32 %v1887, 7
    %v1889 = vsub.s32 %v1886, %v1888
    %v1890 = vrot.slane %v1882, %v1889
    %v1892 = vunpack.c.l.s4 1983009808
    %v1893 = vunpack.c.0.s8 %v1892
    %v1894 = vlaneseq
    %v1895 = vshrl.u32 %v1894, 7
    %v1896 = vsub.s32 %v1893, %v1895
    %v1897 = vrot.slane %v1883, %v1896
    %v1898 = vcombine.low %v1890, %v1897
    %v1899 = vcombine.low %v1593, %v1601
    %v1900 = vcombine.low %v1609, %v1608
    %v1902 = vunpack.c.l.s4 1983009808
    %v1903 = vunpack.c.0.s8 %v1902
    %v1904 = vlaneseq
    %v1905 = vshrl.u32 %v1904, 7
    %v1906 = vsub.s32 %v1903, %v1905
    %v1907 = vrot.slane %v1899, %v1906
    %v1909 = vunpack.c.l.s4 1983009808
    %v1910 = vunpack.c.0.s8 %v1909
    %v1911 = vlaneseq
    %v1912 = vshrl.u32 %v1911, 7
    %v1913 = vsub.s32 %v1910, %v1912
    %v1914 = vrot.slane %v1900, %v1913
    %v1915 = vcombine.low %v1907, %v1914
    %v1916 = vcombine.low %v1610, %v1618
    %v1917 = vcombine.low %v1626, %v1625
    %v1919 = vunpack.c.l.s4 1983009808
    %v1920 = vunpack.c.0.s8 %v1919
    %v1921 = vlaneseq
    %v1922 = vshrl.u32 %v1921, 7
    %v1923 = vsub.s32 %v1920, %v1922
    %v1924 = vrot.slane %v1916, %v1923
    %v1926 = vunpack.c.l.s4 1983009808
    %v1927 = vunpack.c.0.s8 %v1926
    %v1928 = vlaneseq
    %v1929 = vshrl.u32 %v1928, 7
    %v1930 = vsub.s32 %v1927, %v1929
    %v1931 = vrot.slane %v1917, %v1930
    %v1932 = vcombine.low %v1924, %v1931
    %v1933 = vcombine.low %v1627, %v1635
    %v1934 = vcombine.low %v1643, %v1642
    %v1936 = vunpack.c.l.s4 1983009808
    %v1937 = vunpack.c.0.s8 %v1936
    %v1938 = vlaneseq
    %v1939 = vshrl.u32 %v1938, 7
    %v1940 = vsub.s32 %v1937, %v1939
    %v1941 = vrot.slane %v1933, %v1940
    %v1943 = vunpack.c.l.s4 1983009808
    %v1944 = vunpack.c.0.s8 %v1943
    %v1945 = vlaneseq
    %v1946 = vshrl.u32 %v1945, 7
    %v1947 = vsub.s32 %v1944, %v1946
    %v1948 = vrot.slane %v1934, %v1947
    %v1949 = vcombine.low %v1941, %v1948
    %v1950 = vcombine.low %v1644, %v1652
    %v1951 = vcombine.low %v1660, %v1659
    %v1953 = vunpack.c.l.s4 1983009808
    %v1954 = vunpack.c.0.s8 %v1953
    %v1955 = vlaneseq
    %v1956 = vshrl.u32 %v1955, 7
    %v1957 = vsub.s32 %v1954, %v1956
    %v1958 = vrot.slane %v1950, %v1957
    %v1960 = vunpack.c.l.s4 1983009808
    %v1961 = vunpack.c.0.s8 %v1960
    %v1962 = vlaneseq
    %v1963 = vshrl.u32 %v1962, 7
    %v1964 = vsub.s32 %v1961, %v1963
    %v1965 = vrot.slane %v1951, %v1964
    %v1966 = vcombine.low %v1958, %v1965
    %v1967 = vcombine.low %v1661, %v1669
    %v1968 = vcombine.low %v1677, %v1676
    %v1970 = vunpack.c.l.s4 1983009808
    %v1971 = vunpack.c.0.s8 %v1970
    %v1972 = vlaneseq
    %v1973 = vshrl.u32 %v1972, 7
    %v1974 = vsub.s32 %v1971, %v1973
    %v1975 = vrot.slane %v1967, %v1974
    %v1977 = vunpack.c.l.s4 1983009808
    %v1978 = vunpack.c.0.s8 %v1977
    %v1979 = vlaneseq
    %v1980 = vshrl.u32 %v1979, 7
    %v1981 = vsub.s32 %v1978, %v1980
    %v1982 = vrot.slane %v1968, %v1981
    %v1983 = vcombine.low %v1975, %v1982
    %v1984 = vcombine.low %v1678, %v1686
    %v1985 = vcombine.low %v1694, %v1693
    %v1987 = vunpack.c.l.s4 1983009808
    %v1988 = vunpack.c.0.s8 %v1987
    %v1989 = vlaneseq
    %v1990 = vshrl.u32 %v1989, 7
    %v1991 = vsub.s32 %v1988, %v1990
    %v1992 = vrot.slane %v1984, %v1991
    %v1994 = vunpack.c.l.s4 1983009808
    %v1995 = vunpack.c.0.s8 %v1994
    %v1996 = vlaneseq
    %v1997 = vshrl.u32 %v1996, 7
    %v1998 = vsub.s32 %v1995, %v1997
    %v1999 = vrot.slane %v1985, %v1998
    %v2000 = vcombine.low %v1992, %v1999
    %v2001 = vcombine.low %v1695, %v1703
    %v2002 = vcombine.low %v1711, %v1710
    %v2004 = vunpack.c.l.s4 1983009808
    %v2005 = vunpack.c.0.s8 %v2004
    %v2006 = vlaneseq
    %v2007 = vshrl.u32 %v2006, 7
    %v2008 = vsub.s32 %v2005, %v2007
    %v2009 = vrot.slane %v2001, %v2008
    %v2011 = vunpack.c.l.s4 1983009808
    %v2012 = vunpack.c.0.s8 %v2011
    %v2013 = vlaneseq
    %v2014 = vshrl.u32 %v2013, 7
    %v2015 = vsub.s32 %v2012, %v2014
    %v2016 = vrot.slane %v2002, %v2015
    %v2017 = vcombine.low %v2009, %v2016
    %v2018 = vcombine.low %v1712, %v1719
    %v2020 = vunpack.c.l.s4 1983009808
    %v2021 = vunpack.c.0.s8 %v2020
    %v2022 = vlaneseq
    %v2023 = vshrl.u32 %v2022, 7
    %v2024 = vsub.s32 %v2021, %v2023
    %v2025 = vrot.slane %v2018, %v2024
    %vm2041 = vcmask 130048
    %v2042 = vsel %vm2041, %v1796, 0.0
    %v2043 = vsel %vm2041, %v1813, 0.0
    %v2044 = vadd.f32 %v2042, %v2043
    %v2045 = vsel %vm2041, %v1830, 0.0
    %v2046 = vadd.f32 %v2044, %v2045
    %v2047 = vsel %vm2041, %v1847, 0.0
    %v2048 = vadd.f32 %v2046, %v2047
    %v2049 = vsel %vm2041, %v1864, 0.0
    %v2050 = vadd.f32 %v2048, %v2049
    %v2051 = vsel %vm2041, %v1881, 0.0
    %v2052 = vadd.f32 %v2050, %v2051
    %v2053 = vsel %vm2041, %v1898, 0.0
    %v2054 = vadd.f32 %v2052, %v2053
    %v2055 = vsel %vm2041, %v1915, 0.0
    %v2056 = vadd.f32 %v2054, %v2055
    %v2057 = vsel %vm2041, %v1932, 0.0
    %v2058 = vadd.f32 %v2056, %v2057
    %v2059 = vsel %vm2041, %v1949, 0.0
    %v2060 = vadd.f32 %v2058, %v2059
    %v2061 = vsel %vm2041, %v1966, 0.0
    %v2062 = vadd.f32 %v2060, %v2061
    %v2063 = vsel %vm2041, %v1983, 0.0
    %v2064 = vadd.f32 %v2062, %v2063
    %v2065 = vsel %vm2041, %v2000, 0.0
    %v2066 = vadd.f32 %v2064, %v2065
    %v2067 = vsel %vm2041, %v2017, 0.0
    %v2068 = vadd.f32 %v2066, %v2067
    %vm2069 = vcmask 125952
    %v2070 = vsel %vm2069, %v2025, 0.0
    %v2071 = vadd.f32 %v2068, %v2070
    %v2072 = vrot.slane %v2071, 4
    %v2073 = vadd.f32 %v2071, %v2072
    %v2074 = vrot.slane %v2073, 2
    %v2075 = vadd.f32 %v2073, %v2074
    %v2076 = vrot.slane %v2075, 1
    %v2077 = vadd.f32 %v2075, %v2076
    %v2078 = vmul.f32 %v1475, %v1475
    %v2079 = vmul.f32 %v1483, %v1483
    %v2080 = vmul.f32 %v1482, %v1482
    %v2081 = vmul.f32 %v1484, %v1484
    %v2082 = vmul.f32 %v1492, %v1492
    %v2083 = vmul.f32 %v1500, %v1500
    %v2084 = vmul.f32 %v1499, %v1499
    %v2085 = vmul.f32 %v1501, %v1501
    %v2086 = vmul.f32 %v1509, %v1509
    %v2087 = vmul.f32 %v1517, %v1517
    %v2088 = vmul.f32 %v1516, %v1516
    %v2089 = vmul.f32 %v1518, %v1518
    %v2090 = vmul.f32 %v1526, %v1526
    %v2091 = vmul.f32 %v1534, %v1534
    %v2092 = vmul.f32 %v1533, %v1533
    %v2093 = vmul.f32 %v1535, %v1535
    %v2094 = vmul.f32 %v1543, %v1543
    %v2095 = vmul.f32 %v1551, %v1551
    %v2096 = vmul.f32 %v1550, %v1550
    %v2097 = vmul.f32 %v1552, %v1552
    %v2098 = vmul.f32 %v1560, %v1560
    %v2099 = vmul.f32 %v1568, %v1568
    %v2100 = vmul.f32 %v1567, %v1567
    %v2101 = vmul.f32 %v1569, %v1569
    %v2102 = vmul.f32 %v1577, %v1577
    %v2103 = vmul.f32 %v1585, %v1585
    %v2104 = vmul.f32 %v1584, %v1584
    %v2105 = vmul.f32 %v1586, %v1586
    %v2106 = vmul.f32 %v1593, %v1593
    %v2107 = vmul.f32 %v1601, %v1601
    %v2108 = vmul.f32 %v1609, %v1609
    %v2109 = vmul.f32 %v1608, %v1608
    %v2110 = vmul.f32 %v1610, %v1610
    %v2111 = vmul.f32 %v1618, %v1618
    %v2112 = vmul.f32 %v1626, %v1626
    %v2113 = vmul.f32 %v1625, %v1625
    %v2114 = vmul.f32 %v1627, %v1627
    %v2115 = vmul.f32 %v1635, %v1635
    %v2116 = vmul.f32 %v1643, %v1643
    %v2117 = vmul.f32 %v1642, %v1642
    %v2118 = vmul.f32 %v1644, %v1644
    %v2119 = vmul.f32 %v1652, %v1652
    %v2120 = vmul.f32 %v1660, %v1660
    %v2121 = vmul.f32 %v1659, %v1659
    %v2122 = vmul.f32 %v1661, %v1661
    %v2123 = vmul.f32 %v1669, %v1669
    %v2124 = vmul.f32 %v1677, %v1677
    %v2125 = vmul.f32 %v1676, %v1676
    %v2126 = vmul.f32 %v1678, %v1678
    %v2127 = vmul.f32 %v1686, %v1686
    %v2128 = vmul.f32 %v1694, %v1694
    %v2129 = vmul.f32 %v1693, %v1693
    %v2130 = vmul.f32 %v1695, %v1695
    %v2131 = vmul.f32 %v1703, %v1703
    %v2132 = vmul.f32 %v1711, %v1711
    %v2133 = vmul.f32 %v1710, %v1710
    %v2134 = vmul.f32 %v1712, %v1712
    %v2135 = vmul.f32 %v1719, %v1719
    %v2194 = vcombine.low %v2078, %v2079
    %v2195 = vcombine.low %v2080, %v2081
    %v2197 = vunpack.c.l.s4 1983009808
    %v2198 = vunpack.c.0.s8 %v2197
    %v2199 = vlaneseq
    %v2200 = vshrl.u32 %v2199, 7
    %v2201 = vsub.s32 %v2198, %v2200
    %v2202 = vrot.slane %v2194, %v2201
    %v2204 = vunpack.c.l.s4 1983009808
    %v2205 = vunpack.c.0.s8 %v2204
    %v2206 = vlaneseq
    %v2207 = vshrl.u32 %v2206, 7
    %v2208 = vsub.s32 %v2205, %v2207
    %v2209 = vrot.slane %v2195, %v2208
    %v2210 = vcombine.low %v2202, %v2209
    %v2211 = vcombine.low %v2082, %v2083
    %v2212 = vcombine.low %v2084, %v2085
    %v2214 = vunpack.c.l.s4 1983009808
    %v2215 = vunpack.c.0.s8 %v2214
    %v2216 = vlaneseq
    %v2217 = vshrl.u32 %v2216, 7
    %v2218 = vsub.s32 %v2215, %v2217
    %v2219 = vrot.slane %v2211, %v2218
    %v2221 = vunpack.c.l.s4 1983009808
    %v2222 = vunpack.c.0.s8 %v2221
    %v2223 = vlaneseq
    %v2224 = vshrl.u32 %v2223, 7
    %v2225 = vsub.s32 %v2222, %v2224
    %v2226 = vrot.slane %v2212, %v2225
    %v2227 = vcombine.low %v2219, %v2226
    %v2228 = vcombine.low %v2086, %v2087
    %v2229 = vcombine.low %v2088, %v2089
    %v2231 = vunpack.c.l.s4 1983009808
    %v2232 = vunpack.c.0.s8 %v2231
    %v2233 = vlaneseq
    %v2234 = vshrl.u32 %v2233, 7
    %v2235 = vsub.s32 %v2232, %v2234
    %v2236 = vrot.slane %v2228, %v2235
    %v2238 = vunpack.c.l.s4 1983009808
    %v2239 = vunpack.c.0.s8 %v2238
    %v2240 = vlaneseq
    %v2241 = vshrl.u32 %v2240, 7
    %v2242 = vsub.s32 %v2239, %v2241
    %v2243 = vrot.slane %v2229, %v2242
    %v2244 = vcombine.low %v2236, %v2243
    %v2245 = vcombine.low %v2090, %v2091
    %v2246 = vcombine.low %v2092, %v2093
    %v2248 = vunpack.c.l.s4 1983009808
    %v2249 = vunpack.c.0.s8 %v2248
    %v2250 = vlaneseq
    %v2251 = vshrl.u32 %v2250, 7
    %v2252 = vsub.s32 %v2249, %v2251
    %v2253 = vrot.slane %v2245, %v2252
    %v2255 = vunpack.c.l.s4 1983009808
    %v2256 = vunpack.c.0.s8 %v2255
    %v2257 = vlaneseq
    %v2258 = vshrl.u32 %v2257, 7
    %v2259 = vsub.s32 %v2256, %v2258
    %v2260 = vrot.slane %v2246, %v2259
    %v2261 = vcombine.low %v2253, %v2260
    %v2262 = vcombine.low %v2094, %v2095
    %v2263 = vcombine.low %v2096, %v2097
    %v2265 = vunpack.c.l.s4 1983009808
    %v2266 = vunpack.c.0.s8 %v2265
    %v2267 = vlaneseq
    %v2268 = vshrl.u32 %v2267, 7
    %v2269 = vsub.s32 %v2266, %v2268
    %v2270 = vrot.slane %v2262, %v2269
    %v2272 = vunpack.c.l.s4 1983009808
    %v2273 = vunpack.c.0.s8 %v2272
    %v2274 = vlaneseq
    %v2275 = vshrl.u32 %v2274, 7
    %v2276 = vsub.s32 %v2273, %v2275
    %v2277 = vrot.slane %v2263, %v2276
    %v2278 = vcombine.low %v2270, %v2277
    %v2279 = vcombine.low %v2098, %v2099
    %v2280 = vcombine.low %v2100, %v2101
    %v2282 = vunpack.c.l.s4 1983009808
    %v2283 = vunpack.c.0.s8 %v2282
    %v2284 = vlaneseq
    %v2285 = vshrl.u32 %v2284, 7
    %v2286 = vsub.s32 %v2283, %v2285
    %v2287 = vrot.slane %v2279, %v2286
    %v2289 = vunpack.c.l.s4 1983009808
    %v2290 = vunpack.c.0.s8 %v2289
    %v2291 = vlaneseq
    %v2292 = vshrl.u32 %v2291, 7
    %v2293 = vsub.s32 %v2290, %v2292
    %v2294 = vrot.slane %v2280, %v2293
    %v2295 = vcombine.low %v2287, %v2294
    %v2296 = vcombine.low %v2102, %v2103
    %v2297 = vcombine.low %v2104, %v2105
    %v2299 = vunpack.c.l.s4 1983009808
    %v2300 = vunpack.c.0.s8 %v2299
    %v2301 = vlaneseq
    %v2302 = vshrl.u32 %v2301, 7
    %v2303 = vsub.s32 %v2300, %v2302
    %v2304 = vrot.slane %v2296, %v2303
    %v2306 = vunpack.c.l.s4 1983009808
    %v2307 = vunpack.c.0.s8 %v2306
    %v2308 = vlaneseq
    %v2309 = vshrl.u32 %v2308, 7
    %v2310 = vsub.s32 %v2307, %v2309
    %v2311 = vrot.slane %v2297, %v2310
    %v2312 = vcombine.low %v2304, %v2311
    %v2313 = vcombine.low %v2106, %v2107
    %v2314 = vcombine.low %v2108, %v2109
    %v2316 = vunpack.c.l.s4 1983009808
    %v2317 = vunpack.c.0.s8 %v2316
    %v2318 = vlaneseq
    %v2319 = vshrl.u32 %v2318, 7
    %v2320 = vsub.s32 %v2317, %v2319
    %v2321 = vrot.slane %v2313, %v2320
    %v2323 = vunpack.c.l.s4 1983009808
    %v2324 = vunpack.c.0.s8 %v2323
    %v2325 = vlaneseq
    %v2326 = vshrl.u32 %v2325, 7
    %v2327 = vsub.s32 %v2324, %v2326
    %v2328 = vrot.slane %v2314, %v2327
    %v2329 = vcombine.low %v2321, %v2328
    %v2330 = vcombine.low %v2110, %v2111
    %v2331 = vcombine.low %v2112, %v2113
    %v2333 = vunpack.c.l.s4 1983009808
    %v2334 = vunpack.c.0.s8 %v2333
    %v2335 = vlaneseq
    %v2336 = vshrl.u32 %v2335, 7
    %v2337 = vsub.s32 %v2334, %v2336
    %v2338 = vrot.slane %v2330, %v2337
    %v2340 = vunpack.c.l.s4 1983009808
    %v2341 = vunpack.c.0.s8 %v2340
    %v2342 = vlaneseq
    %v2343 = vshrl.u32 %v2342, 7
    %v2344 = vsub.s32 %v2341, %v2343
    %v2345 = vrot.slane %v2331, %v2344
    %v2346 = vcombine.low %v2338, %v2345
    %v2347 = vcombine.low %v2114, %v2115
    %v2348 = vcombine.low %v2116, %v2117
    %v2350 = vunpack.c.l.s4 1983009808
    %v2351 = vunpack.c.0.s8 %v2350
    %v2352 = vlaneseq
    %v2353 = vshrl.u32 %v2352, 7
    %v2354 = vsub.s32 %v2351, %v2353
    %v2355 = vrot.slane %v2347, %v2354
    %v2357 = vunpack.c.l.s4 1983009808
    %v2358 = vunpack.c.0.s8 %v2357
    %v2359 = vlaneseq
    %v2360 = vshrl.u32 %v2359, 7
    %v2361 = vsub.s32 %v2358, %v2360
    %v2362 = vrot.slane %v2348, %v2361
    %v2363 = vcombine.low %v2355, %v2362
    %v2364 = vcombine.low %v2118, %v2119
    %v2365 = vcombine.low %v2120, %v2121
    %v2367 = vunpack.c.l.s4 1983009808
    %v2368 = vunpack.c.0.s8 %v2367
    %v2369 = vlaneseq
    %v2370 = vshrl.u32 %v2369, 7
    %v2371 = vsub.s32 %v2368, %v2370
    %v2372 = vrot.slane %v2364, %v2371
    %v2374 = vunpack.c.l.s4 1983009808
    %v2375 = vunpack.c.0.s8 %v2374
    %v2376 = vlaneseq
    %v2377 = vshrl.u32 %v2376, 7
    %v2378 = vsub.s32 %v2375, %v2377
    %v2379 = vrot.slane %v2365, %v2378
    %v2380 = vcombine.low %v2372, %v2379
    %v2381 = vcombine.low %v2122, %v2123
    %v2382 = vcombine.low %v2124, %v2125
    %v2384 = vunpack.c.l.s4 1983009808
    %v2385 = vunpack.c.0.s8 %v2384
    %v2386 = vlaneseq
    %v2387 = vshrl.u32 %v2386, 7
    %v2388 = vsub.s32 %v2385, %v2387
    %v2389 = vrot.slane %v2381, %v2388
    %v2391 = vunpack.c.l.s4 1983009808
    %v2392 = vunpack.c.0.s8 %v2391
    %v2393 = vlaneseq
    %v2394 = vshrl.u32 %v2393, 7
    %v2395 = vsub.s32 %v2392, %v2394
    %v2396 = vrot.slane %v2382, %v2395
    %v2397 = vcombine.low %v2389, %v2396
    %v2398 = vcombine.low %v2126, %v2127
    %v2399 = vcombine.low %v2128, %v2129
    %v2401 = vunpack.c.l.s4 1983009808
    %v2402 = vunpack.c.0.s8 %v2401
    %v2403 = vlaneseq
    %v2404 = vshrl.u32 %v2403, 7
    %v2405 = vsub.s32 %v2402, %v2404
    %v2406 = vrot.slane %v2398, %v2405
    %v2408 = vunpack.c.l.s4 1983009808
    %v2409 = vunpack.c.0.s8 %v2408
    %v2410 = vlaneseq
    %v2411 = vshrl.u32 %v2410, 7
    %v2412 = vsub.s32 %v2409, %v2411
    %v2413 = vrot.slane %v2399, %v2412
    %v2414 = vcombine.low %v2406, %v2413
    %v2415 = vcombine.low %v2130, %v2131
    %v2416 = vcombine.low %v2132, %v2133
    %v2418 = vunpack.c.l.s4 1983009808
    %v2419 = vunpack.c.0.s8 %v2418
    %v2420 = vlaneseq
    %v2421 = vshrl.u32 %v2420, 7
    %v2422 = vsub.s32 %v2419, %v2421
    %v2423 = vrot.slane %v2415, %v2422
    %v2425 = vunpack.c.l.s4 1983009808
    %v2426 = vunpack.c.0.s8 %v2425
    %v2427 = vlaneseq
    %v2428 = vshrl.u32 %v2427, 7
    %v2429 = vsub.s32 %v2426, %v2428
    %v2430 = vrot.slane %v2416, %v2429
    %v2431 = vcombine.low %v2423, %v2430
    %v2432 = vcombine.low %v2134, %v2135
    %v2434 = vunpack.c.l.s4 1983009808
    %v2435 = vunpack.c.0.s8 %v2434
    %v2436 = vlaneseq
    %v2437 = vshrl.u32 %v2436, 7
    %v2438 = vsub.s32 %v2435, %v2437
    %v2439 = vrot.slane %v2432, %v2438
    %v2455 = vsel %vm2041, %v2210, 0.0
    %v2456 = vsel %vm2041, %v2227, 0.0
    %v2457 = vadd.f32 %v2455, %v2456
    %v2458 = vsel %vm2041, %v2244, 0.0
    %v2459 = vadd.f32 %v2457, %v2458
    %v2460 = vsel %vm2041, %v2261, 0.0
    %v2461 = vadd.f32 %v2459, %v2460
    %v2462 = vsel %vm2041, %v2278, 0.0
    %v2463 = vadd.f32 %v2461, %v2462
    %v2464 = vsel %vm2041, %v2295, 0.0
    %v2465 = vadd.f32 %v2463, %v2464
    %v2466 = vsel %vm2041, %v2312, 0.0
    %v2467 = vadd.f32 %v2465, %v2466
    %v2468 = vsel %vm2041, %v2329, 0.0
    %v2469 = vadd.f32 %v2467, %v2468
    %v2470 = vsel %vm2041, %v2346, 0.0
    %v2471 = vadd.f32 %v2469, %v2470
    %v2472 = vsel %vm2041, %v2363, 0.0
    %v2473 = vadd.f32 %v2471, %v2472
    %v2474 = vsel %vm2041, %v2380, 0.0
    %v2475 = vadd.f32 %v2473, %v2474
    %v2476 = vsel %vm2041, %v2397, 0.0
    %v2477 = vadd.f32 %v2475, %v2476
    %v2478 = vsel %vm2041, %v2414, 0.0
    %v2479 = vadd.f32 %v2477, %v2478
    %v2480 = vsel %vm2041, %v2431, 0.0
    %v2481 = vadd.f32 %v2479, %v2480
    %v2482 = vsel %vm2069, %v2439, 0.0
    %v2483 = vadd.f32 %v2481, %v2482
    %v2484 = vrot.slane %v2483, 4
    %v2485 = vadd.f32 %v2483, %v2484
    %v2486 = vrot.slane %v2485, 2
    %v2487 = vadd.f32 %v2485, %v2486
    %v2488 = vrot.slane %v2487, 1
    %v2489 = vadd.f32 %v2487, %v2488
    %v2490 = vmul.f32 %v2077, 0.00862069
    %v2491 = vmul.f32 %v2489, 0.00862069
    %v2492 = vmul.f32 %v2490, %v2490
    %v2493 = vsub.f32 %v2491, %v2492
    %v2494 = vadd.f32 %v2493, 1e-05
    %v2495 = vrsqrt.pop %v2494
    %v2496 = vmul.f32 %v1778, %v2495
    %v2497 = vmul.f32 %v2490, %v2496
    %v2498 = vsub.f32 %v1779, %v2497
    %v2500 = vlaneseq
    %v2501 = vshrl.u32 %v2500, 7
    %v2502 = vsub.s32 0, %v2501
    %v2503 = vrot.slane %v2496, %v2502
    %v2504 = vcombine.high %v2503, %v2503
    %v2506 = vunpack.c.l.s4 1983009808
    %v2507 = vunpack.c.0.s8 %v2506
    %v2508 = vlaneseq
    %v2509 = vshrl.u32 %v2508, 7
    %v2510 = vsub.s32 %v2507, %v2509
    %v2511 = vrot.slane %v2503, %v2510
    %v2513 = vunpack.c.l.s4 1983009808
    %v2514 = vunpack.c.0.s8 %v2513
    %v2515 = vlaneseq
    %v2516 = vshrl.u32 %v2515, 7
    %v2517 = vsub.s32 %v2514, %v2516
    %v2518 = vrot.slane %v2504, %v2517
    %v2519 = vcombine.high %v2511, %v2511
    %v2520 = vcombine.high %v2518, %v2518
    %v2525 = vmul.f32 %v1475, %v2511
    %v2526 = vmul.f32 %v1483, %v2519
    %v2527 = vmul.f32 %v1482, %v2518
    %v2528 = vmul.f32 %v1484, %v2520
    %v2529 = vmul.f32 %v1492, %v2511
    %v2530 = vmul.f32 %v1500, %v2519
    %v2531 = vmul.f32 %v1499, %v2518
    %v2532 = vmul.f32 %v1501, %v2520
    %v2533 = vmul.f32 %v1509, %v2511
    %v2534 = vmul.f32 %v1517, %v2519
    %v2535 = vmul.f32 %v1516, %v2518
    %v2536 = vmul.f32 %v1518, %v2520
    %v2537 = vmul.f32 %v1526, %v2511
    %v2538 = vmul.f32 %v1534, %v2519
    %v2539 = vmul.f32 %v1533, %v2518
    %v2540 = vmul.f32 %v1535, %v2520
    %v2541 = vmul.f32 %v1543, %v2511
    %v2542 = vmul.f32 %v1551, %v2519
    %v2543 = vmul.f32 %v1550, %v2518
    %v2544 = vmul.f32 %v1552, %v2520
    %v2545 = vmul.f32 %v1560, %v2511
    %v2546 = vmul.f32 %v1568, %v2519
    %v2547 = vmul.f32 %v1567, %v2518
    %v2548 = vmul.f32 %v1569, %v2520
    %v2549 = vmul.f32 %v1577, %v2511
    %v2550 = vmul.f32 %v1585, %v2519
    %v2551 = vmul.f32 %v1584, %v2518
    %v2552 = vmul.f32 %v1586, %v2520
    %v2553 = vmul.f32 %v1593, %v2511
    %v2554 = vmul.f32 %v1601, %v2519
    %v2555 = vmul.f32 %v1609, %v2518
    %v2556 = vmul.f32 %v1608, %v2520
    %v2557 = vmul.f32 %v1610, %v2511
    %v2558 = vmul.f32 %v1618, %v2519
    %v2559 = vmul.f32 %v1626, %v2518
    %v2560 = vmul.f32 %v1625, %v2520
    %v2561 = vmul.f32 %v1627, %v2511
    %v2562 = vmul.f32 %v1635, %v2519
    %v2563 = vmul.f32 %v1643, %v2518
    %v2564 = vmul.f32 %v1642, %v2520
    %v2565 = vmul.f32 %v1644, %v2511
    %v2566 = vmul.f32 %v1652, %v2519
    %v2567 = vmul.f32 %v1660, %v2518
    %v2568 = vmul.f32 %v1659, %v2520
    %v2569 = vmul.f32 %v1661, %v2511
    %v2570 = vmul.f32 %v1669, %v2519
    %v2571 = vmul.f32 %v1677, %v2518
    %v2572 = vmul.f32 %v1676, %v2520
    %v2573 = vmul.f32 %v1678, %v2511
    %v2574 = vmul.f32 %v1686, %v2519
    %v2575 = vmul.f32 %v1694, %v2518
    %v2576 = vmul.f32 %v1693, %v2520
    %v2577 = vmul.f32 %v1695, %v2511
    %v2578 = vmul.f32 %v1703, %v2519
    %v2579 = vmul.f32 %v1711, %v2518
    %v2580 = vmul.f32 %v1710, %v2520
    %v2581 = vmul.f32 %v1712, %v2511
    %v2582 = vmul.f32 %v1719, %v2519
    %v2584 = vlaneseq
    %v2585 = vshrl.u32 %v2584, 7
    %v2586 = vsub.s32 0, %v2585
    %v2587 = vrot.slane %v2498, %v2586
    %v2588 = vcombine.high %v2587, %v2587
    %v2590 = vunpack.c.l.s4 1983009808
    %v2591 = vunpack.c.0.s8 %v2590
    %v2592 = vlaneseq
    %v2593 = vshrl.u32 %v2592, 7
    %v2594 = vsub.s32 %v2591, %v2593
    %v2595 = vrot.slane %v2587, %v2594
    %v2597 = vunpack.c.l.s4 1983009808
    %v2598 = vunpack.c.0.s8 %v2597
    %v2599 = vlaneseq
    %v2600 = vshrl.u32 %v2599, 7
    %v2601 = vsub.s32 %v2598, %v2600
    %v2602 = vrot.slane %v2588, %v2601
    %v2603 = vcombine.high %v2595, %v2595
    %v2604 = vcombine.high %v2602, %v2602
    %v2609 = vadd.f32 %v2525, %v2595
    %v2610 = vadd.f32 %v2526, %v2603
    %v2611 = vadd.f32 %v2527, %v2602
    %v2612 = vadd.f32 %v2528, %v2604
    %v2613 = vadd.f32 %v2529, %v2595
    %v2614 = vadd.f32 %v2530, %v2603
    %v2615 = vadd.f32 %v2531, %v2602
    %v2616 = vadd.f32 %v2532, %v2604
    %v2617 = vadd.f32 %v2533, %v2595
    %v2618 = vadd.f32 %v2534, %v2603
    %v2619 = vadd.f32 %v2535, %v2602
    %v2620 = vadd.f32 %v2536, %v2604
    %v2621 = vadd.f32 %v2537, %v2595
    %v2622 = vadd.f32 %v2538, %v2603
    %v2623 = vadd.f32 %v2539, %v2602
    %v2624 = vadd.f32 %v2540, %v2604
    %v2625 = vadd.f32 %v2541, %v2595
    %v2626 = vadd.f32 %v2542, %v2603
    %v2627 = vadd.f32 %v2543, %v2602
    %v2628 = vadd.f32 %v2544, %v2604
    %v2629 = vadd.f32 %v2545, %v2595
    %v2630 = vadd.f32 %v2546, %v2603
    %v2631 = vadd.f32 %v2547, %v2602
    %v2632 = vadd.f32 %v2548, %v2604
    %v2633 = vadd.f32 %v2549, %v2595
    %v2634 = vadd.f32 %v2550, %v2603
    %v2635 = vadd.f32 %v2551, %v2602
    %v2636 = vadd.f32 %v2552, %v2604
    %v2637 = vadd.f32 %v2553, %v2595
    %v2638 = vadd.f32 %v2554, %v2603
    %v2639 = vadd.f32 %v2555, %v2602
    %v2640 = vadd.f32 %v2556, %v2604
    %v2641 = vadd.f32 %v2557, %v2595
    %v2642 = vadd.f32 %v2558, %v2603
    %v2643 = vadd.f32 %v2559, %v2602
    %v2644 = vadd.f32 %v2560, %v2604
    %v2645 = vadd.f32 %v2561, %v2595
    %v2646 = vadd.f32 %v2562, %v2603
    %v2647 = vadd.f32 %v2563, %v2602
    %v2648 = vadd.f32 %v2564, %v2604
    %v2649 = vadd.f32 %v2565, %v2595
    %v2650 = vadd.f32 %v2566, %v2603
    %v2651 = vadd.f32 %v2567, %v2602
    %v2652 = vadd.f32 %v2568, %v2604
    %v2653 = vadd.f32 %v2569, %v2595
    %v2654 = vadd.f32 %v2570, %v2603
    %v2655 = vadd.f32 %v2571, %v2602
    %v2656 = vadd.f32 %v2572, %v2604
    %v2657 = vadd.f32 %v2573, %v2595
    %v2658 = vadd.f32 %v2574, %v2603
    %v2659 = vadd.f32 %v2575, %v2602
    %v2660 = vadd.f32 %v2576, %v2604
    %v2661 = vadd.f32 %v2577, %v2595
    %v2662 = vadd.f32 %v2578, %v2603
    %v2663 = vadd.f32 %v2579, %v2602
    %v2664 = vadd.f32 %v2580, %v2604
    %v2665 = vadd.f32 %v2581, %v2595
    %v2666 = vadd.f32 %v2582, %v2603
    %v2667 = vmul.f32 %v2609, 0.1
    %v2668 = vmul.f32 %v2610, 0.1
    %v2669 = vmul.f32 %v2611, 0.1
    %v2670 = vmul.f32 %v2612, 0.1
    %v2671 = vmul.f32 %v2613, 0.1
    %v2672 = vmul.f32 %v2614, 0.1
    %v2673 = vmul.f32 %v2615, 0.1
    %v2674 = vmul.f32 %v2616, 0.1
    %v2675 = vmul.f32 %v2617, 0.1
    %v2676 = vmul.f32 %v2618, 0.1
    %v2677 = vmul.f32 %v2619, 0.1
    %v2678 = vmul.f32 %v2620, 0.1
    %v2679 = vmul.f32 %v2621, 0.1
    %v2680 = vmul.f32 %v2622, 0.1
    %v2681 = vmul.f32 %v2623, 0.1
    %v2682 = vmul.f32 %v2624, 0.1
    %v2683 = vmul.f32 %v2625, 0.1
    %v2684 = vmul.f32 %v2626, 0.1
    %v2685 = vmul.f32 %v2627, 0.1
    %v2686 = vmul.f32 %v2628, 0.1
    %v2687 = vmul.f32 %v2629, 0.1
    %v2688 = vmul.f32 %v2630, 0.1
    %v2689 = vmul.f32 %v2631, 0.1
    %v2690 = vmul.f32 %v2632, 0.1
    %v2691 = vmul.f32 %v2633, 0.1
    %v2692 = vmul.f32 %v2634, 0.1
    %v2693 = vmul.f32 %v2635, 0.1
    %v2694 = vmul.f32 %v2636, 0.1
    %v2695 = vmul.f32 %v2637, 0.1
    %v2696 = vmul.f32 %v2638, 0.1
    %v2697 = vmul.f32 %v2639, 0.1
    %v2698 = vmul.f32 %v2640, 0.1
    %v2699 = vmul.f32 %v2641, 0.1
    %v2700 = vmul.f32 %v2642, 0.1
    %v2701 = vmul.f32 %v2643, 0.1
    %v2702 = vmul.f32 %v2644, 0.1
    %v2703 = vmul.f32 %v2645, 0.1
    %v2704 = vmul.f32 %v2646, 0.1
    %v2705 = vmul.f32 %v2647, 0.1
    %v2706 = vmul.f32 %v2648, 0.1
    %v2707 = vmul.f32 %v2649, 0.1
    %v2708 = vmul.f32 %v2650, 0.1
    %v2709 = vmul.f32 %v2651, 0.1
    %v2710 = vmul.f32 %v2652, 0.1
    %v2711 = vmul.f32 %v2653, 0.1
    %v2712 = vmul.f32 %v2654, 0.1
    %v2713 = vmul.f32 %v2655, 0.1
    %v2714 = vmul.f32 %v2656, 0.1
    %v2715 = vmul.f32 %v2657, 0.1
    %v2716 = vmul.f32 %v2658, 0.1
    %v2717 = vmul.f32 %v2659, 0.1
    %v2718 = vmul.f32 %v2660, 0.1
    %v2719 = vmul.f32 %v2661, 0.1
    %v2720 = vmul.f32 %v2662, 0.1
    %v2721 = vmul.f32 %v2663, 0.1
    %v2722 = vmul.f32 %v2664, 0.1
    %v2723 = vmul.f32 %v2665, 0.1
    %v2724 = vmul.f32 %v2666, 0.1
    %v2725 = vmax.f32 %v2609, %v2667
    %v2726 = vmax.f32 %v2610, %v2668
    %v2727 = vmax.f32 %v2611, %v2669
    %v2728 = vmax.f32 %v2612, %v2670
    %v2729 = vmax.f32 %v2613, %v2671
    %v2730 = vmax.f32 %v2614, %v2672
    %v2731 = vmax.f32 %v2615, %v2673
    %v2732 = vmax.f32 %v2616, %v2674
    %v2733 = vmax.f32 %v2617, %v2675
    %v2734 = vmax.f32 %v2618, %v2676
    %v2735 = vmax.f32 %v2619, %v2677
    %v2736 = vmax.f32 %v2620, %v2678
    %v2737 = vmax.f32 %v2621, %v2679
    %v2738 = vmax.f32 %v2622, %v2680
    %v2739 = vmax.f32 %v2623, %v2681
    %v2740 = vmax.f32 %v2624, %v2682
    %v2741 = vmax.f32 %v2625, %v2683
    %v2742 = vmax.f32 %v2626, %v2684
    %v2743 = vmax.f32 %v2627, %v2685
    %v2744 = vmax.f32 %v2628, %v2686
    %v2745 = vmax.f32 %v2629, %v2687
    %v2746 = vmax.f32 %v2630, %v2688
    %v2747 = vmax.f32 %v2631, %v2689
    %v2748 = vmax.f32 %v2632, %v2690
    %v2749 = vmax.f32 %v2633, %v2691
    %v2750 = vmax.f32 %v2634, %v2692
    %v2751 = vmax.f32 %v2635, %v2693
    %v2752 = vmax.f32 %v2636, %v2694
    %v2753 = vmax.f32 %v2637, %v2695
    %v2754 = vmax.f32 %v2638, %v2696
    %v2755 = vmax.f32 %v2639, %v2697
    %v2756 = vmax.f32 %v2640, %v2698
    %v2757 = vmax.f32 %v2641, %v2699
    %v2758 = vmax.f32 %v2642, %v2700
    %v2759 = vmax.f32 %v2643, %v2701
    %v2760 = vmax.f32 %v2644, %v2702
    %v2761 = vmax.f32 %v2645, %v2703
    %v2762 = vmax.f32 %v2646, %v2704
    %v2763 = vmax.f32 %v2647, %v2705
    %v2764 = vmax.f32 %v2648, %v2706
    %v2765 = vmax.f32 %v2649, %v2707
    %v2766 = vmax.f32 %v2650, %v2708
    %v2767 = vmax.f32 %v2651, %v2709
    %v2768 = vmax.f32 %v2652, %v2710
    %v2769 = vmax.f32 %v2653, %v2711
    %v2770 = vmax.f32 %v2654, %v2712
    %v2771 = vmax.f32 %v2655, %v2713
    %v2772 = vmax.f32 %v2656, %v2714
    %v2773 = vmax.f32 %v2657, %v2715
    %v2774 = vmax.f32 %v2658, %v2716
    %v2775 = vmax.f32 %v2659, %v2717
    %v2776 = vmax.f32 %v2660, %v2718
    %v2777 = vmax.f32 %v2661, %v2719
    %v2778 = vmax.f32 %v2662, %v2720
    %v2779 = vmax.f32 %v2663, %v2721
    %v2780 = vmax.f32 %v2664, %v2722
    %v2781 = vmax.f32 %v2665, %v2723
    %v2782 = vmax.f32 %v2666, %v2724
    %v2783 = vld [vmem:[%s4] sm:$0xf]
    %v2784 = vld [vmem:[%s4 + $0x4] sm:$0xf]
    %v2785 = vld [vmem:[%s4 + $0x8] sm:$0xf]
    %v2786 = vld [vmem:[%s4 + $0xc] sm:$0xf]
    %v2787 = vld [vmem:[%s4 + $0x10] sm:$0xf]
    %v2788 = vld [vmem:[%s4 + $0x14] sm:$0xf]
    %v2789 = vld [vmem:[%s4 + $0x18] sm:$0xf]
    %v2790 = vld [vmem:[%s4 + $0x1c] sm:$0xf]
    %v2791 = vld [vmem:[%s4 + $0x20] sm:$0xf]
    %v2792 = vld [vmem:[%s4 + $0x24] sm:$0xf]
    %v2793 = vld [vmem:[%s4 + $0x28] sm:$0xf]
    %v2794 = vld [vmem:[%s4 + $0x2c] sm:$0xf]
    %v2795 = vld [vmem:[%s4 + $0x30] sm:$0xf]
    %v2796 = vld [vmem:[%s4 + $0x34] sm:$0xf]
    %v2797 = vpack.c.bf16 %v2725, %v2725
    %v2798 = vpack.c.bf16 %v2726, %v2726
    %v2799 = vpack.c.bf16 %v2727, %v2727
    %v2800 = vpack.c.bf16 %v2728, %v2728
    %v2801 = vpack.c.bf16 %v2729, %v2729
    %v2802 = vpack.c.bf16 %v2730, %v2730
    %v2803 = vpack.c.bf16 %v2731, %v2731
    %v2804 = vpack.c.bf16 %v2732, %v2732
    %v2805 = vpack.c.bf16 %v2733, %v2733
    %v2806 = vpack.c.bf16 %v2734, %v2734
    %v2807 = vpack.c.bf16 %v2735, %v2735
    %v2808 = vpack.c.bf16 %v2736, %v2736
    %v2809 = vpack.c.bf16 %v2737, %v2737
    %v2810 = vpack.c.bf16 %v2738, %v2738
    %v2811 = vpack.c.bf16 %v2739, %v2739
    %v2812 = vpack.c.bf16 %v2740, %v2740
    %v2813 = vpack.c.bf16 %v2741, %v2741
    %v2814 = vpack.c.bf16 %v2742, %v2742
    %v2815 = vpack.c.bf16 %v2743, %v2743
    %v2816 = vpack.c.bf16 %v2744, %v2744
    %v2817 = vpack.c.bf16 %v2745, %v2745
    %v2818 = vpack.c.bf16 %v2746, %v2746
    %v2819 = vpack.c.bf16 %v2747, %v2747
    %v2820 = vpack.c.bf16 %v2748, %v2748
    %v2821 = vpack.c.bf16 %v2749, %v2749
    %v2822 = vpack.c.bf16 %v2750, %v2750
    %v2823 = vpack.c.bf16 %v2754, %v2754
    %v2824 = vpack.c.bf16 %v2755, %v2755
    %v2825 = vpack.c.bf16 %v2756, %v2756
    %v2826 = vpack.c.bf16 %v2757, %v2757
    %v2827 = vpack.c.bf16 %v2758, %v2758
    %v2828 = vpack.c.bf16 %v2759, %v2759
    %v2829 = vpack.c.bf16 %v2760, %v2760
    %v2830 = vpack.c.bf16 %v2761, %v2761
    %v2831 = vpack.c.bf16 %v2762, %v2762
    %v2832 = vpack.c.bf16 %v2763, %v2763
    %v2833 = vpack.c.bf16 %v2764, %v2764
    %v2834 = vpack.c.bf16 %v2765, %v2765
    %v2835 = vpack.c.bf16 %v2766, %v2766
    %v2836 = vpack.c.bf16 %v2767, %v2767
    %v2837 = vpack.c.bf16 %v2768, %v2768
    %v2838 = vpack.c.bf16 %v2769, %v2769
    %v2839 = vpack.c.bf16 %v2770, %v2770
    %v2840 = vpack.c.bf16 %v2771, %v2771
    %v2841 = vpack.c.bf16 %v2772, %v2772
    %v2842 = vpack.c.bf16 %v2773, %v2773
    %v2843 = vpack.c.bf16 %v2774, %v2774
    %v2844 = vpack.c.bf16 %v2775, %v2775
    %v2845 = vpack.c.bf16 %v2776, %v2776
    %v2846 = vpack.c.bf16 %v2777, %v2777
    %v2847 = vpack.c.bf16 %v2778, %v2778
    %v2848 = vpack.c.bf16 %v2779, %v2779
    %v2901 = vunpack.c.l.b16 %v2797
    %v2902 = vunpack.c.l.b16 %v2798
    %v2903 = vunpack.c.l.b16 %v2799
    %v2904 = vunpack.c.l.b16 %v2800
    %v2905 = vunpack.c.l.b16 %v2801
    %v2906 = vunpack.c.l.b16 %v2802
    %v2907 = vunpack.c.l.b16 %v2803
    %v2908 = vunpack.c.l.b16 %v2804
    %v2909 = vunpack.c.l.b16 %v2805
    %v2910 = vunpack.c.l.b16 %v2806
    %v2911 = vunpack.c.l.b16 %v2807
    %v2912 = vunpack.c.l.b16 %v2808
    %v2913 = vunpack.c.l.b16 %v2809
    %v2914 = vunpack.c.l.b16 %v2810
    %v2915 = vunpack.c.l.b16 %v2811
    %v2916 = vunpack.c.l.b16 %v2812
    %v2917 = vunpack.c.l.b16 %v2813
    %v2918 = vunpack.c.l.b16 %v2814
    %v2919 = vunpack.c.l.b16 %v2815
    %v2920 = vunpack.c.l.b16 %v2816
    %v2921 = vunpack.c.l.b16 %v2817
    %v2922 = vunpack.c.l.b16 %v2818
    %v2923 = vunpack.c.l.b16 %v2819
    %v2924 = vunpack.c.l.b16 %v2820
    %v2925 = vunpack.c.l.b16 %v2821
    %v2926 = vunpack.c.l.b16 %v2822
    %v2927 = vunpack.c.l.b16 %v2823
    %v2928 = vunpack.c.l.b16 %v2824
    %v2929 = vunpack.c.l.b16 %v2825
    %v2930 = vunpack.c.l.b16 %v2826
    %v2931 = vunpack.c.l.b16 %v2827
    %v2932 = vunpack.c.l.b16 %v2828
    %v2933 = vunpack.c.l.b16 %v2829
    %v2934 = vunpack.c.l.b16 %v2830
    %v2935 = vunpack.c.l.b16 %v2831
    %v2936 = vunpack.c.l.b16 %v2832
    %v2937 = vunpack.c.l.b16 %v2833
    %v2938 = vunpack.c.l.b16 %v2834
    %v2939 = vunpack.c.l.b16 %v2835
    %v2940 = vunpack.c.l.b16 %v2836
    %v2941 = vunpack.c.l.b16 %v2837
    %v2942 = vunpack.c.l.b16 %v2838
    %v2943 = vunpack.c.l.b16 %v2839
    %v2944 = vunpack.c.l.b16 %v2840
    %v2945 = vunpack.c.l.b16 %v2841
    %v2946 = vunpack.c.l.b16 %v2842
    %v2947 = vunpack.c.l.b16 %v2843
    %v2948 = vunpack.c.l.b16 %v2844
    %v2949 = vunpack.c.l.b16 %v2845
    %v2950 = vunpack.c.l.b16 %v2846
    %v2951 = vunpack.c.l.b16 %v2847
    %v2952 = vunpack.c.l.b16 %v2848
    %v2953 = vrot.slane %v2901, 1
    %vm2954 = vcmask 1041409
    %v2955 = vsel %vm2954, %v2902, %v2953
    %v2956 = vrot.slane %v2903, 7
    %vm2957 = vcmask 1042434
    %v2958 = vsel %vm2957, %v2956, %v2955
    %v2959 = vrot.slane %v2904, 6
    %vm2960 = vcmask 1043459
    %v2961 = vsel %vm2960, %v2959, %v2958
    %v2962 = vrot.slane %v2905, 5
    %vm2963 = vcmask 1044484
    %v2964 = vsel %vm2963, %v2962, %v2961
    %v2965 = vrot.slane %v2906, 4
    %vm2966 = vcmask 1045509
    %v2967 = vsel %vm2966, %v2965, %v2964
    %v2968 = vrot.slane %v2907, 3
    %vm2969 = vcmask 1046534
    %v2970 = vsel %vm2969, %v2968, %v2967
    %v2971 = vrot.slane %v2908, 2
    %vm2972 = vcmask 1047559
    %v2973 = vsel %vm2972, %v2971, %v2970
    %v2974 = vrot.slane %v2909, 1
    %v2975 = vsel %vm2954, %v2910, %v2974
    %v2976 = vrot.slane %v2911, 7
    %v2977 = vsel %vm2957, %v2976, %v2975
    %v2978 = vrot.slane %v2912, 6
    %v2979 = vsel %vm2960, %v2978, %v2977
    %v2980 = vrot.slane %v2913, 5
    %v2981 = vsel %vm2963, %v2980, %v2979
    %v2982 = vrot.slane %v2914, 4
    %v2983 = vsel %vm2966, %v2982, %v2981
    %v2984 = vrot.slane %v2915, 3
    %v2985 = vsel %vm2969, %v2984, %v2983
    %v2986 = vrot.slane %v2916, 2
    %v2987 = vsel %vm2972, %v2986, %v2985
    %v2988 = vrot.slane %v2917, 1
    %v2989 = vsel %vm2954, %v2918, %v2988
    %v2990 = vrot.slane %v2919, 7
    %v2991 = vsel %vm2957, %v2990, %v2989
    %v2992 = vrot.slane %v2920, 6
    %v2993 = vsel %vm2960, %v2992, %v2991
    %v2994 = vrot.slane %v2921, 5
    %v2995 = vsel %vm2963, %v2994, %v2993
    %v2996 = vrot.slane %v2922, 4
    %v2997 = vsel %vm2966, %v2996, %v2995
    %v2998 = vrot.slane %v2923, 3
    %v2999 = vsel %vm2969, %v2998, %v2997
    %v3000 = vrot.slane %v2924, 2
    %v3001 = vsel %vm2972, %v3000, %v2999
    %v3002 = vrot.slane %v2925, 1
    %v3003 = vsel %vm2954, %v2926, %v3002
    %v3004 = vrot.slane %v2927, 7
    %v3005 = vsel %vm2957, %v3004, %v3003
    %v3006 = vrot.slane %v2928, 6
    %v3007 = vsel %vm2960, %v3006, %v3005
    %v3008 = vrot.slane %v2929, 5
    %v3009 = vsel %vm2963, %v3008, %v3007
    %v3010 = vrot.slane %v2930, 4
    %v3011 = vsel %vm2966, %v3010, %v3009
    %v3012 = vrot.slane %v2931, 3
    %v3013 = vsel %vm2969, %v3012, %v3011
    %v3014 = vrot.slane %v2932, 2
    %v3015 = vsel %vm2972, %v3014, %v3013
    %v3016 = vrot.slane %v2933, 1
    %v3017 = vsel %vm2954, %v2934, %v3016
    %v3018 = vrot.slane %v2935, 7
    %v3019 = vsel %vm2957, %v3018, %v3017
    %v3020 = vrot.slane %v2936, 6
    %v3021 = vsel %vm2960, %v3020, %v3019
    %v3022 = vrot.slane %v2937, 5
    %v3023 = vsel %vm2963, %v3022, %v3021
    %v3024 = vrot.slane %v2938, 4
    %v3025 = vsel %vm2966, %v3024, %v3023
    %v3026 = vrot.slane %v2939, 3
    %v3027 = vsel %vm2969, %v3026, %v3025
    %v3028 = vrot.slane %v2940, 2
    %v3029 = vsel %vm2972, %v3028, %v3027
    %v3030 = vrot.slane %v2941, 1
    %v3031 = vsel %vm2954, %v2942, %v3030
    %v3032 = vrot.slane %v2943, 7
    %v3033 = vsel %vm2957, %v3032, %v3031
    %v3034 = vrot.slane %v2944, 6
    %v3035 = vsel %vm2960, %v3034, %v3033
    %v3036 = vrot.slane %v2945, 5
    %v3037 = vsel %vm2963, %v3036, %v3035
    %v3038 = vrot.slane %v2946, 4
    %v3039 = vsel %vm2966, %v3038, %v3037
    %v3040 = vrot.slane %v2947, 3
    %v3041 = vsel %vm2969, %v3040, %v3039
    %v3042 = vrot.slane %v2948, 2
    %v3043 = vsel %vm2972, %v3042, %v3041
    %v3044 = vrot.slane %v2949, 1
    %v3045 = vsel %vm2954, %v2950, %v3044
    %v3046 = vrot.slane %v2951, 7
    %v3047 = vsel %vm2957, %v3046, %v3045
    %v3048 = vrot.slane %v2952, 6
    %v3049 = vsel %vm2960, %v3048, %v3047
    %v3050 = vpack.c.b16 %v2987, %v2973
    %v3051 = vpack.c.b16 %v3015, %v3001
    %v3052 = vpack.c.b16 %v3043, %v3029
    %v3053 = vpack.c.b16 %v3049, %v3049
    %v3056 = vunpack.c.l.b16 %v2785
    %v3057 = vunpack.c.l.b16 %v2786
    %v3058 = vpack.c.b16 %v3057, %v3056
    %v3061 = vsel %vm2041, %v3050, 0
    %v3064 = vsel %vm2041, %v3051, 0
    %v3067 = vsel %vm2041, %v3052, 0
    %v3070 = vsel %vm2041, %v3053, 0
    %3072 = vmatprep.subr.bf16.mxu0 0
    %3073 = vmatpush1.bf16.msra.mxu0 0
    %3074 = vmatprep.subr.bf16.mxu0 0
    %3075 = vmatpush1.bf16.msra.mxu0 0
    %3076 = vmatprep.subr.bf16.mxu0 0
    %3077 = vmatpush1.bf16.msra.mxu0 0
    %3078 = vmatprep.subr.bf16.mxu0 0
    %3079 = vmatpush1.bf16.msra.mxu0 0
    %3080 = vmatprep.subr.bf16.mxu0 0
    %3081 = vmatpush1.bf16.msra.mxu0 0
    %3082 = vmatprep.subr.bf16.mxu0 0
    %3083 = vmatpush1.bf16.msra.mxu0 0
    %3084 = vmatprep.subr.bf16.mxu0 0
    %3085 = vmatpush1.bf16.msra.mxu0 0
    %3086 = vmatprep.subr.bf16.mxu0 0
    %3087 = vmatpush1.bf16.msra.mxu0 %v3058
    %3088 = vmatprep.subr.bf16.mxu0 0
    %3089 = vmatpush2.bf16.msra.mxu0 0
    %3090 = vmatprep.subr.bf16.mxu0 0
    %3091 = vmatpush2.bf16.msra.mxu0 0
    %3092 = vmatprep.subr.bf16.mxu0 0
    %3093 = vmatpush2.bf16.msra.mxu0 0
    %3094 = vmatprep.subr.bf16.mxu0 0
    %3095 = vmatpush2.bf16.msra.mxu0 0
    %3096 = vmatprep.subr.bf16.mxu0 0
    %3097 = vmatpush2.bf16.msra.mxu0 0
    %3098 = vmatprep.subr.bf16.mxu0 0
    %3099 = vmatpush2.bf16.msra.mxu0 0
    %3100 = vmatprep.subr.bf16.mxu0 0
    %3101 = vmatpush2.bf16.msra.mxu0 0
    %3102 = vmatprep.subr.bf16.mxu0 0
    %3103 = vmatpush2.bf16.msra.mxu0 0
    %3104 = vmatprep.mubr.bf16.mxu0 0
    %3105 = vmatmul.mubr.bf16.gmra.mxu0 %v3061
    %v3106 = vpop.f32.mrf.mxu0
    %v3107 = vadd.f32 0.0, %v3106
    %v3108 = vpop.f32.mrf.mxu0
    %v3109 = vpop.f32.mrf.mxu0
    %v3110 = vadd.f32 0.0, %v3109
    %v3111 = vpop.f32.mrf.mxu0
    %3112 = vmatprep.mubr.bf16.mxu0 0
    %3113 = vmatmul.mubr.bf16.gmra.mxu0 %v3064
    %v3114 = vpop.f32.mrf.mxu0
    %v3115 = vadd.f32 0.0, %v3114
    %v3116 = vpop.f32.mrf.mxu0
    %v3117 = vpop.f32.mrf.mxu0
    %v3118 = vadd.f32 0.0, %v3117
    %v3119 = vpop.f32.mrf.mxu0
    %3120 = vmatprep.mubr.bf16.mxu0 0
    %3121 = vmatmul.mubr.bf16.gmra.mxu0 %v3067
    %v3122 = vpop.f32.mrf.mxu0
    %v3123 = vadd.f32 0.0, %v3122
    %v3124 = vpop.f32.mrf.mxu0
    %v3125 = vpop.f32.mrf.mxu0
    %v3126 = vadd.f32 0.0, %v3125
    %v3127 = vpop.f32.mrf.mxu0
    %3128 = vmatprep.mubr.bf16.mxu0 0
    %3129 = vmatmul.mubr.bf16.gmra.mxu0 %v3070
    %v3130 = vpop.f32.mrf.mxu0
    %v3131 = vadd.f32 0.0, %v3130
    %v3132 = vpop.f32.mrf.mxu0
    %v3133 = vpop.f32.mrf.mxu0
    %v3134 = vpop.f32.mrf.mxu0
    %3135 = vdwg.mxu0
    %v3136 = vrot.slane %v2902, 7
    %v3137 = vsel %vm2954, %v3136, %v2901
    %v3138 = vrot.slane %v2903, 6
    %v3139 = vsel %vm2957, %v3138, %v3137
    %v3140 = vrot.slane %v2904, 5
    %v3141 = vsel %vm2960, %v3140, %v3139
    %v3142 = vrot.slane %v2905, 4
    %v3143 = vsel %vm2963, %v3142, %v3141
    %v3144 = vrot.slane %v2906, 3
    %v3145 = vsel %vm2966, %v3144, %v3143
    %v3146 = vrot.slane %v2907, 2
    %v3147 = vsel %vm2969, %v3146, %v3145
    %v3148 = vrot.slane %v2908, 1
    %v3149 = vsel %vm2972, %v3148, %v3147
    %v3150 = vrot.slane %v2910, 7
    %v3151 = vsel %vm2954, %v3150, %v2909
    %v3152 = vrot.slane %v2911, 6
    %v3153 = vsel %vm2957, %v3152, %v3151
    %v3154 = vrot.slane %v2912, 5
    %v3155 = vsel %vm2960, %v3154, %v3153
    %v3156 = vrot.slane %v2913, 4
    %v3157 = vsel %vm2963, %v3156, %v3155
    %v3158 = vrot.slane %v2914, 3
    %v3159 = vsel %vm2966, %v3158, %v3157
    %v3160 = vrot.slane %v2915, 2
    %v3161 = vsel %vm2969, %v3160, %v3159
    %v3162 = vrot.slane %v2916, 1
    %v3163 = vsel %vm2972, %v3162, %v3161
    %v3164 = vrot.slane %v2918, 7
    %v3165 = vsel %vm2954, %v3164, %v2917
    %v3166 = vrot.slane %v2919, 6
    %v3167 = vsel %vm2957, %v3166, %v3165
    %v3168 = vrot.slane %v2920, 5
    %v3169 = vsel %vm2960, %v3168, %v3167
    %v3170 = vrot.slane %v2921, 4
    %v3171 = vsel %vm2963, %v3170, %v3169
    %v3172 = vrot.slane %v2922, 3
    %v3173 = vsel %vm2966, %v3172, %v3171
    %v3174 = vrot.slane %v2923, 2
    %v3175 = vsel %vm2969, %v3174, %v3173
    %v3176 = vrot.slane %v2924, 1
    %v3177 = vsel %vm2972, %v3176, %v3175
    %v3178 = vrot.slane %v2926, 7
    %v3179 = vsel %vm2954, %v3178, %v2925
    %v3180 = vrot.slane %v2927, 6
    %v3181 = vsel %vm2957, %v3180, %v3179
    %v3182 = vrot.slane %v2928, 5
    %v3183 = vsel %vm2960, %v3182, %v3181
    %v3184 = vrot.slane %v2929, 4
    %v3185 = vsel %vm2963, %v3184, %v3183
    %v3186 = vrot.slane %v2930, 3
    %v3187 = vsel %vm2966, %v3186, %v3185
    %v3188 = vrot.slane %v2931, 2
    %v3189 = vsel %vm2969, %v3188, %v3187
    %v3190 = vrot.slane %v2932, 1
    %v3191 = vsel %vm2972, %v3190, %v3189
    %v3192 = vrot.slane %v2934, 7
    %v3193 = vsel %vm2954, %v3192, %v2933
    %v3194 = vrot.slane %v2935, 6
    %v3195 = vsel %vm2957, %v3194, %v3193
    %v3196 = vrot.slane %v2936, 5
    %v3197 = vsel %vm2960, %v3196, %v3195
    %v3198 = vrot.slane %v2937, 4
    %v3199 = vsel %vm2963, %v3198, %v3197
    %v3200 = vrot.slane %v2938, 3
    %v3201 = vsel %vm2966, %v3200, %v3199
    %v3202 = vrot.slane %v2939, 2
    %v3203 = vsel %vm2969, %v3202, %v3201
    %v3204 = vrot.slane %v2940, 1
    %v3205 = vsel %vm2972, %v3204, %v3203
    %v3206 = vrot.slane %v2942, 7
    %v3207 = vsel %vm2954, %v3206, %v2941
    %v3208 = vrot.slane %v2943, 6
    %v3209 = vsel %vm2957, %v3208, %v3207
    %v3210 = vrot.slane %v2944, 5
    %v3211 = vsel %vm2960, %v3210, %v3209
    %v3212 = vrot.slane %v2945, 4
    %v3213 = vsel %vm2963, %v3212, %v3211
    %v3214 = vrot.slane %v2946, 3
    %v3215 = vsel %vm2966, %v3214, %v3213
    %v3216 = vrot.slane %v2947, 2
    %v3217 = vsel %vm2969, %v3216, %v3215
    %v3218 = vrot.slane %v2948, 1
    %v3219 = vsel %vm2972, %v3218, %v3217
    %v3220 = vrot.slane %v2950, 7
    %v3221 = vsel %vm2954, %v3220, %v2949
    %v3222 = vrot.slane %v2951, 6
    %v3223 = vsel %vm2957, %v3222, %v3221
    %v3224 = vrot.slane %v2952, 5
    %v3225 = vsel %vm2960, %v3224, %v3223
    %v3226 = vpack.c.b16 %v3163, %v3149
    %v3227 = vpack.c.b16 %v3191, %v3177
    %v3228 = vpack.c.b16 %v3219, %v3205
    %v3229 = vpack.c.b16 %v3225, %v3225
    %v3232 = vunpack.c.l.b16 %v2783
    %v3233 = vunpack.c.l.b16 %v2784
    %v3234 = vpack.c.b16 %v3233, %v3232
    %v3237 = vsel %vm2041, %v3226, 0
    %v3240 = vsel %vm2041, %v3227, 0
    %v3243 = vsel %vm2041, %v3228, 0
    %v3246 = vsel %vm2041, %v3229, 0
    %3248 = vmatprep.subr.bf16.mxu0 0
    %3249 = vmatpush1.bf16.msra.mxu0 0
    %3250 = vmatprep.subr.bf16.mxu0 0
    %3251 = vmatpush1.bf16.msra.mxu0 0
    %3252 = vmatprep.subr.bf16.mxu0 0
    %3253 = vmatpush1.bf16.msra.mxu0 0
    %3254 = vmatprep.subr.bf16.mxu0 0
    %3255 = vmatpush1.bf16.msra.mxu0 0
    %3256 = vmatprep.subr.bf16.mxu0 0
    %3257 = vmatpush1.bf16.msra.mxu0 0
    %3258 = vmatprep.subr.bf16.mxu0 0
    %3259 = vmatpush1.bf16.msra.mxu0 0
    %3260 = vmatprep.subr.bf16.mxu0 0
    %3261 = vmatpush1.bf16.msra.mxu0 0
    %3262 = vmatprep.subr.bf16.mxu0 0
    %3263 = vmatpush1.bf16.msra.mxu0 %v3234
    %3264 = vmatprep.subr.bf16.mxu0 0
    %3265 = vmatpush2.bf16.msra.mxu0 0
    %3266 = vmatprep.subr.bf16.mxu0 0
    %3267 = vmatpush2.bf16.msra.mxu0 0
    %3268 = vmatprep.subr.bf16.mxu0 0
    %3269 = vmatpush2.bf16.msra.mxu0 0
    %3270 = vmatprep.subr.bf16.mxu0 0
    %3271 = vmatpush2.bf16.msra.mxu0 0
    %3272 = vmatprep.subr.bf16.mxu0 0
    %3273 = vmatpush2.bf16.msra.mxu0 0
    %3274 = vmatprep.subr.bf16.mxu0 0
    %3275 = vmatpush2.bf16.msra.mxu0 0
    %3276 = vmatprep.subr.bf16.mxu0 0
    %3277 = vmatpush2.bf16.msra.mxu0 0
    %3278 = vmatprep.subr.bf16.mxu0 0
    %3279 = vmatpush2.bf16.msra.mxu0 0
    %3280 = vmatprep.mubr.bf16.mxu0 0
    %3281 = vmatmul.mubr.bf16.gmra.mxu0 %v3237
    %v3282 = vpop.f32.mrf.mxu0
    %v3283 = vadd.f32 %v3107, %v3282
    %v3284 = vpop.f32.mrf.mxu0
    %v3285 = vpop.f32.mrf.mxu0
    %v3286 = vadd.f32 %v3110, %v3285
    %v3287 = vpop.f32.mrf.mxu0
    %3288 = vmatprep.mubr.bf16.mxu0 0
    %3289 = vmatmul.mubr.bf16.gmra.mxu0 %v3240
    %v3290 = vpop.f32.mrf.mxu0
    %v3291 = vadd.f32 %v3115, %v3290
    %v3292 = vpop.f32.mrf.mxu0
    %v3293 = vpop.f32.mrf.mxu0
    %v3294 = vadd.f32 %v3118, %v3293
    %v3295 = vpop.f32.mrf.mxu0
    %3296 = vmatprep.mubr.bf16.mxu0 0
    %3297 = vmatmul.mubr.bf16.gmra.mxu0 %v3243
    %v3298 = vpop.f32.mrf.mxu0
    %v3299 = vadd.f32 %v3123, %v3298
    %v3300 = vpop.f32.mrf.mxu0
    %v3301 = vpop.f32.mrf.mxu0
    %v3302 = vadd.f32 %v3126, %v3301
    %v3303 = vpop.f32.mrf.mxu0
    %3304 = vmatprep.mubr.bf16.mxu0 0
    %3305 = vmatmul.mubr.bf16.gmra.mxu0 %v3246
    %v3306 = vpop.f32.mrf.mxu0
    %v3307 = vadd.f32 %v3131, %v3306
    %v3308 = vpop.f32.mrf.mxu0
    %v3309 = vpop.f32.mrf.mxu0
    %v3310 = vpop.f32.mrf.mxu0
    %3311 = vdwg.mxu0
    %v3312 = vpack.c.bf16 %v2751, %v2751
    %v3313 = vpack.c.bf16 %v2780, %v2780
    %v3316 = vunpack.c.l.b16 %v3312
    %v3317 = vunpack.c.l.b16 %v3313
    %v3318 = vsel %vm2954, %v2956, %v2902
    %v3319 = vsel %vm2957, %v2959, %v3318
    %v3320 = vsel %vm2960, %v2962, %v3319
    %v3321 = vsel %vm2963, %v2965, %v3320
    %v3322 = vsel %vm2966, %v2968, %v3321
    %v3323 = vsel %vm2969, %v2971, %v3322
    %v3324 = vsel %vm2972, %v2974, %v3323
    %v3325 = vsel %vm2954, %v2976, %v2910
    %v3326 = vsel %vm2957, %v2978, %v3325
    %v3327 = vsel %vm2960, %v2980, %v3326
    %v3328 = vsel %vm2963, %v2982, %v3327
    %v3329 = vsel %vm2966, %v2984, %v3328
    %v3330 = vsel %vm2969, %v2986, %v3329
    %v3331 = vsel %vm2972, %v2988, %v3330
    %v3332 = vsel %vm2954, %v2990, %v2918
    %v3333 = vsel %vm2957, %v2992, %v3332
    %v3334 = vsel %vm2960, %v2994, %v3333
    %v3335 = vsel %vm2963, %v2996, %v3334
    %v3336 = vsel %vm2966, %v2998, %v3335
    %v3337 = vsel %vm2969, %v3000, %v3336
    %v3338 = vsel %vm2972, %v3002, %v3337
    %v3339 = vrot.slane %v3316, 7
    %v3340 = vsel %vm2954, %v3339, %v2926
    %v3341 = vsel %vm2957, %v3006, %v3340
    %v3342 = vsel %vm2960, %v3008, %v3341
    %v3343 = vsel %vm2963, %v3010, %v3342
    %v3344 = vsel %vm2966, %v3012, %v3343
    %v3345 = vsel %vm2969, %v3014, %v3344
    %v3346 = vsel %vm2972, %v3016, %v3345
    %v3347 = vsel %vm2954, %v3018, %v2934
    %v3348 = vsel %vm2957, %v3020, %v3347
    %v3349 = vsel %vm2960, %v3022, %v3348
    %v3350 = vsel %vm2963, %v3024, %v3349
    %v3351 = vsel %vm2966, %v3026, %v3350
    %v3352 = vsel %vm2969, %v3028, %v3351
    %v3353 = vsel %vm2972, %v3030, %v3352
    %v3354 = vsel %vm2954, %v3032, %v2942
    %v3355 = vsel %vm2957, %v3034, %v3354
    %v3356 = vsel %vm2960, %v3036, %v3355
    %v3357 = vsel %vm2963, %v3038, %v3356
    %v3358 = vsel %vm2966, %v3040, %v3357
    %v3359 = vsel %vm2969, %v3042, %v3358
    %v3360 = vsel %vm2972, %v3044, %v3359
    %v3361 = vsel %vm2954, %v3046, %v2950
    %v3362 = vsel %vm2957, %v3048, %v3361
    %v3363 = vrot.slane %v3317, 5
    %v3364 = vsel %vm2960, %v3363, %v3362
    %v3365 = vpack.c.b16 %v3331, %v3324
    %v3366 = vpack.c.b16 %v3346, %v3338
    %v3367 = vpack.c.b16 %v3360, %v3353
    %v3368 = vpack.c.b16 %v3364, %v3364
    %v3371 = vunpack.c.l.b16 %v2787
    %v3372 = vunpack.c.l.b16 %v2788
    %v3373 = vpack.c.b16 %v3372, %v3371
    %v3376 = vsel %vm2041, %v3365, 0
    %v3379 = vsel %vm2041, %v3366, 0
    %v3382 = vsel %vm2041, %v3367, 0
    %v3385 = vsel %vm2041, %v3368, 0
    %3387 = vmatprep.subr.bf16.mxu0 0
    %3388 = vmatpush1.bf16.msra.mxu0 0
    %3389 = vmatprep.subr.bf16.mxu0 0
    %3390 = vmatpush1.bf16.msra.mxu0 0
    %3391 = vmatprep.subr.bf16.mxu0 0
    %3392 = vmatpush1.bf16.msra.mxu0 0
    %3393 = vmatprep.subr.bf16.mxu0 0
    %3394 = vmatpush1.bf16.msra.mxu0 0
    %3395 = vmatprep.subr.bf16.mxu0 0
    %3396 = vmatpush1.bf16.msra.mxu0 0
    %3397 = vmatprep.subr.bf16.mxu0 0
    %3398 = vmatpush1.bf16.msra.mxu0 0
    %3399 = vmatprep.subr.bf16.mxu0 0
    %3400 = vmatpush1.bf16.msra.mxu0 0
    %3401 = vmatprep.subr.bf16.mxu0 0
    %3402 = vmatpush1.bf16.msra.mxu0 %v3373
    %3403 = vmatprep.subr.bf16.mxu0 0
    %3404 = vmatpush2.bf16.msra.mxu0 0
    %3405 = vmatprep.subr.bf16.mxu0 0
    %3406 = vmatpush2.bf16.msra.mxu0 0
    %3407 = vmatprep.subr.bf16.mxu0 0
    %3408 = vmatpush2.bf16.msra.mxu0 0
    %3409 = vmatprep.subr.bf16.mxu0 0
    %3410 = vmatpush2.bf16.msra.mxu0 0
    %3411 = vmatprep.subr.bf16.mxu0 0
    %3412 = vmatpush2.bf16.msra.mxu0 0
    %3413 = vmatprep.subr.bf16.mxu0 0
    %3414 = vmatpush2.bf16.msra.mxu0 0
    %3415 = vmatprep.subr.bf16.mxu0 0
    %3416 = vmatpush2.bf16.msra.mxu0 0
    %3417 = vmatprep.subr.bf16.mxu0 0
    %3418 = vmatpush2.bf16.msra.mxu0 0
    %3419 = vmatprep.mubr.bf16.mxu0 0
    %3420 = vmatmul.mubr.bf16.gmra.mxu0 %v3376
    %v3421 = vpop.f32.mrf.mxu0
    %v3422 = vadd.f32 0.0, %v3421
    %v3423 = vpop.f32.mrf.mxu0
    %v3424 = vpop.f32.mrf.mxu0
    %v3425 = vadd.f32 0.0, %v3424
    %v3426 = vpop.f32.mrf.mxu0
    %3427 = vmatprep.mubr.bf16.mxu0 0
    %3428 = vmatmul.mubr.bf16.gmra.mxu0 %v3379
    %v3429 = vpop.f32.mrf.mxu0
    %v3430 = vadd.f32 0.0, %v3429
    %v3431 = vpop.f32.mrf.mxu0
    %v3432 = vpop.f32.mrf.mxu0
    %v3433 = vadd.f32 0.0, %v3432
    %v3434 = vpop.f32.mrf.mxu0
    %3435 = vmatprep.mubr.bf16.mxu0 0
    %3436 = vmatmul.mubr.bf16.gmra.mxu0 %v3382
    %v3437 = vpop.f32.mrf.mxu0
    %v3438 = vadd.f32 0.0, %v3437
    %v3439 = vpop.f32.mrf.mxu0
    %v3440 = vpop.f32.mrf.mxu0
    %v3441 = vadd.f32 0.0, %v3440
    %v3442 = vpop.f32.mrf.mxu0
    %3443 = vmatprep.mubr.bf16.mxu0 0
    %3444 = vmatmul.mubr.bf16.gmra.mxu0 %v3385
    %v3445 = vpop.f32.mrf.mxu0
    %v3446 = vadd.f32 0.0, %v3445
    %v3447 = vpop.f32.mrf.mxu0
    %v3448 = vpop.f32.mrf.mxu0
    %v3449 = vpop.f32.mrf.mxu0
    %3450 = vdwg.mxu0
    %v3451 = vadd.f32 %v3283, %v3422
    %v3452 = vadd.f32 %v3286, %v3425
    %v3453 = vadd.f32 %v3291, %v3430
    %v3454 = vadd.f32 %v3294, %v3433
    %v3455 = vadd.f32 %v3299, %v3438
    %v3456 = vadd.f32 %v3302, %v3441
    %v3457 = vadd.f32 %v3307, %v3446
    %v3458 = vrot.slane %v2902, 1
    %v3459 = vsel %vm2954, %v2903, %v3458
    %v3460 = vrot.slane %v2904, 7
    %v3461 = vsel %vm2957, %v3460, %v3459
    %v3462 = vrot.slane %v2905, 6
    %v3463 = vsel %vm2960, %v3462, %v3461
    %v3464 = vrot.slane %v2906, 5
    %v3465 = vsel %vm2963, %v3464, %v3463
    %v3466 = vrot.slane %v2907, 4
    %v3467 = vsel %vm2966, %v3466, %v3465
    %v3468 = vrot.slane %v2908, 3
    %v3469 = vsel %vm2969, %v3468, %v3467
    %v3470 = vrot.slane %v2909, 2
    %v3471 = vsel %vm2972, %v3470, %v3469
    %v3472 = vrot.slane %v2910, 1
    %v3473 = vsel %vm2954, %v2911, %v3472
    %v3474 = vrot.slane %v2912, 7
    %v3475 = vsel %vm2957, %v3474, %v3473
    %v3476 = vrot.slane %v2913, 6
    %v3477 = vsel %vm2960, %v3476, %v3475
    %v3478 = vrot.slane %v2914, 5
    %v3479 = vsel %vm2963, %v3478, %v3477
    %v3480 = vrot.slane %v2915, 4
    %v3481 = vsel %vm2966, %v3480, %v3479
    %v3482 = vrot.slane %v2916, 3
    %v3483 = vsel %vm2969, %v3482, %v3481
    %v3484 = vrot.slane %v2917, 2
    %v3485 = vsel %vm2972, %v3484, %v3483
    %v3486 = vrot.slane %v2918, 1
    %v3487 = vsel %vm2954, %v2919, %v3486
    %v3488 = vrot.slane %v2920, 7
    %v3489 = vsel %vm2957, %v3488, %v3487
    %v3490 = vrot.slane %v2921, 6
    %v3491 = vsel %vm2960, %v3490, %v3489
    %v3492 = vrot.slane %v2922, 5
    %v3493 = vsel %vm2963, %v3492, %v3491
    %v3494 = vrot.slane %v2923, 4
    %v3495 = vsel %vm2966, %v3494, %v3493
    %v3496 = vrot.slane %v2924, 3
    %v3497 = vsel %vm2969, %v3496, %v3495
    %v3498 = vrot.slane %v2925, 2
    %v3499 = vsel %vm2972, %v3498, %v3497
    %v3500 = vrot.slane %v2926, 1
    %v3501 = vsel %vm2954, %v3316, %v3500
    %v3502 = vrot.slane %v2928, 7
    %v3503 = vsel %vm2957, %v3502, %v3501
    %v3504 = vrot.slane %v2929, 6
    %v3505 = vsel %vm2960, %v3504, %v3503
    %v3506 = vrot.slane %v2930, 5
    %v3507 = vsel %vm2963, %v3506, %v3505
    %v3508 = vrot.slane %v2931, 4
    %v3509 = vsel %vm2966, %v3508, %v3507
    %v3510 = vrot.slane %v2932, 3
    %v3511 = vsel %vm2969, %v3510, %v3509
    %v3512 = vrot.slane %v2933, 2
    %v3513 = vsel %vm2972, %v3512, %v3511
    %v3514 = vrot.slane %v2934, 1
    %v3515 = vsel %vm2954, %v2935, %v3514
    %v3516 = vrot.slane %v2936, 7
    %v3517 = vsel %vm2957, %v3516, %v3515
    %v3518 = vrot.slane %v2937, 6
    %v3519 = vsel %vm2960, %v3518, %v3517
    %v3520 = vrot.slane %v2938, 5
    %v3521 = vsel %vm2963, %v3520, %v3519
    %v3522 = vrot.slane %v2939, 4
    %v3523 = vsel %vm2966, %v3522, %v3521
    %v3524 = vrot.slane %v2940, 3
    %v3525 = vsel %vm2969, %v3524, %v3523
    %v3526 = vrot.slane %v2941, 2
    %v3527 = vsel %vm2972, %v3526, %v3525
    %v3528 = vrot.slane %v2942, 1
    %v3529 = vsel %vm2954, %v2943, %v3528
    %v3530 = vrot.slane %v2944, 7
    %v3531 = vsel %vm2957, %v3530, %v3529
    %v3532 = vrot.slane %v2945, 6
    %v3533 = vsel %vm2960, %v3532, %v3531
    %v3534 = vrot.slane %v2946, 5
    %v3535 = vsel %vm2963, %v3534, %v3533
    %v3536 = vrot.slane %v2947, 4
    %v3537 = vsel %vm2966, %v3536, %v3535
    %v3538 = vrot.slane %v2948, 3
    %v3539 = vsel %vm2969, %v3538, %v3537
    %v3540 = vrot.slane %v2949, 2
    %v3541 = vsel %vm2972, %v3540, %v3539
    %v3542 = vrot.slane %v2950, 1
    %v3543 = vsel %vm2954, %v2951, %v3542
    %v3544 = vrot.slane %v2952, 7
    %v3545 = vsel %vm2957, %v3544, %v3543
    %v3546 = vrot.slane %v3317, 6
    %v3547 = vsel %vm2960, %v3546, %v3545
    %v3548 = vpack.c.b16 %v3485, %v3471
    %v3549 = vpack.c.b16 %v3513, %v3499
    %v3550 = vpack.c.b16 %v3541, %v3527
    %v3551 = vpack.c.b16 %v3547, %v3547
    %v3554 = vunpack.c.l.b16 %v2789
    %v3555 = vunpack.c.l.b16 %v2790
    %v3556 = vpack.c.b16 %v3555, %v3554
    %v3559 = vsel %vm2041, %v3548, 0
    %v3562 = vsel %vm2041, %v3549, 0
    %v3565 = vsel %vm2041, %v3550, 0
    %v3568 = vsel %vm2041, %v3551, 0
    %3570 = vmatprep.subr.bf16.mxu0 0
    %3571 = vmatpush1.bf16.msra.mxu0 0
    %3572 = vmatprep.subr.bf16.mxu0 0
    %3573 = vmatpush1.bf16.msra.mxu0 0
    %3574 = vmatprep.subr.bf16.mxu0 0
    %3575 = vmatpush1.bf16.msra.mxu0 0
    %3576 = vmatprep.subr.bf16.mxu0 0
    %3577 = vmatpush1.bf16.msra.mxu0 0
    %3578 = vmatprep.subr.bf16.mxu0 0
    %3579 = vmatpush1.bf16.msra.mxu0 0
    %3580 = vmatprep.subr.bf16.mxu0 0
    %3581 = vmatpush1.bf16.msra.mxu0 0
    %3582 = vmatprep.subr.bf16.mxu0 0
    %3583 = vmatpush1.bf16.msra.mxu0 0
    %3584 = vmatprep.subr.bf16.mxu0 0
    %3585 = vmatpush1.bf16.msra.mxu0 %v3556
    %3586 = vmatprep.subr.bf16.mxu0 0
    %3587 = vmatpush2.bf16.msra.mxu0 0
    %3588 = vmatprep.subr.bf16.mxu0 0
    %3589 = vmatpush2.bf16.msra.mxu0 0
    %3590 = vmatprep.subr.bf16.mxu0 0
    %3591 = vmatpush2.bf16.msra.mxu0 0
    %3592 = vmatprep.subr.bf16.mxu0 0
    %3593 = vmatpush2.bf16.msra.mxu0 0
    %3594 = vmatprep.subr.bf16.mxu0 0
    %3595 = vmatpush2.bf16.msra.mxu0 0
    %3596 = vmatprep.subr.bf16.mxu0 0
    %3597 = vmatpush2.bf16.msra.mxu0 0
    %3598 = vmatprep.subr.bf16.mxu0 0
    %3599 = vmatpush2.bf16.msra.mxu0 0
    %3600 = vmatprep.subr.bf16.mxu0 0
    %3601 = vmatpush2.bf16.msra.mxu0 0
    %3602 = vmatprep.mubr.bf16.mxu0 0
    %3603 = vmatmul.mubr.bf16.gmra.mxu0 %v3559
    %v3604 = vpop.f32.mrf.mxu0
    %v3605 = vadd.f32 0.0, %v3604
    %v3606 = vpop.f32.mrf.mxu0
    %v3607 = vpop.f32.mrf.mxu0
    %v3608 = vadd.f32 0.0, %v3607
    %v3609 = vpop.f32.mrf.mxu0
    %3610 = vmatprep.mubr.bf16.mxu0 0
    %3611 = vmatmul.mubr.bf16.gmra.mxu0 %v3562
    %v3612 = vpop.f32.mrf.mxu0
    %v3613 = vadd.f32 0.0, %v3612
    %v3614 = vpop.f32.mrf.mxu0
    %v3615 = vpop.f32.mrf.mxu0
    %v3616 = vadd.f32 0.0, %v3615
    %v3617 = vpop.f32.mrf.mxu0
    %3618 = vmatprep.mubr.bf16.mxu0 0
    %3619 = vmatmul.mubr.bf16.gmra.mxu0 %v3565
    %v3620 = vpop.f32.mrf.mxu0
    %v3621 = vadd.f32 0.0, %v3620
    %v3622 = vpop.f32.mrf.mxu0
    %v3623 = vpop.f32.mrf.mxu0
    %v3624 = vadd.f32 0.0, %v3623
    %v3625 = vpop.f32.mrf.mxu0
    %3626 = vmatprep.mubr.bf16.mxu0 0
    %3627 = vmatmul.mubr.bf16.gmra.mxu0 %v3568
    %v3628 = vpop.f32.mrf.mxu0
    %v3629 = vadd.f32 0.0, %v3628
    %v3630 = vpop.f32.mrf.mxu0
    %v3631 = vpop.f32.mrf.mxu0
    %v3632 = vpop.f32.mrf.mxu0
    %3633 = vdwg.mxu0
    %v3634 = vadd.f32 %v3451, %v3605
    %v3635 = vadd.f32 %v3452, %v3608
    %v3636 = vadd.f32 %v3453, %v3613
    %v3637 = vadd.f32 %v3454, %v3616
    %v3638 = vadd.f32 %v3455, %v3621
    %v3639 = vadd.f32 %v3456, %v3624
    %v3640 = vadd.f32 %v3457, %v3629
    %v3641 = vpack.c.bf16 %v2752, %v2752
    %v3642 = vpack.c.bf16 %v2781, %v2781
    %v3645 = vunpack.c.l.b16 %v3641
    %v3646 = vunpack.c.l.b16 %v3642
    %v3647 = vsel %vm2954, %v3460, %v2903
    %v3648 = vsel %vm2957, %v3462, %v3647
    %v3649 = vsel %vm2960, %v3464, %v3648
    %v3650 = vsel %vm2963, %v3466, %v3649
    %v3651 = vsel %vm2966, %v3468, %v3650
    %v3652 = vsel %vm2969, %v3470, %v3651
    %v3653 = vsel %vm2972, %v3472, %v3652
    %v3654 = vsel %vm2954, %v3474, %v2911
    %v3655 = vsel %vm2957, %v3476, %v3654
    %v3656 = vsel %vm2960, %v3478, %v3655
    %v3657 = vsel %vm2963, %v3480, %v3656
    %v3658 = vsel %vm2966, %v3482, %v3657
    %v3659 = vsel %vm2969, %v3484, %v3658
    %v3660 = vsel %vm2972, %v3486, %v3659
    %v3661 = vsel %vm2954, %v3488, %v2919
    %v3662 = vsel %vm2957, %v3490, %v3661
    %v3663 = vsel %vm2960, %v3492, %v3662
    %v3664 = vsel %vm2963, %v3494, %v3663
    %v3665 = vsel %vm2966, %v3496, %v3664
    %v3666 = vsel %vm2969, %v3498, %v3665
    %v3667 = vsel %vm2972, %v3500, %v3666
    %v3668 = vrot.slane %v3645, 7
    %v3669 = vsel %vm2954, %v3668, %v3316
    %v3670 = vsel %vm2957, %v3504, %v3669
    %v3671 = vsel %vm2960, %v3506, %v3670
    %v3672 = vsel %vm2963, %v3508, %v3671
    %v3673 = vsel %vm2966, %v3510, %v3672
    %v3674 = vsel %vm2969, %v3512, %v3673
    %v3675 = vsel %vm2972, %v3514, %v3674
    %v3676 = vsel %vm2954, %v3516, %v2935
    %v3677 = vsel %vm2957, %v3518, %v3676
    %v3678 = vsel %vm2960, %v3520, %v3677
    %v3679 = vsel %vm2963, %v3522, %v3678
    %v3680 = vsel %vm2966, %v3524, %v3679
    %v3681 = vsel %vm2969, %v3526, %v3680
    %v3682 = vsel %vm2972, %v3528, %v3681
    %v3683 = vsel %vm2954, %v3530, %v2943
    %v3684 = vsel %vm2957, %v3532, %v3683
    %v3685 = vsel %vm2960, %v3534, %v3684
    %v3686 = vsel %vm2963, %v3536, %v3685
    %v3687 = vsel %vm2966, %v3538, %v3686
    %v3688 = vsel %vm2969, %v3540, %v3687
    %v3689 = vsel %vm2972, %v3542, %v3688
    %v3690 = vsel %vm2954, %v3544, %v2951
    %v3691 = vsel %vm2957, %v3546, %v3690
    %v3692 = vrot.slane %v3646, 5
    %v3693 = vsel %vm2960, %v3692, %v3691
    %v3694 = vpack.c.b16 %v3660, %v3653
    %v3695 = vpack.c.b16 %v3675, %v3667
    %v3696 = vpack.c.b16 %v3689, %v3682
    %v3697 = vpack.c.b16 %v3693, %v3693
    %v3700 = vunpack.c.l.b16 %v2791
    %v3701 = vunpack.c.l.b16 %v2792
    %v3702 = vpack.c.b16 %v3701, %v3700
    %v3705 = vsel %vm2041, %v3694, 0
    %v3708 = vsel %vm2041, %v3695, 0
    %v3711 = vsel %vm2041, %v3696, 0
    %v3714 = vsel %vm2041, %v3697, 0
    %3716 = vmatprep.subr.bf16.mxu0 0
    %3717 = vmatpush1.bf16.msra.mxu0 0
    %3718 = vmatprep.subr.bf16.mxu0 0
    %3719 = vmatpush1.bf16.msra.mxu0 0
    %3720 = vmatprep.subr.bf16.mxu0 0
    %3721 = vmatpush1.bf16.msra.mxu0 0
    %3722 = vmatprep.subr.bf16.mxu0 0
    %3723 = vmatpush1.bf16.msra.mxu0 0
    %3724 = vmatprep.subr.bf16.mxu0 0
    %3725 = vmatpush1.bf16.msra.mxu0 0
    %3726 = vmatprep.subr.bf16.mxu0 0
    %3727 = vmatpush1.bf16.msra.mxu0 0
    %3728 = vmatprep.subr.bf16.mxu0 0
    %3729 = vmatpush1.bf16.msra.mxu0 0
    %3730 = vmatprep.subr.bf16.mxu0 0
    %3731 = vmatpush1.bf16.msra.mxu0 %v3702
    %3732 = vmatprep.subr.bf16.mxu0 0
    %3733 = vmatpush2.bf16.msra.mxu0 0
    %3734 = vmatprep.subr.bf16.mxu0 0
    %3735 = vmatpush2.bf16.msra.mxu0 0
    %3736 = vmatprep.subr.bf16.mxu0 0
    %3737 = vmatpush2.bf16.msra.mxu0 0
    %3738 = vmatprep.subr.bf16.mxu0 0
    %3739 = vmatpush2.bf16.msra.mxu0 0
    %3740 = vmatprep.subr.bf16.mxu0 0
    %3741 = vmatpush2.bf16.msra.mxu0 0
    %3742 = vmatprep.subr.bf16.mxu0 0
    %3743 = vmatpush2.bf16.msra.mxu0 0
    %3744 = vmatprep.subr.bf16.mxu0 0
    %3745 = vmatpush2.bf16.msra.mxu0 0
    %3746 = vmatprep.subr.bf16.mxu0 0
    %3747 = vmatpush2.bf16.msra.mxu0 0
    %3748 = vmatprep.mubr.bf16.mxu0 0
    %3749 = vmatmul.mubr.bf16.gmra.mxu0 %v3705
    %v3750 = vpop.f32.mrf.mxu0
    %v3751 = vadd.f32 0.0, %v3750
    %v3752 = vpop.f32.mrf.mxu0
    %v3753 = vpop.f32.mrf.mxu0
    %v3754 = vadd.f32 0.0, %v3753
    %v3755 = vpop.f32.mrf.mxu0
    %3756 = vmatprep.mubr.bf16.mxu0 0
    %3757 = vmatmul.mubr.bf16.gmra.mxu0 %v3708
    %v3758 = vpop.f32.mrf.mxu0
    %v3759 = vadd.f32 0.0, %v3758
    %v3760 = vpop.f32.mrf.mxu0
    %v3761 = vpop.f32.mrf.mxu0
    %v3762 = vadd.f32 0.0, %v3761
    %v3763 = vpop.f32.mrf.mxu0
    %3764 = vmatprep.mubr.bf16.mxu0 0
    %3765 = vmatmul.mubr.bf16.gmra.mxu0 %v3711
    %v3766 = vpop.f32.mrf.mxu0
    %v3767 = vadd.f32 0.0, %v3766
    %v3768 = vpop.f32.mrf.mxu0
    %v3769 = vpop.f32.mrf.mxu0
    %v3770 = vadd.f32 0.0, %v3769
    %v3771 = vpop.f32.mrf.mxu0
    %3772 = vmatprep.mubr.bf16.mxu0 0
    %3773 = vmatmul.mubr.bf16.gmra.mxu0 %v3714
    %v3774 = vpop.f32.mrf.mxu0
    %v3775 = vadd.f32 0.0, %v3774
    %v3776 = vpop.f32.mrf.mxu0
    %v3777 = vpop.f32.mrf.mxu0
    %v3778 = vpop.f32.mrf.mxu0
    %3779 = vdwg.mxu0
    %v3780 = vadd.f32 %v3634, %v3751
    %v3781 = vadd.f32 %v3635, %v3754
    %v3782 = vadd.f32 %v3636, %v3759
    %v3783 = vadd.f32 %v3637, %v3762
    %v3784 = vadd.f32 %v3638, %v3767
    %v3785 = vadd.f32 %v3639, %v3770
    %v3786 = vadd.f32 %v3640, %v3775
    %v3787 = vrot.slane %v2903, 1
    %v3788 = vsel %vm2954, %v2904, %v3787
    %v3789 = vrot.slane %v2905, 7
    %v3790 = vsel %vm2957, %v3789, %v3788
    %v3791 = vrot.slane %v2906, 6
    %v3792 = vsel %vm2960, %v3791, %v3790
    %v3793 = vrot.slane %v2907, 5
    %v3794 = vsel %vm2963, %v3793, %v3792
    %v3795 = vrot.slane %v2908, 4
    %v3796 = vsel %vm2966, %v3795, %v3794
    %v3797 = vrot.slane %v2909, 3
    %v3798 = vsel %vm2969, %v3797, %v3796
    %v3799 = vrot.slane %v2910, 2
    %v3800 = vsel %vm2972, %v3799, %v3798
    %v3801 = vrot.slane %v2911, 1
    %v3802 = vsel %vm2954, %v2912, %v3801
    %v3803 = vrot.slane %v2913, 7
    %v3804 = vsel %vm2957, %v3803, %v3802
    %v3805 = vrot.slane %v2914, 6
    %v3806 = vsel %vm2960, %v3805, %v3804
    %v3807 = vrot.slane %v2915, 5
    %v3808 = vsel %vm2963, %v3807, %v3806
    %v3809 = vrot.slane %v2916, 4
    %v3810 = vsel %vm2966, %v3809, %v3808
    %v3811 = vrot.slane %v2917, 3
    %v3812 = vsel %vm2969, %v3811, %v3810
    %v3813 = vrot.slane %v2918, 2
    %v3814 = vsel %vm2972, %v3813, %v3812
    %v3815 = vrot.slane %v2919, 1
    %v3816 = vsel %vm2954, %v2920, %v3815
    %v3817 = vrot.slane %v2921, 7
    %v3818 = vsel %vm2957, %v3817, %v3816
    %v3819 = vrot.slane %v2922, 6
    %v3820 = vsel %vm2960, %v3819, %v3818
    %v3821 = vrot.slane %v2923, 5
    %v3822 = vsel %vm2963, %v3821, %v3820
    %v3823 = vrot.slane %v2924, 4
    %v3824 = vsel %vm2966, %v3823, %v3822
    %v3825 = vrot.slane %v2925, 3
    %v3826 = vsel %vm2969, %v3825, %v3824
    %v3827 = vrot.slane %v2926, 2
    %v3828 = vsel %vm2972, %v3827, %v3826
    %v3829 = vrot.slane %v3316, 1
    %v3830 = vsel %vm2954, %v3645, %v3829
    %v3831 = vrot.slane %v2929, 7
    %v3832 = vsel %vm2957, %v3831, %v3830
    %v3833 = vrot.slane %v2930, 6
    %v3834 = vsel %vm2960, %v3833, %v3832
    %v3835 = vrot.slane %v2931, 5
    %v3836 = vsel %vm2963, %v3835, %v3834
    %v3837 = vrot.slane %v2932, 4
    %v3838 = vsel %vm2966, %v3837, %v3836
    %v3839 = vrot.slane %v2933, 3
    %v3840 = vsel %vm2969, %v3839, %v3838
    %v3841 = vrot.slane %v2934, 2
    %v3842 = vsel %vm2972, %v3841, %v3840
    %v3843 = vrot.slane %v2935, 1
    %v3844 = vsel %vm2954, %v2936, %v3843
    %v3845 = vrot.slane %v2937, 7
    %v3846 = vsel %vm2957, %v3845, %v3844
    %v3847 = vrot.slane %v2938, 6
    %v3848 = vsel %vm2960, %v3847, %v3846
    %v3849 = vrot.slane %v2939, 5
    %v3850 = vsel %vm2963, %v3849, %v3848
    %v3851 = vrot.slane %v2940, 4
    %v3852 = vsel %vm2966, %v3851, %v3850
    %v3853 = vrot.slane %v2941, 3
    %v3854 = vsel %vm2969, %v3853, %v3852
    %v3855 = vrot.slane %v2942, 2
    %v3856 = vsel %vm2972, %v3855, %v3854
    %v3857 = vrot.slane %v2943, 1
    %v3858 = vsel %vm2954, %v2944, %v3857
    %v3859 = vrot.slane %v2945, 7
    %v3860 = vsel %vm2957, %v3859, %v3858
    %v3861 = vrot.slane %v2946, 6
    %v3862 = vsel %vm2960, %v3861, %v3860
    %v3863 = vrot.slane %v2947, 5
    %v3864 = vsel %vm2963, %v3863, %v3862
    %v3865 = vrot.slane %v2948, 4
    %v3866 = vsel %vm2966, %v3865, %v3864
    %v3867 = vrot.slane %v2949, 3
    %v3868 = vsel %vm2969, %v3867, %v3866
    %v3869 = vrot.slane %v2950, 2
    %v3870 = vsel %vm2972, %v3869, %v3868
    %v3871 = vrot.slane %v2951, 1
    %v3872 = vsel %vm2954, %v2952, %v3871
    %v3873 = vrot.slane %v3317, 7
    %v3874 = vsel %vm2957, %v3873, %v3872
    %v3875 = vrot.slane %v3646, 6
    %v3876 = vsel %vm2960, %v3875, %v3874
    %v3877 = vpack.c.b16 %v3814, %v3800
    %v3878 = vpack.c.b16 %v3842, %v3828
    %v3879 = vpack.c.b16 %v3870, %v3856
    %v3880 = vpack.c.b16 %v3876, %v3876
    %v3883 = vunpack.c.l.b16 %v2793
    %v3884 = vunpack.c.l.b16 %v2794
    %v3885 = vpack.c.b16 %v3884, %v3883
    %v3888 = vsel %vm2041, %v3877, 0
    %v3891 = vsel %vm2041, %v3878, 0
    %v3894 = vsel %vm2041, %v3879, 0
    %v3897 = vsel %vm2041, %v3880, 0
    %3899 = vmatprep.subr.bf16.mxu0 0
    %3900 = vmatpush1.bf16.msra.mxu0 0
    %3901 = vmatprep.subr.bf16.mxu0 0
    %3902 = vmatpush1.bf16.msra.mxu0 0
    %3903 = vmatprep.subr.bf16.mxu0 0
    %3904 = vmatpush1.bf16.msra.mxu0 0
    %3905 = vmatprep.subr.bf16.mxu0 0
    %3906 = vmatpush1.bf16.msra.mxu0 0
    %3907 = vmatprep.subr.bf16.mxu0 0
    %3908 = vmatpush1.bf16.msra.mxu0 0
    %3909 = vmatprep.subr.bf16.mxu0 0
    %3910 = vmatpush1.bf16.msra.mxu0 0
    %3911 = vmatprep.subr.bf16.mxu0 0
    %3912 = vmatpush1.bf16.msra.mxu0 0
    %3913 = vmatprep.subr.bf16.mxu0 0
    %3914 = vmatpush1.bf16.msra.mxu0 %v3885
    %3915 = vmatprep.subr.bf16.mxu0 0
    %3916 = vmatpush2.bf16.msra.mxu0 0
    %3917 = vmatprep.subr.bf16.mxu0 0
    %3918 = vmatpush2.bf16.msra.mxu0 0
    %3919 = vmatprep.subr.bf16.mxu0 0
    %3920 = vmatpush2.bf16.msra.mxu0 0
    %3921 = vmatprep.subr.bf16.mxu0 0
    %3922 = vmatpush2.bf16.msra.mxu0 0
    %3923 = vmatprep.subr.bf16.mxu0 0
    %3924 = vmatpush2.bf16.msra.mxu0 0
    %3925 = vmatprep.subr.bf16.mxu0 0
    %3926 = vmatpush2.bf16.msra.mxu0 0
    %3927 = vmatprep.subr.bf16.mxu0 0
    %3928 = vmatpush2.bf16.msra.mxu0 0
    %3929 = vmatprep.subr.bf16.mxu0 0
    %3930 = vmatpush2.bf16.msra.mxu0 0
    %3931 = vmatprep.mubr.bf16.mxu0 0
    %3932 = vmatmul.mubr.bf16.gmra.mxu0 %v3888
    %v3933 = vpop.f32.mrf.mxu0
    %v3934 = vadd.f32 0.0, %v3933
    %v3935 = vpop.f32.mrf.mxu0
    %v3936 = vpop.f32.mrf.mxu0
    %v3937 = vadd.f32 0.0, %v3936
    %v3938 = vpop.f32.mrf.mxu0
    %3939 = vmatprep.mubr.bf16.mxu0 0
    %3940 = vmatmul.mubr.bf16.gmra.mxu0 %v3891
    %v3941 = vpop.f32.mrf.mxu0
    %v3942 = vadd.f32 0.0, %v3941
    %v3943 = vpop.f32.mrf.mxu0
    %v3944 = vpop.f32.mrf.mxu0
    %v3945 = vadd.f32 0.0, %v3944
    %v3946 = vpop.f32.mrf.mxu0
    %3947 = vmatprep.mubr.bf16.mxu0 0
    %3948 = vmatmul.mubr.bf16.gmra.mxu0 %v3894
    %v3949 = vpop.f32.mrf.mxu0
    %v3950 = vadd.f32 0.0, %v3949
    %v3951 = vpop.f32.mrf.mxu0
    %v3952 = vpop.f32.mrf.mxu0
    %v3953 = vadd.f32 0.0, %v3952
    %v3954 = vpop.f32.mrf.mxu0
    %3955 = vmatprep.mubr.bf16.mxu0 0
    %3956 = vmatmul.mubr.bf16.gmra.mxu0 %v3897
    %v3957 = vpop.f32.mrf.mxu0
    %v3958 = vadd.f32 0.0, %v3957
    %v3959 = vpop.f32.mrf.mxu0
    %v3960 = vpop.f32.mrf.mxu0
    %v3961 = vpop.f32.mrf.mxu0
    %3962 = vdwg.mxu0
    %v3963 = vadd.f32 %v3780, %v3934
    %v3964 = vadd.f32 %v3781, %v3937
    %v3965 = vadd.f32 %v3782, %v3942
    %v3966 = vadd.f32 %v3783, %v3945
    %v3967 = vadd.f32 %v3784, %v3950
    %v3968 = vadd.f32 %v3785, %v3953
    %v3969 = vadd.f32 %v3786, %v3958
    %v3970 = vpack.c.bf16 %v2753, %v2753
    %v3971 = vpack.c.bf16 %v2782, %v2782
    %v3974 = vunpack.c.l.b16 %v3970
    %v3975 = vunpack.c.l.b16 %v3971
    %v3976 = vsel %vm2954, %v3789, %v2904
    %v3977 = vsel %vm2957, %v3791, %v3976
    %v3978 = vsel %vm2960, %v3793, %v3977
    %v3979 = vsel %vm2963, %v3795, %v3978
    %v3980 = vsel %vm2966, %v3797, %v3979
    %v3981 = vsel %vm2969, %v3799, %v3980
    %v3982 = vsel %vm2972, %v3801, %v3981
    %v3983 = vsel %vm2954, %v3803, %v2912
    %v3984 = vsel %vm2957, %v3805, %v3983
    %v3985 = vsel %vm2960, %v3807, %v3984
    %v3986 = vsel %vm2963, %v3809, %v3985
    %v3987 = vsel %vm2966, %v3811, %v3986
    %v3988 = vsel %vm2969, %v3813, %v3987
    %v3989 = vsel %vm2972, %v3815, %v3988
    %v3990 = vsel %vm2954, %v3817, %v2920
    %v3991 = vsel %vm2957, %v3819, %v3990
    %v3992 = vsel %vm2960, %v3821, %v3991
    %v3993 = vsel %vm2963, %v3823, %v3992
    %v3994 = vsel %vm2966, %v3825, %v3993
    %v3995 = vsel %vm2969, %v3827, %v3994
    %v3996 = vsel %vm2972, %v3829, %v3995
    %v3997 = vrot.slane %v3974, 7
    %v3998 = vsel %vm2954, %v3997, %v3645
    %v3999 = vsel %vm2957, %v3833, %v3998
    %v4000 = vsel %vm2960, %v3835, %v3999
    %v4001 = vsel %vm2963, %v3837, %v4000
    %v4002 = vsel %vm2966, %v3839, %v4001
    %v4003 = vsel %vm2969, %v3841, %v4002
    %v4004 = vsel %vm2972, %v3843, %v4003
    %v4005 = vsel %vm2954, %v3845, %v2936
    %v4006 = vsel %vm2957, %v3847, %v4005
    %v4007 = vsel %vm2960, %v3849, %v4006
    %v4008 = vsel %vm2963, %v3851, %v4007
    %v4009 = vsel %vm2966, %v3853, %v4008
    %v4010 = vsel %vm2969, %v3855, %v4009
    %v4011 = vsel %vm2972, %v3857, %v4010
    %v4012 = vsel %vm2954, %v3859, %v2944
    %v4013 = vsel %vm2957, %v3861, %v4012
    %v4014 = vsel %vm2960, %v3863, %v4013
    %v4015 = vsel %vm2963, %v3865, %v4014
    %v4016 = vsel %vm2966, %v3867, %v4015
    %v4017 = vsel %vm2969, %v3869, %v4016
    %v4018 = vsel %vm2972, %v3871, %v4017
    %v4019 = vsel %vm2954, %v3873, %v2952
    %v4020 = vsel %vm2957, %v3875, %v4019
    %v4021 = vrot.slane %v3975, 5
    %v4022 = vsel %vm2960, %v4021, %v4020
    %v4023 = vpack.c.b16 %v3989, %v3982
    %v4024 = vpack.c.b16 %v4004, %v3996
    %v4025 = vpack.c.b16 %v4018, %v4011
    %v4026 = vpack.c.b16 %v4022, %v4022
    %v4029 = vunpack.c.l.b16 %v2795
    %v4030 = vunpack.c.l.b16 %v2796
    %v4031 = vpack.c.b16 %v4030, %v4029
    %v4034 = vsel %vm2041, %v4023, 0
    %v4037 = vsel %vm2041, %v4024, 0
    %v4040 = vsel %vm2041, %v4025, 0
    %v4043 = vsel %vm2041, %v4026, 0
    %4045 = vmatprep.subr.bf16.mxu0 0
    %4046 = vmatpush1.bf16.msra.mxu0 0
    %4047 = vmatprep.subr.bf16.mxu0 0
    %4048 = vmatpush1.bf16.msra.mxu0 0
    %4049 = vmatprep.subr.bf16.mxu0 0
    %4050 = vmatpush1.bf16.msra.mxu0 0
    %4051 = vmatprep.subr.bf16.mxu0 0
    %4052 = vmatpush1.bf16.msra.mxu0 0
    %4053 = vmatprep.subr.bf16.mxu0 0
    %4054 = vmatpush1.bf16.msra.mxu0 0
    %4055 = vmatprep.subr.bf16.mxu0 0
    %4056 = vmatpush1.bf16.msra.mxu0 0
    %4057 = vmatprep.subr.bf16.mxu0 0
    %4058 = vmatpush1.bf16.msra.mxu0 0
    %4059 = vmatprep.subr.bf16.mxu0 0
    %4060 = vmatpush1.bf16.msra.mxu0 %v4031
    %4061 = vmatprep.subr.bf16.mxu0 0
    %4062 = vmatpush2.bf16.msra.mxu0 0
    %4063 = vmatprep.subr.bf16.mxu0 0
    %4064 = vmatpush2.bf16.msra.mxu0 0
    %4065 = vmatprep.subr.bf16.mxu0 0
    %4066 = vmatpush2.bf16.msra.mxu0 0
    %4067 = vmatprep.subr.bf16.mxu0 0
    %4068 = vmatpush2.bf16.msra.mxu0 0
    %4069 = vmatprep.subr.bf16.mxu0 0
    %4070 = vmatpush2.bf16.msra.mxu0 0
    %4071 = vmatprep.subr.bf16.mxu0 0
    %4072 = vmatpush2.bf16.msra.mxu0 0
    %4073 = vmatprep.subr.bf16.mxu0 0
    %4074 = vmatpush2.bf16.msra.mxu0 0
    %4075 = vmatprep.subr.bf16.mxu0 0
    %4076 = vmatpush2.bf16.msra.mxu0 0
    %4077 = vmatprep.mubr.bf16.mxu0 0
    %4078 = vmatmul.mubr.bf16.gmra.mxu0 %v4034
    %v4079 = vpop.f32.mrf.mxu0
    %v4080 = vadd.f32 0.0, %v4079
    %v4081 = vpop.f32.mrf.mxu0
    %v4082 = vpop.f32.mrf.mxu0
    %v4083 = vadd.f32 0.0, %v4082
    %v4084 = vpop.f32.mrf.mxu0
    %4085 = vmatprep.mubr.bf16.mxu0 0
    %4086 = vmatmul.mubr.bf16.gmra.mxu0 %v4037
    %v4087 = vpop.f32.mrf.mxu0
    %v4088 = vadd.f32 0.0, %v4087
    %v4089 = vpop.f32.mrf.mxu0
    %v4090 = vpop.f32.mrf.mxu0
    %v4091 = vadd.f32 0.0, %v4090
    %v4092 = vpop.f32.mrf.mxu0
    %4093 = vmatprep.mubr.bf16.mxu0 0
    %4094 = vmatmul.mubr.bf16.gmra.mxu0 %v4040
    %v4095 = vpop.f32.mrf.mxu0
    %v4096 = vadd.f32 0.0, %v4095
    %v4097 = vpop.f32.mrf.mxu0
    %v4098 = vpop.f32.mrf.mxu0
    %v4099 = vadd.f32 0.0, %v4098
    %v4100 = vpop.f32.mrf.mxu0
    %4101 = vmatprep.mubr.bf16.mxu0 0
    %4102 = vmatmul.mubr.bf16.gmra.mxu0 %v4043
    %v4103 = vpop.f32.mrf.mxu0
    %v4104 = vadd.f32 0.0, %v4103
    %v4105 = vpop.f32.mrf.mxu0
    %v4106 = vpop.f32.mrf.mxu0
    %v4107 = vpop.f32.mrf.mxu0
    %4108 = vdwg.mxu0
    %v4109 = vadd.f32 %v3963, %v4080
    %v4110 = vadd.f32 %v3964, %v4083
    %v4111 = vadd.f32 %v3965, %v4088
    %v4112 = vadd.f32 %v3966, %v4091
    %v4113 = vadd.f32 %v3967, %v4096
    %v4114 = vadd.f32 %v3968, %v4099
    %v4115 = vadd.f32 %v3969, %v4104
    %v4116 = vld [vmem:[%s5] sm:$0x1]
    %v4117 = vld [vmem:[%s6] sm:$0x1]
    %vm4118 = vcmask 261120
    %v4119 = vsel %vm4118, %v4109, 0.0
    %v4120 = vsel %vm4118, %v4110, 0.0
    %v4121 = vadd.f32 %v4119, %v4120
    %v4122 = vsel %vm4118, %v4111, 0.0
    %v4123 = vadd.f32 %v4121, %v4122
    %v4124 = vsel %vm4118, %v4112, 0.0
    %v4125 = vadd.f32 %v4123, %v4124
    %v4126 = vsel %vm4118, %v4113, 0.0
    %v4127 = vadd.f32 %v4125, %v4126
    %v4128 = vsel %vm4118, %v4114, 0.0
    %v4129 = vadd.f32 %v4127, %v4128
    %vm4130 = vcmask 257024
    %v4131 = vsel %vm4130, %v4115, 0.0
    %v4132 = vadd.f32 %v4129, %v4131
    %v4133 = vrot.slane %v4132, 4
    %v4134 = vadd.f32 %v4132, %v4133
    %v4135 = vrot.slane %v4134, 2
    %v4136 = vadd.f32 %v4134, %v4135
    %v4137 = vrot.slane %v4136, 1
    %v4138 = vadd.f32 %v4136, %v4137
    %v4139 = vmul.f32 %v4109, %v4109
    %v4140 = vmul.f32 %v4110, %v4110
    %v4141 = vmul.f32 %v4111, %v4111
    %v4142 = vmul.f32 %v4112, %v4112
    %v4143 = vmul.f32 %v4113, %v4113
    %v4144 = vmul.f32 %v4114, %v4114
    %v4145 = vmul.f32 %v4115, %v4115
    %v4146 = vsel %vm4118, %v4139, 0.0
    %v4147 = vsel %vm4118, %v4140, 0.0
    %v4148 = vadd.f32 %v4146, %v4147
    %v4149 = vsel %vm4118, %v4141, 0.0
    %v4150 = vadd.f32 %v4148, %v4149
    %v4151 = vsel %vm4118, %v4142, 0.0
    %v4152 = vadd.f32 %v4150, %v4151
    %v4153 = vsel %vm4118, %v4143, 0.0
    %v4154 = vadd.f32 %v4152, %v4153
    %v4155 = vsel %vm4118, %v4144, 0.0
    %v4156 = vadd.f32 %v4154, %v4155
    %v4157 = vsel %vm4130, %v4145, 0.0
    %v4158 = vadd.f32 %v4156, %v4157
    %v4159 = vrot.slane %v4158, 4
    %v4160 = vadd.f32 %v4158, %v4159
    %v4161 = vrot.slane %v4160, 2
    %v4162 = vadd.f32 %v4160, %v4161
    %v4163 = vrot.slane %v4162, 1
    %v4164 = vadd.f32 %v4162, %v4163
    %v4165 = vmul.f32 %v4138, 0.01923077
    %v4166 = vmul.f32 %v4164, 0.01923077
    %v4167 = vmul.f32 %v4165, %v4165
    %v4168 = vsub.f32 %v4166, %v4167
    %v4169 = vadd.f32 %v4168, 1e-05
    %v4170 = vrsqrt.pop %v4169
    %v4171 = vmul.f32 %v4116, %v4170
    %v4172 = vmul.f32 %v4165, %v4171
    %v4173 = vsub.f32 %v4117, %v4172
    %v4175 = vlaneseq
    %v4176 = vshrl.u32 %v4175, 7
    %v4177 = vsub.s32 0, %v4176
    %v4178 = vrot.slane %v4171, %v4177
    %v4180 = vmul.f32 %v4109, %v4178
    %v4181 = vmul.f32 %v4110, %v4178
    %v4182 = vmul.f32 %v4111, %v4178
    %v4183 = vmul.f32 %v4112, %v4178
    %v4184 = vmul.f32 %v4113, %v4178
    %v4185 = vmul.f32 %v4114, %v4178
    %v4186 = vmul.f32 %v4115, %v4178
    %v4188 = vlaneseq
    %v4189 = vshrl.u32 %v4188, 7
    %v4190 = vsub.s32 0, %v4189
    %v4191 = vrot.slane %v4173, %v4190
    %v4193 = vadd.f32 %v4180, %v4191
    %v4194 = vadd.f32 %v4181, %v4191
    %v4195 = vadd.f32 %v4182, %v4191
    %v4196 = vadd.f32 %v4183, %v4191
    %v4197 = vadd.f32 %v4184, %v4191
    %v4198 = vadd.f32 %v4185, %v4191
    %v4199 = vadd.f32 %v4186, %v4191
    %v4200 = vmul.f32 %v4193, 0.1
    %v4201 = vmul.f32 %v4194, 0.1
    %v4202 = vmul.f32 %v4195, 0.1
    %v4203 = vmul.f32 %v4196, 0.1
    %v4204 = vmul.f32 %v4197, 0.1
    %v4205 = vmul.f32 %v4198, 0.1
    %v4206 = vmul.f32 %v4199, 0.1
    %v4207 = vmax.f32 %v4193, %v4200
    %v4208 = vmax.f32 %v4194, %v4201
    %v4209 = vmax.f32 %v4195, %v4202
    %v4210 = vmax.f32 %v4196, %v4203
    %v4211 = vmax.f32 %v4197, %v4204
    %v4212 = vmax.f32 %v4198, %v4205
    %v4213 = vmax.f32 %v4199, %v4206
    %v4214 = vld [vmem:[%s7] sm:$0xf]
    %v4215 = vld [vmem:[%s7 + $0x4] sm:$0xf]
    %v4216 = vld [vmem:[%s7 + $0x8] sm:$0xf]
    %v4217 = vld [vmem:[%s7 + $0xc] sm:$0xf]
    %v4218 = vld [vmem:[%s7 + $0x10] sm:$0xf]
    %v4219 = vld [vmem:[%s7 + $0x14] sm:$0xf]
    %v4220 = vld [vmem:[%s7 + $0x18] sm:$0xf]
    %v4221 = vld [vmem:[%s7 + $0x1c] sm:$0xf]
    %v4222 = vld [vmem:[%s7 + $0x20] sm:$0xf]
    %v4223 = vld [vmem:[%s7 + $0x24] sm:$0xf]
    %v4224 = vld [vmem:[%s7 + $0x28] sm:$0xf]
    %v4225 = vld [vmem:[%s7 + $0x2c] sm:$0xf]
    %v4233 = vcombine.high %v4207, %v4207
    %v4235 = vunpack.c.l.s4 1983009808
    %v4236 = vunpack.c.0.s8 %v4235
    %v4237 = vlaneseq
    %v4238 = vshrl.u32 %v4237, 7
    %v4239 = vsub.s32 %v4236, %v4238
    %v4240 = vrot.slane %v4207, %v4239
    %v4242 = vunpack.c.l.s4 1983009808
    %v4243 = vunpack.c.0.s8 %v4242
    %v4244 = vlaneseq
    %v4245 = vshrl.u32 %v4244, 7
    %v4246 = vsub.s32 %v4243, %v4245
    %v4247 = vrot.slane %v4233, %v4246
    %v4248 = vcombine.high %v4240, %v4240
    %v4249 = vcombine.high %v4247, %v4247
    %v4250 = vcombine.high %v4208, %v4208
    %v4252 = vunpack.c.l.s4 1983009808
    %v4253 = vunpack.c.0.s8 %v4252
    %v4254 = vlaneseq
    %v4255 = vshrl.u32 %v4254, 7
    %v4256 = vsub.s32 %v4253, %v4255
    %v4257 = vrot.slane %v4208, %v4256
    %v4259 = vunpack.c.l.s4 1983009808
    %v4260 = vunpack.c.0.s8 %v4259
    %v4261 = vlaneseq
    %v4262 = vshrl.u32 %v4261, 7
    %v4263 = vsub.s32 %v4260, %v4262
    %v4264 = vrot.slane %v4250, %v4263
    %v4265 = vcombine.high %v4257, %v4257
    %v4266 = vcombine.high %v4264, %v4264
    %v4267 = vcombine.high %v4209, %v4209
    %v4269 = vunpack.c.l.s4 1983009808
    %v4270 = vunpack.c.0.s8 %v4269
    %v4271 = vlaneseq
    %v4272 = vshrl.u32 %v4271, 7
    %v4273 = vsub.s32 %v4270, %v4272
    %v4274 = vrot.slane %v4209, %v4273
    %v4276 = vunpack.c.l.s4 1983009808
    %v4277 = vunpack.c.0.s8 %v4276
    %v4278 = vlaneseq
    %v4279 = vshrl.u32 %v4278, 7
    %v4280 = vsub.s32 %v4277, %v4279
    %v4281 = vrot.slane %v4267, %v4280
    %v4282 = vcombine.high %v4274, %v4274
    %v4283 = vcombine.high %v4281, %v4281
    %v4284 = vcombine.high %v4210, %v4210
    %v4286 = vunpack.c.l.s4 1983009808
    %v4287 = vunpack.c.0.s8 %v4286
    %v4288 = vlaneseq
    %v4289 = vshrl.u32 %v4288, 7
    %v4290 = vsub.s32 %v4287, %v4289
    %v4291 = vrot.slane %v4210, %v4290
    %v4293 = vunpack.c.l.s4 1983009808
    %v4294 = vunpack.c.0.s8 %v4293
    %v4295 = vlaneseq
    %v4296 = vshrl.u32 %v4295, 7
    %v4297 = vsub.s32 %v4294, %v4296
    %v4298 = vrot.slane %v4284, %v4297
    %v4299 = vcombine.high %v4291, %v4291
    %v4300 = vcombine.high %v4298, %v4298
    %v4301 = vcombine.high %v4211, %v4211
    %v4303 = vunpack.c.l.s4 1983009808
    %v4304 = vunpack.c.0.s8 %v4303
    %v4305 = vlaneseq
    %v4306 = vshrl.u32 %v4305, 7
    %v4307 = vsub.s32 %v4304, %v4306
    %v4308 = vrot.slane %v4211, %v4307
    %v4310 = vunpack.c.l.s4 1983009808
    %v4311 = vunpack.c.0.s8 %v4310
    %v4312 = vlaneseq
    %v4313 = vshrl.u32 %v4312, 7
    %v4314 = vsub.s32 %v4311, %v4313
    %v4315 = vrot.slane %v4301, %v4314
    %v4316 = vcombine.high %v4308, %v4308
    %v4317 = vcombine.high %v4315, %v4315
    %v4318 = vcombine.high %v4212, %v4212
    %v4320 = vunpack.c.l.s4 1983009808
    %v4321 = vunpack.c.0.s8 %v4320
    %v4322 = vlaneseq
    %v4323 = vshrl.u32 %v4322, 7
    %v4324 = vsub.s32 %v4321, %v4323
    %v4325 = vrot.slane %v4212, %v4324
    %v4327 = vunpack.c.l.s4 1983009808
    %v4328 = vunpack.c.0.s8 %v4327
    %v4329 = vlaneseq
    %v4330 = vshrl.u32 %v4329, 7
    %v4331 = vsub.s32 %v4328, %v4330
    %v4332 = vrot.slane %v4318, %v4331
    %v4333 = vcombine.high %v4325, %v4325
    %v4334 = vcombine.high %v4332, %v4332
    %v4336 = vunpack.c.l.s4 1983009808
    %v4337 = vunpack.c.0.s8 %v4336
    %v4338 = vlaneseq
    %v4339 = vshrl.u32 %v4338, 7
    %v4340 = vsub.s32 %v4337, %v4339
    %v4341 = vrot.slane %v4213, %v4340
    %v4342 = vcombine.high %v4341, %v4341
    %v4369 = vpack.c.bf16 %v4240, %v4240
    %v4370 = vpack.c.bf16 %v4248, %v4248
    %v4371 = vpack.c.bf16 %v4247, %v4247
    %v4372 = vpack.c.bf16 %v4249, %v4249
    %v4373 = vpack.c.bf16 %v4257, %v4257
    %v4374 = vpack.c.bf16 %v4265, %v4265
    %v4375 = vpack.c.bf16 %v4264, %v4264
    %v4376 = vpack.c.bf16 %v4266, %v4266
    %v4377 = vpack.c.bf16 %v4274, %v4274
    %v4378 = vpack.c.bf16 %v4282, %v4282
    %v4379 = vpack.c.bf16 %v4281, %v4281
    %v4380 = vpack.c.bf16 %v4283, %v4283
    %v4381 = vpack.c.bf16 %v4299, %v4299
    %v4382 = vpack.c.bf16 %v4298, %v4298
    %v4383 = vpack.c.bf16 %v4300, %v4300
    %v4384 = vpack.c.bf16 %v4308, %v4308
    %v4385 = vpack.c.bf16 %v4316, %v4316
    %v4386 = vpack.c.bf16 %v4315, %v4315
    %v4387 = vpack.c.bf16 %v4317, %v4317
    %v4388 = vpack.c.bf16 %v4325, %v4325
    %v4389 = vpack.c.bf16 %v4333, %v4333
    %v4390 = vpack.c.bf16 %v4332, %v4332
    %v4391 = vpack.c.bf16 %v4334, %v4334
    %v4392 = vpack.c.bf16 %v4341, %v4341
    %v4417 = vunpack.c.l.b16 %v4369
    %v4418 = vunpack.c.l.b16 %v4370
    %v4419 = vunpack.c.l.b16 %v4371
    %v4420 = vunpack.c.l.b16 %v4372
    %v4421 = vunpack.c.l.b16 %v4373
    %v4422 = vunpack.c.l.b16 %v4374
    %v4423 = vunpack.c.l.b16 %v4375
    %v4424 = vunpack.c.l.b16 %v4376
    %v4425 = vunpack.c.l.b16 %v4377
    %v4426 = vunpack.c.l.b16 %v4378
    %v4427 = vunpack.c.l.b16 %v4379
    %v4428 = vunpack.c.l.b16 %v4380
    %v4429 = vunpack.c.l.b16 %v4381
    %v4430 = vunpack.c.l.b16 %v4382
    %v4431 = vunpack.c.l.b16 %v4383
    %v4432 = vunpack.c.l.b16 %v4384
    %v4433 = vunpack.c.l.b16 %v4385
    %v4434 = vunpack.c.l.b16 %v4386
    %v4435 = vunpack.c.l.b16 %v4387
    %v4436 = vunpack.c.l.b16 %v4388
    %v4437 = vunpack.c.l.b16 %v4389
    %v4438 = vunpack.c.l.b16 %v4390
    %v4439 = vunpack.c.l.b16 %v4391
    %v4440 = vunpack.c.l.b16 %v4392
    %v4441 = vrot.slane %v4417, 1
    %v4442 = vsel %vm2954, %v4418, %v4441
    %v4443 = vrot.slane %v4419, 7
    %v4444 = vsel %vm2957, %v4443, %v4442
    %v4445 = vrot.slane %v4420, 6
    %v4446 = vsel %vm2960, %v4445, %v4444
    %v4447 = vrot.slane %v4421, 5
    %v4448 = vsel %vm2963, %v4447, %v4446
    %v4449 = vrot.slane %v4422, 4
    %v4450 = vsel %vm2966, %v4449, %v4448
    %v4451 = vrot.slane %v4423, 3
    %v4452 = vsel %vm2969, %v4451, %v4450
    %v4453 = vrot.slane %v4424, 2
    %v4454 = vsel %vm2972, %v4453, %v4452
    %v4455 = vrot.slane %v4425, 1
    %v4456 = vsel %vm2954, %v4426, %v4455
    %v4457 = vrot.slane %v4427, 7
    %v4458 = vsel %vm2957, %v4457, %v4456
    %v4459 = vrot.slane %v4428, 6
    %v4460 = vsel %vm2960, %v4459, %v4458
    %v4461 = vrot.slane %v4429, 5
    %v4462 = vsel %vm2963, %v4461, %v4460
    %v4463 = vrot.slane %v4430, 4
    %v4464 = vsel %vm2966, %v4463, %v4462
    %v4465 = vrot.slane %v4431, 3
    %v4466 = vsel %vm2969, %v4465, %v4464
    %v4467 = vrot.slane %v4432, 2
    %v4468 = vsel %vm2972, %v4467, %v4466
    %v4469 = vrot.slane %v4433, 1
    %v4470 = vsel %vm2954, %v4434, %v4469
    %v4471 = vrot.slane %v4435, 7
    %v4472 = vsel %vm2957, %v4471, %v4470
    %v4473 = vrot.slane %v4436, 6
    %v4474 = vsel %vm2960, %v4473, %v4472
    %v4475 = vrot.slane %v4437, 5
    %v4476 = vsel %vm2963, %v4475, %v4474
    %v4477 = vrot.slane %v4438, 4
    %v4478 = vsel %vm2966, %v4477, %v4476
    %v4479 = vrot.slane %v4439, 3
    %v4480 = vsel %vm2969, %v4479, %v4478
    %v4481 = vrot.slane %v4440, 2
    %v4482 = vsel %vm2972, %v4481, %v4480
    %v4483 = vpack.c.b16 %v4468, %v4454
    %v4484 = vpack.c.b16 %v4482, %v4482
    %v4489 = vunpack.c.l.b16 %v4218
    %v4490 = vunpack.c.l.b16 %v4219
    %v4491 = vunpack.c.l.b16 %v4220
    %v4492 = vunpack.c.l.b16 %v4221
    %v4493 = vpack.c.b16 %v4490, %v4489
    %v4494 = vpack.c.b16 %v4492, %v4491
    %v4498 = vsel %vm4118, %v4483, 0
    %v4501 = vsel %vm4118, %v4484, 0
    %4503 = vmatprep.subr.bf16.mxu0 0
    %4504 = vmatpush1.bf16.msra.mxu0 0
    %4505 = vmatprep.subr.bf16.mxu0 0
    %4506 = vmatpush1.bf16.msra.mxu0 0
    %4507 = vmatprep.subr.bf16.mxu0 0
    %4508 = vmatpush1.bf16.msra.mxu0 0
    %4509 = vmatprep.subr.bf16.mxu0 0
    %4510 = vmatpush1.bf16.msra.mxu0 0
    %4511 = vmatprep.subr.bf16.mxu0 0
    %4512 = vmatpush1.bf16.msra.mxu0 0
    %4513 = vmatprep.subr.bf16.mxu0 0
    %4514 = vmatpush1.bf16.msra.mxu0 0
    %4515 = vmatprep.subr.bf16.mxu0 0
    %4516 = vmatpush1.bf16.msra.mxu0 %v4494
    %4517 = vmatprep.subr.bf16.mxu0 0
    %4518 = vmatpush1.bf16.msra.mxu0 %v4493
    %4519 = vmatprep.subr.bf16.mxu0 0
    %4520 = vmatpush2.bf16.msra.mxu0 0
    %4521 = vmatprep.subr.bf16.mxu0 0
    %4522 = vmatpush2.bf16.msra.mxu0 0
    %4523 = vmatprep.subr.bf16.mxu0 0
    %4524 = vmatpush2.bf16.msra.mxu0 0
    %4525 = vmatprep.subr.bf16.mxu0 0
    %4526 = vmatpush2.bf16.msra.mxu0 0
    %4527 = vmatprep.subr.bf16.mxu0 0
    %4528 = vmatpush2.bf16.msra.mxu0 0
    %4529 = vmatprep.subr.bf16.mxu0 0
    %4530 = vmatpush2.bf16.msra.mxu0 0
    %4531 = vmatprep.subr.bf16.mxu0 0
    %4532 = vmatpush2.bf16.msra.mxu0 0
    %4533 = vmatprep.subr.bf16.mxu0 0
    %4534 = vmatpush2.bf16.msra.mxu0 0
    %4535 = vmatprep.mubr.bf16.mxu0 0
    %4536 = vmatmul.mubr.bf16.gmra.mxu0 %v4498
    %v4537 = vpop.f32.mrf.mxu0
    %v4538 = vadd.f32 0.0, %v4537
    %v4539 = vpop.f32.mrf.mxu0
    %v4540 = vpop.f32.mrf.mxu0
    %v4541 = vadd.f32 0.0, %v4540
    %v4542 = vpop.f32.mrf.mxu0
    %4543 = vmatprep.mubr.bf16.mxu0 0
    %4544 = vmatmul.mubr.bf16.gmra.mxu0 %v4501
    %v4545 = vpop.f32.mrf.mxu0
    %v4546 = vadd.f32 0.0, %v4545
    %v4547 = vpop.f32.mrf.mxu0
    %v4548 = vpop.f32.mrf.mxu0
    %v4549 = vpop.f32.mrf.mxu0
    %4550 = vdwg.mxu0
    %v4551 = vrot.slane %v4418, 7
    %v4552 = vsel %vm2954, %v4551, %v4417
    %v4553 = vrot.slane %v4419, 6
    %v4554 = vsel %vm2957, %v4553, %v4552
    %v4555 = vrot.slane %v4420, 5
    %v4556 = vsel %vm2960, %v4555, %v4554
    %v4557 = vrot.slane %v4421, 4
    %v4558 = vsel %vm2963, %v4557, %v4556
    %v4559 = vrot.slane %v4422, 3
    %v4560 = vsel %vm2966, %v4559, %v4558
    %v4561 = vrot.slane %v4423, 2
    %v4562 = vsel %vm2969, %v4561, %v4560
    %v4563 = vrot.slane %v4424, 1
    %v4564 = vsel %vm2972, %v4563, %v4562
    %v4565 = vrot.slane %v4426, 7
    %v4566 = vsel %vm2954, %v4565, %v4425
    %v4567 = vrot.slane %v4427, 6
    %v4568 = vsel %vm2957, %v4567, %v4566
    %v4569 = vrot.slane %v4428, 5
    %v4570 = vsel %vm2960, %v4569, %v4568
    %v4571 = vrot.slane %v4429, 4
    %v4572 = vsel %vm2963, %v4571, %v4570
    %v4573 = vrot.slane %v4430, 3
    %v4574 = vsel %vm2966, %v4573, %v4572
    %v4575 = vrot.slane %v4431, 2
    %v4576 = vsel %vm2969, %v4575, %v4574
    %v4577 = vrot.slane %v4432, 1
    %v4578 = vsel %vm2972, %v4577, %v4576
    %v4579 = vrot.slane %v4434, 7
    %v4580 = vsel %vm2954, %v4579, %v4433
    %v4581 = vrot.slane %v4435, 6
    %v4582 = vsel %vm2957, %v4581, %v4580
    %v4583 = vrot.slane %v4436, 5
    %v4584 = vsel %vm2960, %v4583, %v4582
    %v4585 = vrot.slane %v4437, 4
    %v4586 = vsel %vm2963, %v4585, %v4584
    %v4587 = vrot.slane %v4438, 3
    %v4588 = vsel %vm2966, %v4587, %v4586
    %v4589 = vrot.slane %v4439, 2
    %v4590 = vsel %vm2969, %v4589, %v4588
    %v4591 = vrot.slane %v4440, 1
    %v4592 = vsel %vm2972, %v4591, %v4590
    %v4593 = vpack.c.b16 %v4578, %v4564
    %v4594 = vpack.c.b16 %v4592, %v4592
    %v4599 = vunpack.c.l.b16 %v4214
    %v4600 = vunpack.c.l.b16 %v4215
    %v4601 = vunpack.c.l.b16 %v4216
    %v4602 = vunpack.c.l.b16 %v4217
    %v4603 = vpack.c.b16 %v4600, %v4599
    %v4604 = vpack.c.b16 %v4602, %v4601
    %v4608 = vsel %vm4118, %v4593, 0
    %v4611 = vsel %vm4118, %v4594, 0
    %4613 = vmatprep.subr.bf16.mxu0 0
    %4614 = vmatpush1.bf16.msra.mxu0 0
    %4615 = vmatprep.subr.bf16.mxu0 0
    %4616 = vmatpush1.bf16.msra.mxu0 0
    %4617 = vmatprep.subr.bf16.mxu0 0
    %4618 = vmatpush1.bf16.msra.mxu0 0
    %4619 = vmatprep.subr.bf16.mxu0 0
    %4620 = vmatpush1.bf16.msra.mxu0 0
    %4621 = vmatprep.subr.bf16.mxu0 0
    %4622 = vmatpush1.bf16.msra.mxu0 0
    %4623 = vmatprep.subr.bf16.mxu0 0
    %4624 = vmatpush1.bf16.msra.mxu0 0
    %4625 = vmatprep.subr.bf16.mxu0 0
    %4626 = vmatpush1.bf16.msra.mxu0 %v4604
    %4627 = vmatprep.subr.bf16.mxu0 0
    %4628 = vmatpush1.bf16.msra.mxu0 %v4603
    %4629 = vmatprep.subr.bf16.mxu0 0
    %4630 = vmatpush2.bf16.msra.mxu0 0
    %4631 = vmatprep.subr.bf16.mxu0 0
    %4632 = vmatpush2.bf16.msra.mxu0 0
    %4633 = vmatprep.subr.bf16.mxu0 0
    %4634 = vmatpush2.bf16.msra.mxu0 0
    %4635 = vmatprep.subr.bf16.mxu0 0
    %4636 = vmatpush2.bf16.msra.mxu0 0
    %4637 = vmatprep.subr.bf16.mxu0 0
    %4638 = vmatpush2.bf16.msra.mxu0 0
    %4639 = vmatprep.subr.bf16.mxu0 0
    %4640 = vmatpush2.bf16.msra.mxu0 0
    %4641 = vmatprep.subr.bf16.mxu0 0
    %4642 = vmatpush2.bf16.msra.mxu0 0
    %4643 = vmatprep.subr.bf16.mxu0 0
    %4644 = vmatpush2.bf16.msra.mxu0 0
    %4645 = vmatprep.mubr.bf16.mxu0 0
    %4646 = vmatmul.mubr.bf16.gmra.mxu0 %v4608
    %v4647 = vpop.f32.mrf.mxu0
    %v4648 = vadd.f32 %v4538, %v4647
    %v4649 = vpop.f32.mrf.mxu0
    %v4650 = vpop.f32.mrf.mxu0
    %v4651 = vadd.f32 %v4541, %v4650
    %v4652 = vpop.f32.mrf.mxu0
    %4653 = vmatprep.mubr.bf16.mxu0 0
    %4654 = vmatmul.mubr.bf16.gmra.mxu0 %v4611
    %v4655 = vpop.f32.mrf.mxu0
    %v4656 = vadd.f32 %v4546, %v4655
    %v4657 = vpop.f32.mrf.mxu0
    %v4658 = vpop.f32.mrf.mxu0
    %v4659 = vpop.f32.mrf.mxu0
    %4660 = vdwg.mxu0
    %v4661 = vpack.c.bf16 %v4291, %v4291
    %v4662 = vpack.c.bf16 %v4342, %v4342
    %v4665 = vunpack.c.l.b16 %v4661
    %v4666 = vunpack.c.l.b16 %v4662
    %v4667 = vsel %vm2954, %v4443, %v4418
    %v4668 = vsel %vm2957, %v4445, %v4667
    %v4669 = vsel %vm2960, %v4447, %v4668
    %v4670 = vsel %vm2963, %v4449, %v4669
    %v4671 = vsel %vm2966, %v4451, %v4670
    %v4672 = vsel %vm2969, %v4453, %v4671
    %v4673 = vsel %vm2972, %v4455, %v4672
    %v4674 = vsel %vm2954, %v4457, %v4426
    %v4675 = vsel %vm2957, %v4459, %v4674
    %v4676 = vrot.slane %v4665, 5
    %v4677 = vsel %vm2960, %v4676, %v4675
    %v4678 = vsel %vm2963, %v4463, %v4677
    %v4679 = vsel %vm2966, %v4465, %v4678
    %v4680 = vsel %vm2969, %v4467, %v4679
    %v4681 = vsel %vm2972, %v4469, %v4680
    %v4682 = vsel %vm2954, %v4471, %v4434
    %v4683 = vsel %vm2957, %v4473, %v4682
    %v4684 = vsel %vm2960, %v4475, %v4683
    %v4685 = vsel %vm2963, %v4477, %v4684
    %v4686 = vsel %vm2966, %v4479, %v4685
    %v4687 = vsel %vm2969, %v4481, %v4686
    %v4688 = vrot.slane %v4666, 1
    %v4689 = vsel %vm2972, %v4688, %v4687
    %v4690 = vpack.c.b16 %v4681, %v4673
    %v4691 = vpack.c.b16 %v4689, %v4689
    %v4696 = vunpack.c.l.b16 %v4222
    %v4697 = vunpack.c.l.b16 %v4223
    %v4698 = vunpack.c.l.b16 %v4224
    %v4699 = vunpack.c.l.b16 %v4225
    %v4700 = vpack.c.b16 %v4697, %v4696
    %v4701 = vpack.c.b16 %v4699, %v4698
    %v4705 = vsel %vm4118, %v4690, 0
    %v4708 = vsel %vm4118, %v4691, 0
    %4710 = vmatprep.subr.bf16.mxu0 0
    %4711 = vmatpush1.bf16.msra.mxu0 0
    %4712 = vmatprep.subr.bf16.mxu0 0
    %4713 = vmatpush1.bf16.msra.mxu0 0
    %4714 = vmatprep.subr.bf16.mxu0 0
    %4715 = vmatpush1.bf16.msra.mxu0 0
    %4716 = vmatprep.subr.bf16.mxu0 0
    %4717 = vmatpush1.bf16.msra.mxu0 0
    %4718 = vmatprep.subr.bf16.mxu0 0
    %4719 = vmatpush1.bf16.msra.mxu0 0
    %4720 = vmatprep.subr.bf16.mxu0 0
    %4721 = vmatpush1.bf16.msra.mxu0 0
    %4722 = vmatprep.subr.bf16.mxu0 0
    %4723 = vmatpush1.bf16.msra.mxu0 %v4701
    %4724 = vmatprep.subr.bf16.mxu0 0
    %4725 = vmatpush1.bf16.msra.mxu0 %v4700
    %4726 = vmatprep.subr.bf16.mxu0 0
    %4727 = vmatpush2.bf16.msra.mxu0 0
    %4728 = vmatprep.subr.bf16.mxu0 0
    %4729 = vmatpush2.bf16.msra.mxu0 0
    %4730 = vmatprep.subr.bf16.mxu0 0
    %4731 = vmatpush2.bf16.msra.mxu0 0
    %4732 = vmatprep.subr.bf16.mxu0 0
    %4733 = vmatpush2.bf16.msra.mxu0 0
    %4734 = vmatprep.subr.bf16.mxu0 0
    %4735 = vmatpush2.bf16.msra.mxu0 0
    %4736 = vmatprep.subr.bf16.mxu0 0
    %4737 = vmatpush2.bf16.msra.mxu0 0
    %4738 = vmatprep.subr.bf16.mxu0 0
    %4739 = vmatpush2.bf16.msra.mxu0 0
    %4740 = vmatprep.subr.bf16.mxu0 0
    %4741 = vmatpush2.bf16.msra.mxu0 0
    %4742 = vmatprep.mubr.bf16.mxu0 0
    %4743 = vmatmul.mubr.bf16.gmra.mxu0 %v4705
    %v4744 = vpop.f32.mrf.mxu0
    %v4745 = vadd.f32 0.0, %v4744
    %v4746 = vpop.f32.mrf.mxu0
    %v4747 = vpop.f32.mrf.mxu0
    %v4748 = vadd.f32 0.0, %v4747
    %v4749 = vpop.f32.mrf.mxu0
    %4750 = vmatprep.mubr.bf16.mxu0 0
    %4751 = vmatmul.mubr.bf16.gmra.mxu0 %v4708
    %v4752 = vpop.f32.mrf.mxu0
    %v4753 = vadd.f32 0.0, %v4752
    %v4754 = vpop.f32.mrf.mxu0
    %v4755 = vpop.f32.mrf.mxu0
    %v4756 = vpop.f32.mrf.mxu0
    %4757 = vdwg.mxu0
    %v4758 = vadd.f32 %v4648, %v4745
    %v4759 = vadd.f32 %v4651, %v4748
    %v4760 = vadd.f32 %v4656, %v4753
    %v4761 = vld [vmem:[%s8] sm:$0x1]
    %v4762 = vld [vmem:[%s9] sm:$0x1]
    %vm4763 = vcmask 523264
    %v4764 = vsel %vm4763, %v4758, 0.0
    %v4765 = vsel %vm4763, %v4759, 0.0
    %v4766 = vadd.f32 %v4764, %v4765
    %v4767 = vsel %vm4763, %v4760, 0.0
    %v4768 = vadd.f32 %v4766, %v4767
    %v4769 = vrot.slane %v4768, 4
    %v4770 = vadd.f32 %v4768, %v4769
    %v4771 = vrot.slane %v4770, 2
    %v4772 = vadd.f32 %v4770, %v4771
    %v4773 = vrot.slane %v4772, 1
    %v4774 = vadd.f32 %v4772, %v4773
    %v4775 = vmul.f32 %v4758, %v4758
    %v4776 = vmul.f32 %v4759, %v4759
    %v4777 = vmul.f32 %v4760, %v4760
    %v4778 = vsel %vm4763, %v4775, 0.0
    %v4779 = vsel %vm4763, %v4776, 0.0
    %v4780 = vadd.f32 %v4778, %v4779
    %v4781 = vsel %vm4763, %v4777, 0.0
    %v4782 = vadd.f32 %v4780, %v4781
    %v4783 = vrot.slane %v4782, 4
    %v4784 = vadd.f32 %v4782, %v4783
    %v4785 = vrot.slane %v4784, 2
    %v4786 = vadd.f32 %v4784, %v4785
    %v4787 = vrot.slane %v4786, 1
    %v4788 = vadd.f32 %v4786, %v4787
    %v4789 = vmul.f32 %v4774, 0.041666668
    %v4790 = vmul.f32 %v4788, 0.041666668
    %v4791 = vmul.f32 %v4789, %v4789
    %v4792 = vsub.f32 %v4790, %v4791
    %v4793 = vadd.f32 %v4792, 1e-05
    %v4794 = vrsqrt.pop %v4793
    %v4795 = vmul.f32 %v4761, %v4794
    %v4796 = vmul.f32 %v4789, %v4795
    %v4797 = vsub.f32 %v4762, %v4796
    %v4799 = vlaneseq
    %v4800 = vshrl.u32 %v4799, 7
    %v4801 = vsub.s32 0, %v4800
    %v4802 = vrot.slane %v4795, %v4801
    %v4804 = vmul.f32 %v4758, %v4802
    %v4805 = vmul.f32 %v4759, %v4802
    %v4806 = vmul.f32 %v4760, %v4802
    %v4808 = vlaneseq
    %v4809 = vshrl.u32 %v4808, 7
    %v4810 = vsub.s32 0, %v4809
    %v4811 = vrot.slane %v4797, %v4810
    %v4813 = vadd.f32 %v4804, %v4811
    %v4814 = vadd.f32 %v4805, %v4811
    %v4815 = vadd.f32 %v4806, %v4811
    %v4816 = vmul.f32 %v4813, 0.1
    %v4817 = vmul.f32 %v4814, 0.1
    %v4818 = vmul.f32 %v4815, 0.1
    %v4819 = vmax.f32 %v4813, %v4816
    %v4820 = vmax.f32 %v4814, %v4817
    %v4821 = vmax.f32 %v4815, %v4818
    %v4822 = vld [vmem:[%s10] sm:$0xf]
    %v4823 = vld [vmem:[%s10 + $0x4] sm:$0xf]
    %v4824 = vld [vmem:[%s10 + $0x8] sm:$0xf]
    %v4825 = vld [vmem:[%s10 + $0xc] sm:$0xf]
    %v4826 = vld [vmem:[%s10 + $0x10] sm:$0xf]
    %v4827 = vld [vmem:[%s10 + $0x14] sm:$0xf]
    %v4828 = vld [vmem:[%s10 + $0x18] sm:$0xf]
    %v4829 = vld [vmem:[%s10 + $0x1c] sm:$0xf]
    %v4830 = vld [vmem:[%s10 + $0x20] sm:$0xf]
    %v4831 = vld [vmem:[%s10 + $0x24] sm:$0xf]
    %v4832 = vld [vmem:[%s10 + $0x28] sm:$0xf]
    %v4833 = vld [vmem:[%s10 + $0x2c] sm:$0xf]
    %v4834 = vld [vmem:[%s10 + $0x30] sm:$0xf]
    %v4835 = vld [vmem:[%s10 + $0x34] sm:$0xf]
    %v4836 = vld [vmem:[%s10 + $0x38] sm:$0xf]
    %v4837 = vld [vmem:[%s10 + $0x3c] sm:$0xf]
    %v4838 = vld [vmem:[%s10 + $0x40] sm:$0xf]
    %v4839 = vld [vmem:[%s10 + $0x44] sm:$0xf]
    %v4840 = vld [vmem:[%s10 + $0x48] sm:$0xf]
    %v4841 = vld [vmem:[%s10 + $0x4c] sm:$0xf]
    %v4842 = vld [vmem:[%s10 + $0x50] sm:$0xf]
    %v4843 = vld [vmem:[%s10 + $0x54] sm:$0xf]
    %v4844 = vld [vmem:[%s10 + $0x58] sm:$0xf]
    %v4845 = vld [vmem:[%s10 + $0x5c] sm:$0xf]
    %v4849 = vcombine.high %v4819, %v4819
    %v4851 = vunpack.c.l.s4 1983009808
    %v4852 = vunpack.c.0.s8 %v4851
    %v4853 = vlaneseq
    %v4854 = vshrl.u32 %v4853, 7
    %v4855 = vsub.s32 %v4852, %v4854
    %v4856 = vrot.slane %v4819, %v4855
    %v4858 = vunpack.c.l.s4 1983009808
    %v4859 = vunpack.c.0.s8 %v4858
    %v4860 = vlaneseq
    %v4861 = vshrl.u32 %v4860, 7
    %v4862 = vsub.s32 %v4859, %v4861
    %v4863 = vrot.slane %v4849, %v4862
    %v4864 = vcombine.high %v4856, %v4856
    %v4865 = vcombine.high %v4863, %v4863
    %v4866 = vcombine.high %v4820, %v4820
    %v4868 = vunpack.c.l.s4 1983009808
    %v4869 = vunpack.c.0.s8 %v4868
    %v4870 = vlaneseq
    %v4871 = vshrl.u32 %v4870, 7
    %v4872 = vsub.s32 %v4869, %v4871
    %v4873 = vrot.slane %v4820, %v4872
    %v4875 = vunpack.c.l.s4 1983009808
    %v4876 = vunpack.c.0.s8 %v4875
    %v4877 = vlaneseq
    %v4878 = vshrl.u32 %v4877, 7
    %v4879 = vsub.s32 %v4876, %v4878
    %v4880 = vrot.slane %v4866, %v4879
    %v4881 = vcombine.high %v4873, %v4873
    %v4882 = vcombine.high %v4880, %v4880
    %v4883 = vcombine.high %v4821, %v4821
    %v4885 = vunpack.c.l.s4 1983009808
    %v4886 = vunpack.c.0.s8 %v4885
    %v4887 = vlaneseq
    %v4888 = vshrl.u32 %v4887, 7
    %v4889 = vsub.s32 %v4886, %v4888
    %v4890 = vrot.slane %v4821, %v4889
    %v4892 = vunpack.c.l.s4 1983009808
    %v4893 = vunpack.c.0.s8 %v4892
    %v4894 = vlaneseq
    %v4895 = vshrl.u32 %v4894, 7
    %v4896 = vsub.s32 %v4893, %v4895
    %v4897 = vrot.slane %v4883, %v4896
    %v4898 = vcombine.high %v4890, %v4890
    %v4899 = vcombine.high %v4897, %v4897
    %v4912 = vpack.c.bf16 %v4856, %v4856
    %v4913 = vpack.c.bf16 %v4864, %v4864
    %v4914 = vpack.c.bf16 %v4863, %v4863
    %v4915 = vpack.c.bf16 %v4865, %v4865
    %v4916 = vpack.c.bf16 %v4873, %v4873
    %v4917 = vpack.c.bf16 %v4880, %v4880
    %v4918 = vpack.c.bf16 %v4882, %v4882
    %v4919 = vpack.c.bf16 %v4890, %v4890
    %v4920 = vpack.c.bf16 %v4898, %v4898
    %v4921 = vpack.c.bf16 %v4897, %v4897
    %v4932 = vunpack.c.l.b16 %v4912
    %v4933 = vunpack.c.l.b16 %v4913
    %v4934 = vunpack.c.l.b16 %v4914
    %v4935 = vunpack.c.l.b16 %v4915
    %v4936 = vunpack.c.l.b16 %v4916
    %v4937 = vunpack.c.l.b16 %v4917
    %v4938 = vunpack.c.l.b16 %v4918
    %v4939 = vunpack.c.l.b16 %v4919
    %v4940 = vunpack.c.l.b16 %v4920
    %v4941 = vunpack.c.l.b16 %v4921
    %v4942 = vrot.slane %v4932, 1
    %v4943 = vsel %vm2954, %v4933, %v4942
    %v4944 = vrot.slane %v4934, 7
    %v4945 = vsel %vm2957, %v4944, %v4943
    %v4946 = vrot.slane %v4935, 6
    %v4947 = vsel %vm2960, %v4946, %v4945
    %v4948 = vrot.slane %v4936, 5
    %v4949 = vsel %vm2963, %v4948, %v4947
    %v4950 = vrot.slane %v4937, 4
    %v4951 = vsel %vm2966, %v4950, %v4949
    %v4952 = vrot.slane %v4938, 3
    %v4953 = vsel %vm2969, %v4952, %v4951
    %v4954 = vrot.slane %v4939, 2
    %v4955 = vsel %vm2972, %v4954, %v4953
    %v4956 = vrot.slane %v4940, 1
    %v4957 = vsel %vm2954, %v4941, %v4956
    %v4958 = vpack.c.b16 %v4957, %v4955
    %v4967 = vunpack.c.l.b16 %v4830
    %v4968 = vunpack.c.l.b16 %v4831
    %v4969 = vunpack.c.l.b16 %v4832
    %v4970 = vunpack.c.l.b16 %v4833
    %v4971 = vunpack.c.l.b16 %v4834
    %v4972 = vunpack.c.l.b16 %v4835
    %v4973 = vunpack.c.l.b16 %v4836
    %v4974 = vunpack.c.l.b16 %v4837
    %v4975 = vpack.c.b16 %v4968, %v4967
    %v4976 = vpack.c.b16 %v4970, %v4969
    %v4977 = vpack.c.b16 %v4972, %v4971
    %v4978 = vpack.c.b16 %v4974, %v4973
    %v4984 = vsel %vm4763, %v4958, 0
    %4986 = vmatprep.subr.bf16.mxu0 0
    %4987 = vmatpush1.bf16.msra.mxu0 0
    %4988 = vmatprep.subr.bf16.mxu0 0
    %4989 = vmatpush1.bf16.msra.mxu0 0
    %4990 = vmatprep.subr.bf16.mxu0 0
    %4991 = vmatpush1.bf16.msra.mxu0 0
    %4992 = vmatprep.subr.bf16.mxu0 0
    %4993 = vmatpush1.bf16.msra.mxu0 0
    %4994 = vmatprep.subr.bf16.mxu0 0
    %4995 = vmatpush1.bf16.msra.mxu0 %v4978
    %4996 = vmatprep.subr.bf16.mxu0 0
    %4997 = vmatpush1.bf16.msra.mxu0 %v4977
    %4998 = vmatprep.subr.bf16.mxu0 0
    %4999 = vmatpush1.bf16.msra.mxu0 %v4976
    %5000 = vmatprep.subr.bf16.mxu0 0
    %5001 = vmatpush1.bf16.msra.mxu0 %v4975
    %5002 = vmatprep.subr.bf16.mxu0 0
    %5003 = vmatpush2.bf16.msra.mxu0 0
    %5004 = vmatprep.subr.bf16.mxu0 0
    %5005 = vmatpush2.bf16.msra.mxu0 0
    %5006 = vmatprep.subr.bf16.mxu0 0
    %5007 = vmatpush2.bf16.msra.mxu0 0
    %5008 = vmatprep.subr.bf16.mxu0 0
    %5009 = vmatpush2.bf16.msra.mxu0 0
    %5010 = vmatprep.subr.bf16.mxu0 0
    %5011 = vmatpush2.bf16.msra.mxu0 0
    %5012 = vmatprep.subr.bf16.mxu0 0
    %5013 = vmatpush2.bf16.msra.mxu0 0
    %5014 = vmatprep.subr.bf16.mxu0 0
    %5015 = vmatpush2.bf16.msra.mxu0 0
    %5016 = vmatprep.subr.bf16.mxu0 0
    %5017 = vmatpush2.bf16.msra.mxu0 0
    %5018 = vmatprep.mubr.bf16.mxu0 0
    %5019 = vmatmul.mubr.bf16.gmra.mxu0 %v4984
    %v5020 = vpop.f32.mrf.mxu0
    %v5021 = vadd.f32 0.0, %v5020
    %v5022 = vpop.f32.mrf.mxu0
    %v5023 = vpop.f32.mrf.mxu0
    %v5024 = vadd.f32 0.0, %v5023
    %v5025 = vpop.f32.mrf.mxu0
    %5026 = vdwg.mxu0
    %v5027 = vrot.slane %v4933, 7
    %v5028 = vsel %vm2954, %v5027, %v4932
    %v5029 = vrot.slane %v4934, 6
    %v5030 = vsel %vm2957, %v5029, %v5028
    %v5031 = vrot.slane %v4935, 5
    %v5032 = vsel %vm2960, %v5031, %v5030
    %v5033 = vrot.slane %v4936, 4
    %v5034 = vsel %vm2963, %v5033, %v5032
    %v5035 = vrot.slane %v4937, 3
    %v5036 = vsel %vm2966, %v5035, %v5034
    %v5037 = vrot.slane %v4938, 2
    %v5038 = vsel %vm2969, %v5037, %v5036
    %v5039 = vrot.slane %v4939, 1
    %v5040 = vsel %vm2972, %v5039, %v5038
    %v5041 = vrot.slane %v4941, 7
    %v5042 = vsel %vm2954, %v5041, %v4940
    %v5043 = vpack.c.b16 %v5042, %v5040
    %v5052 = vunpack.c.l.b16 %v4822
    %v5053 = vunpack.c.l.b16 %v4823
    %v5054 = vunpack.c.l.b16 %v4824
    %v5055 = vunpack.c.l.b16 %v4825
    %v5056 = vunpack.c.l.b16 %v4826
    %v5057 = vunpack.c.l.b16 %v4827
    %v5058 = vunpack.c.l.b16 %v4828
    %v5059 = vunpack.c.l.b16 %v4829
    %v5060 = vpack.c.b16 %v5053, %v5052
    %v5061 = vpack.c.b16 %v5055, %v5054
    %v5062 = vpack.c.b16 %v5057, %v5056
    %v5063 = vpack.c.b16 %v5059, %v5058
    %v5069 = vsel %vm4763, %v5043, 0
    %5071 = vmatprep.subr.bf16.mxu0 0
    %5072 = vmatpush1.bf16.msra.mxu0 0
    %5073 = vmatprep.subr.bf16.mxu0 0
    %5074 = vmatpush1.bf16.msra.mxu0 0
    %5075 = vmatprep.subr.bf16.mxu0 0
    %5076 = vmatpush1.bf16.msra.mxu0 0
    %5077 = vmatprep.subr.bf16.mxu0 0
    %5078 = vmatpush1.bf16.msra.mxu0 0
    %5079 = vmatprep.subr.bf16.mxu0 0
    %5080 = vmatpush1.bf16.msra.mxu0 %v5063
    %5081 = vmatprep.subr.bf16.mxu0 0
    %5082 = vmatpush1.bf16.msra.mxu0 %v5062
    %5083 = vmatprep.subr.bf16.mxu0 0
    %5084 = vmatpush1.bf16.msra.mxu0 %v5061
    %5085 = vmatprep.subr.bf16.mxu0 0
    %5086 = vmatpush1.bf16.msra.mxu0 %v5060
    %5087 = vmatprep.subr.bf16.mxu0 0
    %5088 = vmatpush2.bf16.msra.mxu0 0
    %5089 = vmatprep.subr.bf16.mxu0 0
    %5090 = vmatpush2.bf16.msra.mxu0 0
    %5091 = vmatprep.subr.bf16.mxu0 0
    %5092 = vmatpush2.bf16.msra.mxu0 0
    %5093 = vmatprep.subr.bf16.mxu0 0
    %5094 = vmatpush2.bf16.msra.mxu0 0
    %5095 = vmatprep.subr.bf16.mxu0 0
    %5096 = vmatpush2.bf16.msra.mxu0 0
    %5097 = vmatprep.subr.bf16.mxu0 0
    %5098 = vmatpush2.bf16.msra.mxu0 0
    %5099 = vmatprep.subr.bf16.mxu0 0
    %5100 = vmatpush2.bf16.msra.mxu0 0
    %5101 = vmatprep.subr.bf16.mxu0 0
    %5102 = vmatpush2.bf16.msra.mxu0 0
    %5103 = vmatprep.mubr.bf16.mxu0 0
    %5104 = vmatmul.mubr.bf16.gmra.mxu0 %v5069
    %v5105 = vpop.f32.mrf.mxu0
    %v5106 = vadd.f32 %v5021, %v5105
    %v5107 = vpop.f32.mrf.mxu0
    %v5108 = vpop.f32.mrf.mxu0
    %v5109 = vadd.f32 %v5024, %v5108
    %v5110 = vpop.f32.mrf.mxu0
    %5111 = vdwg.mxu0
    %v5112 = vpack.c.bf16 %v4881, %v4881
    %v5113 = vpack.c.bf16 %v4899, %v4899
    %v5116 = vunpack.c.l.b16 %v5112
    %v5117 = vunpack.c.l.b16 %v5113
    %v5118 = vsel %vm2954, %v4944, %v4933
    %v5119 = vsel %vm2957, %v4946, %v5118
    %v5120 = vsel %vm2960, %v4948, %v5119
    %v5121 = vrot.slane %v5116, 4
    %v5122 = vsel %vm2963, %v5121, %v5120
    %v5123 = vsel %vm2966, %v4952, %v5122
    %v5124 = vsel %vm2969, %v4954, %v5123
    %v5125 = vsel %vm2972, %v4956, %v5124
    %v5126 = vrot.slane %v5117, 7
    %v5127 = vsel %vm2954, %v5126, %v4941
    %v5128 = vpack.c.b16 %v5127, %v5125
    %v5137 = vunpack.c.l.b16 %v4838
    %v5138 = vunpack.c.l.b16 %v4839
    %v5139 = vunpack.c.l.b16 %v4840
    %v5140 = vunpack.c.l.b16 %v4841
    %v5141 = vunpack.c.l.b16 %v4842
    %v5142 = vunpack.c.l.b16 %v4843
    %v5143 = vunpack.c.l.b16 %v4844
    %v5144 = vunpack.c.l.b16 %v4845
    %v5145 = vpack.c.b16 %v5138, %v5137
    %v5146 = vpack.c.b16 %v5140, %v5139
    %v5147 = vpack.c.b16 %v5142, %v5141
    %v5148 = vpack.c.b16 %v5144, %v5143
    %v5154 = vsel %vm4763, %v5128, 0
    %5156 = vmatprep.subr.bf16.mxu0 0
    %5157 = vmatpush1.bf16.msra.mxu0 0
    %5158 = vmatprep.subr.bf16.mxu0 0
    %5159 = vmatpush1.bf16.msra.mxu0 0
    %5160 = vmatprep.subr.bf16.mxu0 0
    %5161 = vmatpush1.bf16.msra.mxu0 0
    %5162 = vmatprep.subr.bf16.mxu0 0
    %5163 = vmatpush1.bf16.msra.mxu0 0
    %5164 = vmatprep.subr.bf16.mxu0 0
    %5165 = vmatpush1.bf16.msra.mxu0 %v5148
    %5166 = vmatprep.subr.bf16.mxu0 0
    %5167 = vmatpush1.bf16.msra.mxu0 %v5147
    %5168 = vmatprep.subr.bf16.mxu0 0
    %5169 = vmatpush1.bf16.msra.mxu0 %v5146
    %5170 = vmatprep.subr.bf16.mxu0 0
    %5171 = vmatpush1.bf16.msra.mxu0 %v5145
    %5172 = vmatprep.subr.bf16.mxu0 0
    %5173 = vmatpush2.bf16.msra.mxu0 0
    %5174 = vmatprep.subr.bf16.mxu0 0
    %5175 = vmatpush2.bf16.msra.mxu0 0
    %5176 = vmatprep.subr.bf16.mxu0 0
    %5177 = vmatpush2.bf16.msra.mxu0 0
    %5178 = vmatprep.subr.bf16.mxu0 0
    %5179 = vmatpush2.bf16.msra.mxu0 0
    %5180 = vmatprep.subr.bf16.mxu0 0
    %5181 = vmatpush2.bf16.msra.mxu0 0
    %5182 = vmatprep.subr.bf16.mxu0 0
    %5183 = vmatpush2.bf16.msra.mxu0 0
    %5184 = vmatprep.subr.bf16.mxu0 0
    %5185 = vmatpush2.bf16.msra.mxu0 0
    %5186 = vmatprep.subr.bf16.mxu0 0
    %5187 = vmatpush2.bf16.msra.mxu0 0
    %5188 = vmatprep.mubr.bf16.mxu0 0
    %5189 = vmatmul.mubr.bf16.gmra.mxu0 %v5154
    %v5190 = vpop.f32.mrf.mxu0
    %v5191 = vadd.f32 0.0, %v5190
    %v5192 = vpop.f32.mrf.mxu0
    %v5193 = vpop.f32.mrf.mxu0
    %v5194 = vadd.f32 0.0, %v5193
    %v5195 = vpop.f32.mrf.mxu0
    %5196 = vdwg.mxu0
    %v5197 = vadd.f32 %v5106, %v5191
    %v5198 = vadd.f32 %v5109, %v5194
    %v5199 = vld [vmem:[%s11] sm:$0x1]
    %v5200 = vld [vmem:[%s12] sm:$0x1]
    %v5201 = vsel %vm4763, %v5197, 0.0
    %vm5202 = vcmask 517120
    %v5203 = vsel %vm5202, %v5198, 0.0
    %v5204 = vadd.f32 %v5201, %v5203
    %v5205 = vrot.slane %v5204, 4
    %v5206 = vadd.f32 %v5204, %v5205
    %v5207 = vrot.slane %v5206, 2
    %v5208 = vadd.f32 %v5206, %v5207
    %v5209 = vrot.slane %v5208, 1
    %v5210 = vadd.f32 %v5208, %v5209
    %v5211 = vmul.f32 %v5197, %v5197
    %v5212 = vmul.f32 %v5198, %v5198
    %v5213 = vsel %vm4763, %v5211, 0.0
    %v5214 = vsel %vm5202, %v5212, 0.0
    %v5215 = vadd.f32 %v5213, %v5214
    %v5216 = vrot.slane %v5215, 4
    %v5217 = vadd.f32 %v5215, %v5216
    %v5218 = vrot.slane %v5217, 2
    %v5219 = vadd.f32 %v5217, %v5218
    %v5220 = vrot.slane %v5219, 1
    %v5221 = vadd.f32 %v5219, %v5220
    %v5222 = vmul.f32 %v5210, 0.1
    %v5223 = vmul.f32 %v5221, 0.1
    %v5224 = vmul.f32 %v5222, %v5222
    %v5225 = vsub.f32 %v5223, %v5224
    %v5226 = vadd.f32 %v5225, 1e-05
    %v5227 = vrsqrt.pop %v5226
    %v5228 = vmul.f32 %v5199, %v5227
    %v5229 = vmul.f32 %v5222, %v5228
    %v5230 = vsub.f32 %v5200, %v5229
    %v5232 = vlaneseq
    %v5233 = vshrl.u32 %v5232, 7
    %v5234 = vsub.s32 0, %v5233
    %v5235 = vrot.slane %v5228, %v5234
    %v5237 = vmul.f32 %v5197, %v5235
    %v5238 = vmul.f32 %v5198, %v5235
    %v5240 = vlaneseq
    %v5241 = vshrl.u32 %v5240, 7
    %v5242 = vsub.s32 0, %v5241
    %v5243 = vrot.slane %v5230, %v5242
    %v5245 = vadd.f32 %v5237, %v5243
    %v5246 = vadd.f32 %v5238, %v5243
    %v5247 = vmul.f32 %v5245, 0.1
    %v5248 = vmul.f32 %v5246, 0.1
    %v5249 = vmax.f32 %v5245, %v5247
    %v5250 = vmax.f32 %v5246, %v5248
    %v5253 = vcombine.high %v5249, %v5249
    %v5255 = vunpack.c.l.s4 1966171168
    %v5256 = vunpack.c.0.s8 %v5255
    %v5257 = vlaneseq
    %v5258 = vshrl.u32 %v5257, 7
    %v5259 = vsub.s32 %v5256, %v5258
    %v5260 = vrot.slane %v5249, %v5259
    %v5262 = vunpack.c.l.s4 1966171168
    %v5263 = vunpack.c.0.s8 %v5262
    %v5264 = vlaneseq
    %v5265 = vshrl.u32 %v5264, 7
    %v5266 = vsub.s32 %v5263, %v5265
    %v5267 = vrot.slane %v5253, %v5266
    %v5268 = vcombine.high %v5260, %v5260
    %v5269 = vcombine.high %v5267, %v5267
    %v5271 = vunpack.c.l.s4 1966171168
    %v5272 = vunpack.c.0.s8 %v5271
    %v5273 = vlaneseq
    %v5274 = vshrl.u32 %v5273, 7
    %v5275 = vsub.s32 %v5272, %v5274
    %v5276 = vrot.slane %v5260, %v5275
    %v5278 = vunpack.c.l.s4 1966171168
    %v5279 = vunpack.c.0.s8 %v5278
    %v5280 = vlaneseq
    %v5281 = vshrl.u32 %v5280, 7
    %v5282 = vsub.s32 %v5279, %v5281
    %v5283 = vrot.slane %v5267, %v5282
    %v5285 = vunpack.c.l.s4 1966171168
    %v5286 = vunpack.c.0.s8 %v5285
    %v5287 = vlaneseq
    %v5288 = vshrl.u32 %v5287, 7
    %v5289 = vsub.s32 %v5286, %v5288
    %v5290 = vrot.slane %v5268, %v5289
    %v5292 = vunpack.c.l.s4 1966171168
    %v5293 = vunpack.c.0.s8 %v5292
    %v5294 = vlaneseq
    %v5295 = vshrl.u32 %v5294, 7
    %v5296 = vsub.s32 %v5293, %v5295
    %v5297 = vrot.slane %v5269, %v5296
    %v5298 = vcombine.high %v5276, %v5276
    %v5299 = vcombine.high %v5283, %v5283
    %v5300 = vcombine.high %v5290, %v5290
    %v5301 = vcombine.high %v5297, %v5297
    %v5303 = vunpack.c.l.s4 1966171168
    %v5304 = vunpack.c.0.s8 %v5303
    %v5305 = vlaneseq
    %v5306 = vshrl.u32 %v5305, 7
    %v5307 = vsub.s32 %v5304, %v5306
    %v5308 = vrot.slane %v5250, %v5307
    %v5309 = vcombine.high %v5308, %v5308
    %v5311 = vunpack.c.l.s4 1966171168
    %v5312 = vunpack.c.0.s8 %v5311
    %v5313 = vlaneseq
    %v5314 = vshrl.u32 %v5313, 7
    %v5315 = vsub.s32 %v5312, %v5314
    %v5316 = vrot.slane %v5308, %v5315
    %v5318 = vunpack.c.l.s4 1966171168
    %v5319 = vunpack.c.0.s8 %v5318
    %v5320 = vlaneseq
    %v5321 = vshrl.u32 %v5320, 7
    %v5322 = vsub.s32 %v5319, %v5321
    %v5323 = vrot.slane %v5309, %v5322
    %v5324 = vcombine.low %v5276, %v5290
    %v5325 = vcombine.low %v5298, %v5300
    %v5327 = vunpack.c.l.s4 1966171168
    %v5328 = vunpack.c.0.s8 %v5327
    %v5329 = vlaneseq
    %v5330 = vshrl.u32 %v5329, 7
    %v5331 = vsub.s32 %v5328, %v5330
    %v5332 = vrot.slane %v5324, %v5331
    %v5334 = vunpack.c.l.s4 1966171168
    %v5335 = vunpack.c.0.s8 %v5334
    %v5336 = vlaneseq
    %v5337 = vshrl.u32 %v5336, 7
    %v5338 = vsub.s32 %v5335, %v5337
    %v5339 = vrot.slane %v5325, %v5338
    %v5341 = vunpack.c.l.s4 1966171168
    %v5342 = vunpack.c.0.s8 %v5341
    %v5343 = vlaneseq
    %v5344 = vshrl.u32 %v5343, 7
    %v5345 = vsub.s32 %v5342, %v5344
    %v5346 = vrot.slane %v5283, %v5345
    %v5347 = vcombine.low %v5332, %v5339
    %v5349 = vunpack.c.l.s4 1966171168
    %v5350 = vunpack.c.0.s8 %v5349
    %v5351 = vlaneseq
    %v5352 = vshrl.u32 %v5351, 7
    %v5353 = vsub.s32 %v5350, %v5352
    %v5354 = vrot.slane %v5347, %v5353
    %v5356 = vunpack.c.l.s4 1966171168
    %v5357 = vunpack.c.0.s8 %v5356
    %v5358 = vlaneseq
    %v5359 = vshrl.u32 %v5358, 7
    %v5360 = vsub.s32 %v5357, %v5359
    %v5361 = vrot.slane %v5346, %v5360
    %v5362 = vcombine.low %v5354, %v5361
    %v5363 = vcombine.low %v5297, %v5299
    %v5364 = vcombine.low %v5301, %v5316
    %v5366 = vunpack.c.l.s4 1966171168
    %v5367 = vunpack.c.0.s8 %v5366
    %v5368 = vlaneseq
    %v5369 = vshrl.u32 %v5368, 7
    %v5370 = vsub.s32 %v5367, %v5369
    %v5371 = vrot.slane %v5363, %v5370
    %v5373 = vunpack.c.l.s4 1966171168
    %v5374 = vunpack.c.0.s8 %v5373
    %v5375 = vlaneseq
    %v5376 = vshrl.u32 %v5375, 7
    %v5377 = vsub.s32 %v5374, %v5376
    %v5378 = vrot.slane %v5364, %v5377
    %v5380 = vunpack.c.l.s4 1966171168
    %v5381 = vunpack.c.0.s8 %v5380
    %v5382 = vlaneseq
    %v5383 = vshrl.u32 %v5382, 7
    %v5384 = vsub.s32 %v5381, %v5383
    %v5385 = vrot.slane %v5323, %v5384
    %v5386 = vcombine.low %v5371, %v5378
    %v5388 = vunpack.c.l.s4 1966171168
    %v5389 = vunpack.c.0.s8 %v5388
    %v5390 = vlaneseq
    %v5391 = vshrl.u32 %v5390, 7
    %v5392 = vsub.s32 %v5389, %v5391
    %v5393 = vrot.slane %v5386, %v5392
    %v5395 = vunpack.c.l.s4 1966171168
    %v5396 = vunpack.c.0.s8 %v5395
    %v5397 = vlaneseq
    %v5398 = vshrl.u32 %v5397, 7
    %v5399 = vsub.s32 %v5396, %v5398
    %v5400 = vrot.slane %v5385, %v5399
    %v5401 = vcombine.low %v5393, %v5400
    %vm5404 = vcmask 520192
    %v5405 = vsel %vm5404, %v5362, 0.0
    %v5406 = vrot.slane %v5405, 4
    %v5407 = vadd.f32 %v5405, %v5406
    %v5408 = vrot.slane %v5407, 2
    %v5409 = vadd.f32 %v5407, %v5408
    %v5410 = vrot.slane %v5409, 1
    %v5411 = vadd.f32 %v5409, %v5410
    %v5412 = vsel %vm5404, %v5401, 0.0
    %v5413 = vrot.slane %v5412, 4
    %v5414 = vadd.f32 %v5412, %v5413
    %v5415 = vrot.slane %v5414, 2
    %v5416 = vadd.f32 %v5414, %v5415
    %v5417 = vrot.slane %v5416, 1
    %v5418 = vadd.f32 %v5416, %v5417
    %v5419 = vmul.f32 %v5411, 0.2
    %v5420 = vmul.f32 %v5418, 0.2
    %v5421 = vpack.c.bf16 %v5419, %v5419
    %v5422 = vpack.c.bf16 %v5420, %v5420
    %v5423 = vld [vmem:[%s13] sm:$0xf]
    %v5424 = vld [vmem:[%s13 + $0x4] sm:$0xf]
    %v5425 = vld [vmem:[%s13 + $0x8] sm:$0xf]
    %v5426 = vld [vmem:[%s13 + $0xc] sm:$0xf]
    %v5427 = vld [vmem:[%s13 + $0x10] sm:$0xf]
    %v5428 = vld [vmem:[%s13 + $0x14] sm:$0xf]
    %v5429 = vld [vmem:[%s13 + $0x18] sm:$0xf]
    %v5430 = vld [vmem:[%s13 + $0x1c] sm:$0xf]
    %v5431 = vld [vmem:[%s14] sm:$0x1]
    %v5433 = vlaneseq
    %v5434 = vshrl.u32 %v5433, 7
    %v5435 = vsub.s32 0, %v5434
    %v5436 = vrot.slane %v5431, %v5435
    %v5440 = vunpack.c.l.b16 %v5421
    %v5441 = vunpack.c.l.b16 %v5422
    %v5442 = vsel %vm2954, %v5441, %v5440
    %v5443 = vpack.c.b16 %v5442, %v5442
    %v5452 = vunpack.c.l.b16 %v5423
    %v5453 = vunpack.c.l.b16 %v5424
    %v5454 = vunpack.c.l.b16 %v5425
    %v5455 = vunpack.c.l.b16 %v5426
    %v5456 = vunpack.c.l.b16 %v5427
    %v5457 = vunpack.c.l.b16 %v5428
    %v5458 = vunpack.c.l.b16 %v5429
    %v5459 = vunpack.c.l.b16 %v5430
    %v5460 = vpack.c.b16 %v5453, %v5452
    %v5461 = vpack.c.b16 %v5455, %v5454
    %v5462 = vpack.c.b16 %v5457, %v5456
    %v5463 = vpack.c.b16 %v5459, %v5458
    %v5469 = vsel %vm4763, %v5443, 0
    %5471 = vmatprep.subr.bf16.mxu0 0
    %5472 = vmatpush1.bf16.msra.mxu0 0
    %5473 = vmatprep.subr.bf16.mxu0 0
    %5474 = vmatpush1.bf16.msra.mxu0 0
    %5475 = vmatprep.subr.bf16.mxu0 0
    %5476 = vmatpush1.bf16.msra.mxu0 0
    %5477 = vmatprep.subr.bf16.mxu0 0
    %5478 = vmatpush1.bf16.msra.mxu0 0
    %5479 = vmatprep.subr.bf16.mxu0 0
    %5480 = vmatpush1.bf16.msra.mxu0 %v5463
    %5481 = vmatprep.subr.bf16.mxu0 0
    %5482 = vmatpush1.bf16.msra.mxu0 %v5462
    %5483 = vmatprep.subr.bf16.mxu0 0
    %5484 = vmatpush1.bf16.msra.mxu0 %v5461
    %5485 = vmatprep.subr.bf16.mxu0 0
    %5486 = vmatpush1.bf16.msra.mxu0 %v5460
    %5487 = vmatprep.subr.bf16.mxu0 0
    %5488 = vmatpush2.bf16.msra.mxu0 0
    %5489 = vmatprep.subr.bf16.mxu0 0
    %5490 = vmatpush2.bf16.msra.mxu0 0
    %5491 = vmatprep.subr.bf16.mxu0 0
    %5492 = vmatpush2.bf16.msra.mxu0 0
    %5493 = vmatprep.subr.bf16.mxu0 0
    %5494 = vmatpush2.bf16.msra.mxu0 0
    %5495 = vmatprep.subr.bf16.mxu0 0
    %5496 = vmatpush2.bf16.msra.mxu0 0
    %5497 = vmatprep.subr.bf16.mxu0 0
    %5498 = vmatpush2.bf16.msra.mxu0 0
    %5499 = vmatprep.subr.bf16.mxu0 0
    %5500 = vmatpush2.bf16.msra.mxu0 0
    %5501 = vmatprep.subr.bf16.mxu0 0
    %5502 = vmatpush2.bf16.msra.mxu0 0
    %5503 = vmatprep.mubr.bf16.mxu0 0
    %5504 = vmatmul.mubr.bf16.gmra.mxu0 %v5469
    %v5505 = vpop.f32.mrf.mxu0
    %v5506 = vadd.f32 %v5436, %v5505
    %v5507 = vpop.f32.mrf.mxu0
    %v5508 = vpop.f32.mrf.mxu0
    %v5509 = vpop.f32.mrf.mxu0
    %5510 = vdwg.mxu0
    %vm5511 = vcmask 123904
    %5512 = vst.msk [vmem:[#allocation2] sm:$0x3] %vm5511, %v5506
    // Predicated region
    $region62: #{tpu_custom_call.1} parent=1 // pred_check
      _
    $region63: #{tpu_custom_call.1} parent=1 // pred_check_branch
      %5514 = sbr.rel (0) target = $region65
    $region64: #{tpu_custom_call.1} parent=1 // pred_region
      %s5516 = ssub.s32 32, 32
      %5517 = vsyncadd [#allocation3], %s5516
      %s5519 = sshll.u32 [#allocation2], 4
      %s5520 = int_to_ptr.vmem [resolvable:$true] %s5519
      %5522 = dma.vmem_to_hbm [thread:$0]  %s5520, 32, %s15, [#allocation3]
    $region65: #{tpu_custom_call.1} parent=1 // pred_fallthru
      _
    // Predicated region
    $region66: #{tpu_custom_call.1} parent=1 // pred_check
      _
    $region67: #{tpu_custom_call.1} parent=1 // pred_check_branch
      %5524 = sbr.rel (0) target = $region69
    $region68: #{tpu_custom_call.1} parent=1 // pred_region
      %5525 = dma.done [#allocation3], 32
    $region69: #{tpu_custom_call.1} parent=1 // pred_fallthru
      _
    %5526 = vsyncpa [#allocation3], 1

</llo_original>
